<compile_context>
chip_gen: v5e
topology: v5e:2x2
jax: 0.10.0
libtpu: 0.0.40
codegen_flags: <defaults>
</compile_context>

<pallas_src>
import functools

import jax
import jax.numpy as jnp
from jax import lax
from jax.experimental import pallas as pl
from jax.experimental.pallas import tpu as pltpu

EPS = 1e-5
ROW_TILE_CAP = 1024   # rows per tile for the pointwise stages (review: 512-1024)


def _cparams(sem):
    return pltpu.CompilerParams(
        dimension_semantics=(sem,),
        vmem_limit_bytes=40 * 1024 * 1024,   # headroom vs v7x's 64 MiB VMEM
    )


# --------------------------------------------------------------------------
# helpers
# --------------------------------------------------------------------------
def _row_tile(m, cap=ROW_TILE_CAP):
    """Largest row tile <= cap that is a multiple of 8 and divides m."""
    if m <= cap:
        return m
    t = (cap // 8) * 8
    while t >= 8:
        if m % t == 0:
            return t
        t -= 8
    return m


def _bn_affine_from_sums(s, sq, gamma, beta, count):
    """Fold single-pass batch statistics + BN affine into scale/shift."""
    n = jnp.float32(count)
    mean = s / n
    var = jnp.maximum(sq / n - mean * mean, 0.0)
    scale = gamma.reshape(-1) * lax.rsqrt(var + EPS)
    shift = beta.reshape(-1) - mean * scale
    return scale.reshape(1, -1), shift.reshape(1, -1)


def _bn_affine_folded(s, sq, gamma, beta, count, channels):
    """Reduce lane-folded (1, groups*channels) sums to per-channel BN affine.

    Zero-padded border groups contribute exact zeros, so summing over all
    groups is safe.
    """
    s = jnp.sum(s.reshape(-1, channels), axis=0)
    sq = jnp.sum(sq.reshape(-1, channels), axis=0)
    return _bn_affine_from_sums(s, sq, gamma, beta, count)


# --------------------------------------------------------------------------
# kernels
# --------------------------------------------------------------------------
def _make_stage1_kernel(has_sc, sc_width, store_dtype):
    """Fused 1x1 expansion (+ shortcut) conv on lane-folded rows + BN sums.

    Weight is a single (W*Cin, [W*Cout +] (W+2)*P) block-diagonal matrix, so
    one MXU push sequence produces both the (W-padded) expansion activation
    and the shortcut pre-activation; stats accumulate into resident outputs.
    """
    def kernel(x_ref, w_ref, h1_ref, s1_ref, q1_ref, *rest):
        @pl.when(pl.program_id(0) == 0)
        def _init():
            s1_ref[...] = jnp.zeros_like(s1_ref)
            q1_ref[...] = jnp.zeros_like(q1_ref)
            if has_sc:
                rest[1][...] = jnp.zeros_like(rest[1])
                rest[2][...] = jnp.zeros_like(rest[2])

        res = jnp.dot(x_ref[...], w_ref[...], preferred_element_type=jnp.float32)
        if has_sc:
            sc_ref, ss_ref, qs_ref = rest
            sc = res[:, :sc_width]          # shortcut block first: 128-aligned split
            h1 = res[:, sc_width:]
            sc_ref[...] = sc.astype(store_dtype)
            ss_ref[...] += jnp.sum(sc, axis=0, keepdims=True)
            qs_ref[...] += jnp.sum(sc * sc, axis=0, keepdims=True)
        else:
            h1 = res
        h1_ref[...] = h1.astype(store_dtype)
        s1_ref[...] += jnp.sum(h1, axis=0, keepdims=True)
        q1_ref[...] += jnp.sum(h1 * h1, axis=0, keepdims=True)
    return kernel


def _make_stage2_kernel(H, W, P, store_dtype):
    """BN1-apply + ReLU + 3x3 depthwise conv ('same', stride 1) per image.

    Input is the W-pre-padded (H, (W+2)*P) slab; the activation is copied once
    into an H-zero-padded VMEM scratch and every tap is a plain static slice
    (no pltpu.roll, no per-tap lane masks -- the W border lanes are exact
    zeros by construction).  BN2 sums accumulate into resident outputs.
    """
    WP = W * P
    WPpad = (W + 2) * P

    def kernel(h1_ref, sc1_ref, sh1_ref, w2_ref, h2_ref, s2_ref, q2_ref, pad_ref):
        @pl.when(pl.program_id(0) == 0)
        def _init():
            s2_ref[...] = jnp.zeros_like(s2_ref)
            q2_ref[...] = jnp.zeros_like(q2_ref)

        # BN1 apply + ReLU (lane-dense; border lanes stay exactly zero because
        # the tiled scale/shift vectors are zero there).
        a = jnp.maximum(
            h1_ref[0].astype(jnp.float32) * sc1_ref[...] + sh1_ref[...], 0.0)

        # H zero padding lives in the VMEM scratch (no concatenate copies).
        z = jnp.zeros((1, WPpad), jnp.float32)
        pad_ref[pl.ds(0, 1), :] = z
        pad_ref[pl.ds(H + 1, 1), :] = z
        pad_ref[pl.ds(1, H), :] = a

        acc = jnp.zeros((H, WP), jnp.float32)
        for dh in range(3):
            rows = pad_ref[pl.ds(dh, H), :]              # (H, (W+2)*P)
            for dw in range(3):
                tap = rows[:, dw * P: dw * P + WP]       # W-shift = lane slice
                acc = acc + tap * w2_ref[dh * 3 + dw: dh * 3 + dw + 1, :]

        h2_ref[...] = acc[None].astype(store_dtype)
        s2_ref[...] += jnp.sum(acc, axis=0, keepdims=True)
        q2_ref[...] += jnp.sum(acc * acc, axis=0, keepdims=True)
    return kernel


def _make_stage3_kernel(store_dtype, mxu_dtype):
    """BN2-apply + ReLU + 1x1 projection conv (block-diag, lane-dense out)."""
    def kernel(h2_ref, sc2_ref, sh2_ref, w3_ref, h3_ref, s3_ref, q3_ref):
        @pl.when(pl.program_id(0) == 0)
        def _init():
            s3_ref[...] = jnp.zeros_like(s3_ref)
            q3_ref[...] = jnp.zeros_like(q3_ref)

        a = jnp.maximum(
            h2_ref[...].astype(jnp.float32) * sc2_ref[...] + sh2_ref[...], 0.0)
        h3 = jnp.dot(a.astype(mxu_dtype), w3_ref[...],
                     preferred_element_type=jnp.float32)
        h3_ref[...] = h3.astype(store_dtype)
        s3_ref[...] += jnp.sum(h3, axis=0, keepdims=True)
        q3_ref[...] += jnp.sum(h3 * h3, axis=0, keepdims=True)
    return kernel


def _make_stage4_kernel(mode):
    """BN3-apply (+ shortcut add) on lane-folded (rows, W*Cout) slabs."""
    if mode == "conv":
        def kernel(h3_ref, sc3_ref, sh3_ref, scp_ref, scs_ref, shs_ref, o_ref):
            o_ref[...] = (h3_ref[...].astype(jnp.float32) * sc3_ref[...] + sh3_ref[...]
                          + scp_ref[...].astype(jnp.float32) * scs_ref[...] + shs_ref[...])
    elif mode == "identity":
        def kernel(h3_ref, sc3_ref, sh3_ref, x_ref, o_ref):
            o_ref[...] = (h3_ref[...].astype(jnp.float32) * sc3_ref[...] + sh3_ref[...]
                          + x_ref[...].astype(jnp.float32))
    else:
        def kernel(h3_ref, sc3_ref, sh3_ref, o_ref):
            o_ref[...] = h3_ref[...].astype(jnp.float32) * sc3_ref[...] + sh3_ref[...]
    return kernel


# --------------------------------------------------------------------------
# forward pass
# --------------------------------------------------------------------------
def block_forward_nhwc(x, params, *, stride, use_bf16=True):
    """Forward pass on NHWC input: (N, H, W, Cin) -> (N, Ho, Wo, Cout)."""
    x = x.astype(jnp.float32)
    N, H, W, Cin = x.shape
    P = params["w1"].shape[1]
    Cout = params["w3"].shape[1]
    s = stride
    Ho = (H - 1) // s + 1
    Wo = (W - 1) // s + 1
    use_sc_conv = (s == 1) and (Cin != Cout)
    use_sc_id = (s == 1) and (Cin == Cout)

    store_dt = jnp.bfloat16 if use_bf16 else jnp.float32   # inter-stage HBM traffic
    mxu_dt = jnp.bfloat16 if use_bf16 else jnp.float32     # MXU operands (f32 accum)

    M = N * H * W            # BN1 / shortcut-BN reduction count
    M2 = N * Ho * Wo         # BN2 / BN3 reduction count
    R1 = N * H               # rows of the W-folded layout (pre-stride)
    R2 = N * Ho              # rows after the depthwise stride
    XF = W * Cin
    WP = W * P
    WPpad = (W + 2) * P
    WoP = Wo * P
    SCW = W * Cout
    L = Wo * Cout

    xq = x.astype(mxu_dt)
    x_fold = xq.reshape(R1, XF)

    # ---- folded / block-diagonal weights (tiny, built in plain JAX) ---------
    # TODO(synk): for large W fold by f = ceil(128/C) instead of the full row
    # to keep the block-diagonal weights small.
    eye_w = jnp.eye(W, dtype=jnp.float32)
    w1big = jnp.pad(jnp.kron(eye_w, params["w1"]), ((0, 0), (P, P)))  # W-padded out
    if use_sc_conv:
        w1big = jnp.concatenate([jnp.kron(eye_w, params["ws"]), w1big], axis=1)
    w1big = w1big.astype(mxu_dt)
    w3big = jnp.kron(jnp.eye(Wo, dtype=jnp.float32), params["w3"]).astype(mxu_dt)

    # ---------------- stage 1: 1x1 expansion (+ shortcut) conv, BN1 stats ----
    tm1 = _row_tile(R1)
    g1 = R1 // tm1
    K1 = w1big.shape[1]
    in_specs = [pl.BlockSpec((tm1, XF), lambda i: (i, 0)),
                pl.BlockSpec((XF, K1), lambda i: (0, 0))]
    out_shape = [jax.ShapeDtypeStruct((R1, WPpad), store_dt),
                 jax.ShapeDtypeStruct((1, WPpad), jnp.float32),
                 jax.ShapeDtypeStruct((1, WPpad), jnp.float32)]
    out_specs = [pl.BlockSpec((tm1, WPpad), lambda i: (i, 0)),
                 pl.BlockSpec((1, WPpad), lambda i: (0, 0)),
                 pl.BlockSpec((1, WPpad), lambda i: (0, 0))]
    if use_sc_conv:
        out_shape += [jax.ShapeDtypeStruct((R1, SCW), store_dt),
                      jax.ShapeDtypeStruct((1, SCW), jnp.float32),
                      jax.ShapeDtypeStruct((1, SCW), jnp.float32)]
        out_specs += [pl.BlockSpec((tm1, SCW), lambda i: (i, 0)),
                      pl.BlockSpec((1, SCW), lambda i: (0, 0)),
                      pl.BlockSpec((1, SCW), lambda i: (0, 0))]
    res = pl.pallas_call(
        _make_stage1_kernel(use_sc_conv, SCW, store_dt),
        grid=(g1,),
        in_specs=in_specs,
        out_specs=tuple(out_specs),
        out_shape=tuple(out_shape),
        compiler_params=_cparams("arbitrary"),   # stats accumulate over the grid
    )(x_fold, w1big)
    if use_sc_conv:
        h1pad, s1, q1, sc_pre, s_s, q_s = res
    else:
        h1pad, s1, q1 = res
        sc_pre = s_s = q_s = None
    scale1, shift1 = _bn_affine_folded(s1, q1, params["g1"], params["b1"], M, P)

    # ---------------- stage 2: BN1 + ReLU + 3x3 depthwise, BN2 stats ---------
    # TODO(synk): row-tile this stage (grid (N, H/th) with a 2-row halo) for
    # large images so per-image slabs stay well under v7x's 64 MiB VMEM and
    # both v7x TensorCores get work at small N.
    sc1t = jnp.pad(jnp.tile(scale1, (1, W)), ((0, 0), (P, P)))   # zero W-borders
    sh1t = jnp.pad(jnp.tile(shift1, (1, W)), ((0, 0), (P, P)))
    w2t = jnp.tile(params["w2"], (1, W))                         # (9, W*P)

    h1img = h1pad.reshape(N, H, WPpad)
    h2_fold, s2, q2 = pl.pallas_call(
        _make_stage2_kernel(H, W, P, store_dt),
        grid=(N,),
        in_specs=[pl.BlockSpec((1, H, WPpad), lambda n: (n, 0, 0)),
                  pl.BlockSpec((1, WPpad), lambda n: (0, 0)),
                  pl.BlockSpec((1, WPpad), lambda n: (0, 0)),
                  pl.BlockSpec((9, WP), lambda n: (0, 0))],
        out_specs=(pl.BlockSpec((1, H, WP), lambda n: (n, 0, 0)),
                   pl.BlockSpec((1, WP), lambda n: (0, 0)),
                   pl.BlockSpec((1, WP), lambda n: (0, 0))),
        out_shape=(jax.ShapeDtypeStruct((N, H, WP), store_dt),
                   jax.ShapeDtypeStruct((1, WP), jnp.float32),
                   jax.ShapeDtypeStruct((1, WP), jnp.float32)),
        scratch_shapes=[pltpu.VMEM((H + 2, WPpad), jnp.float32)],
        compiler_params=_cparams("arbitrary"),
    )(h1img, sc1t, sh1t, w2t)

    if s == 1:
        scale2, shift2 = _bn_affine_folded(s2, q2, params["g2"], params["b2"], M2, P)
        h2_rows = h2_fold.reshape(R2, WoP)
    else:
        # TODO(synk): move the stride-s subsample (and its BN2 stats) into the
        # stage-2 kernel instead of this wrapper-side XLA strided slice.
        h2_sub = h2_fold.reshape(N, H, W, P)[:, ::s, ::s, :]
        h2f32 = h2_sub.astype(jnp.float32).reshape(M2, P)
        scale2, shift2 = _bn_affine_from_sums(jnp.sum(h2f32, axis=0),
                                              jnp.sum(h2f32 * h2f32, axis=0),
                                              params["g2"], params["b2"], M2)
        h2_rows = h2_sub.reshape(R2, WoP)

    # ---------------- stage 3: BN2 + ReLU + 1x1 projection, BN3 stats --------
    sc2t = jnp.tile(scale2, (1, Wo))
    sh2t = jnp.tile(shift2, (1, Wo))
    tm3 = _row_tile(R2)
    g3 = R2 // tm3
    h3_pre, s3, q3 = pl.pallas_call(
        _make_stage3_kernel(store_dt, mxu_dt),
        grid=(g3,),
        in_specs=[pl.BlockSpec((tm3, WoP), lambda i: (i, 0)),
                  pl.BlockSpec((1, WoP), lambda i: (0, 0)),
                  pl.BlockSpec((1, WoP), lambda i: (0, 0)),
                  pl.BlockSpec((WoP, L), lambda i: (0, 0))],
        out_specs=(pl.BlockSpec((tm3, L), lambda i: (i, 0)),
                   pl.BlockSpec((1, L), lambda i: (0, 0)),
                   pl.BlockSpec((1, L), lambda i: (0, 0))),
        out_shape=(jax.ShapeDtypeStruct((R2, L), store_dt),
                   jax.ShapeDtypeStruct((1, L), jnp.float32),
                   jax.ShapeDtypeStruct((1, L), jnp.float32)),
        compiler_params=_cparams("arbitrary"),
    )(h2_rows, sc2t, sh2t, w3big)
    scale3, shift3 = _bn_affine_folded(s3, q3, params["g3"], params["b3"], M2, Cout)

    # ---------------- stage 4: BN3 apply + shortcut add (lane-folded) --------
    tm4 = _row_tile(R2)
    g4 = R2 // tm4
    row_spec = pl.BlockSpec((tm4, L), lambda i: (i, 0))
    vec_spec = pl.BlockSpec((1, L), lambda i: (0, 0))
    in_specs = [row_spec, vec_spec, vec_spec]
    args = [h3_pre, jnp.tile(scale3, (1, Wo)), jnp.tile(shift3, (1, Wo))]
    if use_sc_conv:
        scale_s, shift_s = _bn_affine_folded(s_s, q_s, params["gs"], params["bs"],
                                             M, Cout)
        in_specs += [row_spec, vec_spec, vec_spec]
        args += [sc_pre, jnp.tile(scale_s, (1, W)), jnp.tile(shift_s, (1, W))]
        mode = "conv"
    elif use_sc_id:
        in_specs += [row_spec]
        args += [x_fold]
        mode = "identity"
    else:
        mode = "none"
    out = pl.pallas_call(
        _make_stage4_kernel(mode),
        grid=(g4,),
        in_specs=in_specs,
        out_specs=row_spec,
        out_shape=jax.ShapeDtypeStruct((R2, L), jnp.float32),
        compiler_params=_cparams("parallel"),
    )(*args)
    return out.reshape(N, Ho, Wo, Cout)


@functools.partial(jax.jit, static_argnames=("stride", "use_bf16"))
def block_forward(x_nchw, params, *, stride, use_bf16=True):
    """PyTorch-convention wrapper: (N, Cin, H, W) -> (N, Cout, Ho, Wo).

    Chains of blocks should call `block_forward_nhwc` directly and keep
    activations NHWC to avoid the two full-tensor transposes below.
    """
    x = jnp.transpose(x_nchw, (0, 2, 3, 1))
    y = block_forward_nhwc(x, params, stride=stride, use_bf16=use_bf16)
    return jnp.transpose(y, (0, 3, 1, 2))


# --------------------------------------------------------------------------
# pure-JAX reference (lax.conv based, two-pass BN) for validation
# --------------------------------------------------------------------------
def block_reference(x_nchw, params, *, stride):
    x = jnp.transpose(x_nchw, (0, 2, 3, 1)).astype(jnp.float32)
    dn = ("NHWC", "HWIO", "NHWC")
    hi = lax.Precision.HIGHEST

    def bn(v, g, b):
        mean = jnp.mean(v, axis=(0, 1, 2), keepdims=True)
        var = jnp.mean(jnp.square(v - mean), axis=(0, 1, 2), keepdims=True)
        return ((v - mean) * lax.rsqrt(var + EPS)
                * g.reshape(1, 1, 1, -1) + b.reshape(1, 1, 1, -1))

    Cin = x.shape[-1]
    P = params["w1"].shape[1]
    Cout = params["w3"].shape[1]

    h = lax.conv_general_dilated(x, params["w1"].reshape(1, 1, Cin, P),
                                 (1, 1), "VALID", dimension_numbers=dn,
                                 precision=hi)
    h = jax.nn.relu(bn(h, params["g1"], params["b1"]))

    wdw = params["w2"].reshape(3, 3, P)[:, :, None, :]
    h = lax.conv_general_dilated(h, wdw, (stride, stride), ((1, 1), (1, 1)),
                                 dimension_numbers=dn, feature_group_count=P,
                                 precision=hi)
    h = jax.nn.relu(bn(h, params["g2"], params["b2"]))

    h = lax.conv_general_dilated(h, params["w3"].reshape(1, 1, P, Cout),
                                 (1, 1), "VALID", dimension_numbers=dn,
                                 precision=hi)
    h = bn(h, params["g3"], params["b3"])

    if stride == 1:
        if Cin != Cout:
            sc = lax.conv_general_dilated(x, params["ws"].reshape(1, 1, Cin, Cout),
                                          (1, 1), "VALID", dimension_numbers=dn,
                                          precision=hi)
            sc = bn(sc, params["gs"], params["bs"])
        else:
            sc = x
        h = h + sc
    return jnp.transpose(h, (0, 3, 1, 2))


# --------------------------------------------------------------------------
# test
# --------------------------------------------------------------------------
def _make_params(key, inp, outp, expansion, stride):
    planes = expansion * inp
    ks = jax.random.split(key, 10)
    p = {
        # conv1: PyTorch (planes, inp, 1, 1) stored transposed as (inp, planes)
        "w1": 0.5 * jax.random.normal(ks[0], (inp, planes), jnp.float32),
        "g1": 1.0 + 0.1 * jax.random.normal(ks[1], (1, planes), jnp.float32),
        "b1": 0.1 * jax.random.normal(ks[2], (1, planes), jnp.float32),
        # conv2 depthwise: PyTorch (planes, 1, 3, 3) stored as (9, planes)
        "w2": 0.5 * jax.random.normal(ks[3], (9, planes), jnp.float32),
        "g2": 1.0 + 0.1 * jax.random.normal(ks[4], (1, planes), jnp.float32),
        "b2": 0.1 * jax.random.normal(ks[5], (1, planes), jnp.float32),
        # conv3: PyTorch (outp, planes, 1, 1) stored transposed as (planes, outp)
        "w3": 0.5 * jax.random.normal(ks[6], (planes, outp), jnp.float32),
        "g3": 1.0 + 0.1 * jax.random.normal(ks[7], (1, outp), jnp.float32),
        "b3": 0.1 * jax.random.normal(ks[8], (1, outp), jnp.float32),
    }
    if stride == 1 and inp != outp:  # shortcut conv + BN only when live
        p["ws"] = 0.5 * jax.random.normal(ks[9], (inp, outp), jnp.float32)
        p["gs"] = jnp.ones((1, outp), jnp.float32)
        p["bs"] = jnp.zeros((1, outp), jnp.float32)
    return p


if __name__ == "__main__":
    root = jax.random.PRNGKey(0)
    configs = [
        # (N, Cin, H, W, Cout, expansion, stride)
        (2, 4, 16, 16, 8, 6, 1),   # Block(4, 8, 6, 1): conv shortcut
        (2, 8, 16, 16, 8, 3, 1),   # Block(8, 8, 3, 1): identity shortcut
        (2, 4, 16, 16, 8, 6, 2),   # Block(4, 8, 6, 2): stride 2, no shortcut
    ]
    for cfg_id, (N, Cin, H, W, Cout, expansion, stride) in enumerate(configs):
        kp = jax.random.fold_in(root, 2 * cfg_id)
        kx = jax.random.fold_in(root, 2 * cfg_id + 1)
        params = _make_params(kp, Cin, Cout, expansion, stride)
        x = jax.random.normal(kx, (N, Cin, H, W), jnp.float32)
        ref = block_reference(x, params, stride=stride)

        out = jax.block_until_ready(
            block_forward(x, params, stride=stride, use_bf16=False))
        Ho = (H - 1) // stride + 1
        Wo = (W - 1) // stride + 1
        assert out.shape == (N, Cout, Ho, Wo), out.shape
        err = float(jnp.max(jnp.abs(out - ref)))
        # 2e-2 covers MXU default-precision f32 matmuls; semantic bugs are O(1).
        assert err < 2e-2, f"config {cfg_id} (f32): max abs err {err}"

    # bf16 inter-stage storage + bf16 MXU operands (perf mode): loose tolerance
    # covering bf16 roundoff accumulated through 3 convs + 3 batch-stat BNs.
    N, Cin, H, W, Cout, expansion, stride = configs[0]
    params = _make_params(jax.random.fold_in(root, 0), Cin, Cout, expansion, stride)
    x = jax.random.normal(jax.random.fold_in(root, 1), (N, Cin, H, W), jnp.float32)
    ref = block_reference(x, params, stride=stride)
    out = jax.block_until_ready(
        block_forward(x, params, stride=stride, use_bf16=True))
    err = float(jnp.max(jnp.abs(out - ref)))
    assert err < 1.5e-1, f"bf16 mode: max abs err {err}"

    print("KERNEL_OK")
</pallas_src>

<mosaic_0001>
module attributes {stable_mosaic.version = 11 : i64} {
  func.func @kernel(%arg0: i32, %arg1: memref<32x64xf32, #tpu.memory_space<vmem>>, %arg2: memref<64x560xf32, #tpu.memory_space<vmem>>, %arg3: memref<32x432xf32, #tpu.memory_space<vmem>>, %arg4: memref<1x432xf32, #tpu.memory_space<vmem>>, %arg5: memref<1x432xf32, #tpu.memory_space<vmem>>, %arg6: memref<32x128xf32, #tpu.memory_space<vmem>>, %arg7: memref<1x128xf32, #tpu.memory_space<vmem>>, %arg8: memref<1x128xf32, #tpu.memory_space<vmem>>) attributes {dimension_semantics = [#tpu.dimension_semantics<arbitrary>], iteration_bounds = array<i64: 1>, scalar_prefetch = 0 : i64, scratch_operands = 0 : i64, tpu.core_type = #tpu.core_type<tc>, window_params = [{transform_indices = @transform_0, window_bounds = array<i64: 32, 64>}, {pipeline_mode = #tpu.pipeline_mode<synchronous>, transform_indices = @transform_1, window_bounds = array<i64: 64, 560>}, {transform_indices = @transform_2, window_bounds = array<i64: 32, 432>}, {pipeline_mode = #tpu.pipeline_mode<synchronous>, transform_indices = @transform_3, window_bounds = array<i64: 1, 432>}, {pipeline_mode = #tpu.pipeline_mode<synchronous>, transform_indices = @transform_4, window_bounds = array<i64: 1, 432>}, {transform_indices = @transform_5, window_bounds = array<i64: 32, 128>}, {pipeline_mode = #tpu.pipeline_mode<synchronous>, transform_indices = @transform_6, window_bounds = array<i64: 1, 128>}, {pipeline_mode = #tpu.pipeline_mode<synchronous>, transform_indices = @transform_7, window_bounds = array<i64: 1, 128>}]} {
    %c0_i32 = arith.constant 0 : i32
    %0 = arith.cmpi eq, %arg0, %c0_i32 : i32
    %1 = arith.extui %0 : i1 to i32
    %c0_i32_0 = arith.constant 0 : i32
    %2 = arith.cmpi ne, %1, %c0_i32_0 : i32
    scf.if %2 {
      %cst_28 = arith.constant 0.000000e+00 : f32
      %32 = vector.broadcast %cst_28 : f32 to vector<1x432xf32>
      %c0_29 = arith.constant 0 : index
      %c0_30 = arith.constant 0 : index
      %33 = vector.load %arg4[%c0_29, %c0_30] : memref<1x432xf32, #tpu.memory_space<vmem>>, vector<1x432xf32>
      tpu.vector_store %arg4[%c0_29, %c0_30], %32 {strides = array<i32>} : memref<1x432xf32, #tpu.memory_space<vmem>>, vector<1x432xf32>,
      %cst_31 = arith.constant 0.000000e+00 : f32
      %34 = vector.broadcast %cst_31 : f32 to vector<1x432xf32>
      %c0_32 = arith.constant 0 : index
      %c0_33 = arith.constant 0 : index
      %35 = vector.load %arg5[%c0_32, %c0_33] : memref<1x432xf32, #tpu.memory_space<vmem>>, vector<1x432xf32>
      tpu.vector_store %arg5[%c0_32, %c0_33], %34 {strides = array<i32>} : memref<1x432xf32, #tpu.memory_space<vmem>>, vector<1x432xf32>,
      %cst_34 = arith.constant 0.000000e+00 : f32
      %36 = vector.broadcast %cst_34 : f32 to vector<1x128xf32>
      %c0_35 = arith.constant 0 : index
      %c0_36 = arith.constant 0 : index
      %37 = vector.load %arg7[%c0_35, %c0_36] : memref<1x128xf32, #tpu.memory_space<vmem>>, vector<1x128xf32>
      tpu.vector_store %arg7[%c0_35, %c0_36], %36 {strides = array<i32>} : memref<1x128xf32, #tpu.memory_space<vmem>>, vector<1x128xf32>,
      %cst_37 = arith.constant 0.000000e+00 : f32
      %38 = vector.broadcast %cst_37 : f32 to vector<1x128xf32>
      %c0_38 = arith.constant 0 : index
      %c0_39 = arith.constant 0 : index
      %39 = vector.load %arg8[%c0_38, %c0_39] : memref<1x128xf32, #tpu.memory_space<vmem>>, vector<1x128xf32>
      tpu.vector_store %arg8[%c0_38, %c0_39], %38 {strides = array<i32>} : memref<1x128xf32, #tpu.memory_space<vmem>>, vector<1x128xf32>,
    } else {
    }
    %c0 = arith.constant 0 : index
    %c0_1 = arith.constant 0 : index
    %3 = vector.load %arg1[%c0, %c0_1] : memref<32x64xf32, #tpu.memory_space<vmem>>, vector<32x64xf32>
    %c0_2 = arith.constant 0 : index
    %c0_3 = arith.constant 0 : index
    %4 = vector.load %arg2[%c0_2, %c0_3] : memref<64x560xf32, #tpu.memory_space<vmem>>, vector<64x560xf32>
    %cst = arith.constant dense<0.000000e+00> : vector<32x560xf32>
    %5 = tpu.matmul %3, %4, %cst {dimension_numbers = #tpu.dot_dimension_numbers<[1], [0], [0], [1], [0, 0, 1, 1], [], []>} : vector<32x64xf32>, vector<64x560xf32>, vector<32x560xf32> -> vector<32x560xf32>
    %6 = vector.extract_strided_slice %5 {offsets = [0, 0], sizes = [32, 128], strides = [1, 1]} : vector<32x560xf32> to vector<32x128xf32>
    %7 = vector.extract_strided_slice %5 {offsets = [0, 128], sizes = [32, 432], strides = [1, 1]} : vector<32x560xf32> to vector<32x432xf32>
    %c0_4 = arith.constant 0 : index
    %c0_5 = arith.constant 0 : index
    %8 = vector.load %arg6[%c0_4, %c0_5] : memref<32x128xf32, #tpu.memory_space<vmem>>, vector<32x128xf32>
    tpu.vector_store %arg6[%c0_4, %c0_5], %6 {strides = array<i32>} : memref<32x128xf32, #tpu.memory_space<vmem>>, vector<32x128xf32>,
    %c0_6 = arith.constant 0 : index
    %c0_7 = arith.constant 0 : index
    %9 = vector.load %arg7[%c0_6, %c0_7] : memref<1x128xf32, #tpu.memory_space<vmem>>, vector<1x128xf32>
    %cst_8 = arith.constant dense<0.000000e+00> : vector<128xf32>
    %10 = vector.multi_reduction <add>, %6, %cst_8 [0] : vector<32x128xf32> to vector<128xf32>
    %11 = vector.shape_cast %10 : vector<128xf32> to vector<1x128xf32>
    %12 = arith.addf %9, %11 : vector<1x128xf32>
    %c0_9 = arith.constant 0 : index
    %c0_10 = arith.constant 0 : index
    %13 = vector.load %arg7[%c0_9, %c0_10] : memref<1x128xf32, #tpu.memory_space<vmem>>, vector<1x128xf32>
    tpu.vector_store %arg7[%c0_9, %c0_10], %12 {strides = array<i32>} : memref<1x128xf32, #tpu.memory_space<vmem>>, vector<1x128xf32>,
    %c0_11 = arith.constant 0 : index
    %c0_12 = arith.constant 0 : index
    %14 = vector.load %arg8[%c0_11, %c0_12] : memref<1x128xf32, #tpu.memory_space<vmem>>, vector<1x128xf32>
    %15 = arith.mulf %6, %6 : vector<32x128xf32>
    %cst_13 = arith.constant dense<0.000000e+00> : vector<128xf32>
    %16 = vector.multi_reduction <add>, %15, %cst_13 [0] : vector<32x128xf32> to vector<128xf32>
    %17 = vector.shape_cast %16 : vector<128xf32> to vector<1x128xf32>
    %18 = arith.addf %14, %17 : vector<1x128xf32>
    %c0_14 = arith.constant 0 : index
    %c0_15 = arith.constant 0 : index
    %19 = vector.load %arg8[%c0_14, %c0_15] : memref<1x128xf32, #tpu.memory_space<vmem>>, vector<1x128xf32>
    tpu.vector_store %arg8[%c0_14, %c0_15], %18 {strides = array<i32>} : memref<1x128xf32, #tpu.memory_space<vmem>>, vector<1x128xf32>,
    %c0_16 = arith.constant 0 : index
    %c0_17 = arith.constant 0 : index
    %20 = vector.load %arg3[%c0_16, %c0_17] : memref<32x432xf32, #tpu.memory_space<vmem>>, vector<32x432xf32>
    tpu.vector_store %arg3[%c0_16, %c0_17], %7 {strides = array<i32>} : memref<32x432xf32, #tpu.memory_space<vmem>>, vector<32x432xf32>,
    %c0_18 = arith.constant 0 : index
    %c0_19 = arith.constant 0 : index
    %21 = vector.load %arg4[%c0_18, %c0_19] : memref<1x432xf32, #tpu.memory_space<vmem>>, vector<1x432xf32>
    %cst_20 = arith.constant dense<0.000000e+00> : vector<432xf32>
    %22 = vector.multi_reduction <add>, %7, %cst_20 [0] : vector<32x432xf32> to vector<432xf32>
    %23 = vector.shape_cast %22 : vector<432xf32> to vector<1x432xf32>
    %24 = arith.addf %21, %23 : vector<1x432xf32>
    %c0_21 = arith.constant 0 : index
    %c0_22 = arith.constant 0 : index
    %25 = vector.load %arg4[%c0_21, %c0_22] : memref<1x432xf32, #tpu.memory_space<vmem>>, vector<1x432xf32>
    tpu.vector_store %arg4[%c0_21, %c0_22], %24 {strides = array<i32>} : memref<1x432xf32, #tpu.memory_space<vmem>>, vector<1x432xf32>,
    %c0_23 = arith.constant 0 : index
    %c0_24 = arith.constant 0 : index
    %26 = vector.load %arg5[%c0_23, %c0_24] : memref<1x432xf32, #tpu.memory_space<vmem>>, vector<1x432xf32>
    %27 = arith.mulf %7, %7 : vector<32x432xf32>
    %cst_25 = arith.constant dense<0.000000e+00> : vector<432xf32>
    %28 = vector.multi_reduction <add>, %27, %cst_25 [0] : vector<32x432xf32> to vector<432xf32>
    %29 = vector.shape_cast %28 : vector<432xf32> to vector<1x432xf32>
    %30 = arith.addf %26, %29 : vector<1x432xf32>
    %c0_26 = arith.constant 0 : index
    %c0_27 = arith.constant 0 : index
    %31 = vector.load %arg5[%c0_26, %c0_27] : memref<1x432xf32, #tpu.memory_space<vmem>>, vector<1x432xf32>
    tpu.vector_store %arg5[%c0_26, %c0_27], %30 {strides = array<i32>} : memref<1x432xf32, #tpu.memory_space<vmem>>, vector<1x432xf32>,
    return
  }
  func.func @transform_0(%arg0: i32) -> (i32, i32) {
    %c0_i32 = arith.constant 0 : i32
    %c0_i32_0 = arith.constant 0 : i32
    return %arg0, %c0_i32 : i32, i32
  }
  func.func @transform_1(%arg0: i32) -> (i32, i32) {
    %c0_i32 = arith.constant 0 : i32
    %c0_i32_0 = arith.constant 0 : i32
    %c0_i32_1 = arith.constant 0 : i32
    return %c0_i32, %c0_i32_0 : i32, i32
  }
  func.func @transform_2(%arg0: i32) -> (i32, i32) {
    %c0_i32 = arith.constant 0 : i32
    %c0_i32_0 = arith.constant 0 : i32
    return %arg0, %c0_i32 : i32, i32
  }
  func.func @transform_3(%arg0: i32) -> (i32, i32) {
    %c0_i32 = arith.constant 0 : i32
    %c0_i32_0 = arith.constant 0 : i32
    %c0_i32_1 = arith.constant 0 : i32
    return %c0_i32, %c0_i32_0 : i32, i32
  }
  func.func @transform_4(%arg0: i32) -> (i32, i32) {
    %c0_i32 = arith.constant 0 : i32
    %c0_i32_0 = arith.constant 0 : i32
    %c0_i32_1 = arith.constant 0 : i32
    return %c0_i32, %c0_i32_0 : i32, i32
  }
  func.func @transform_5(%arg0: i32) -> (i32, i32) {
    %c0_i32 = arith.constant 0 : i32
    %c0_i32_0 = arith.constant 0 : i32
    return %arg0, %c0_i32 : i32, i32
  }
  func.func @transform_6(%arg0: i32) -> (i32, i32) {
    %c0_i32 = arith.constant 0 : i32
    %c0_i32_0 = arith.constant 0 : i32
    %c0_i32_1 = arith.constant 0 : i32
    return %c0_i32, %c0_i32_0 : i32, i32
  }
  func.func @transform_7(%arg0: i32) -> (i32, i32) {
    %c0_i32 = arith.constant 0 : i32
    %c0_i32_0 = arith.constant 0 : i32
    %c0_i32_1 = arith.constant 0 : i32
    return %c0_i32, %c0_i32_0 : i32, i32
  }
}

module attributes {stable_mosaic.version = 11 : i64} {
  func.func @kernel(%arg0: i32, %arg1: memref<1x16x432xf32, #tpu.memory_space<vmem>>, %arg2: memref<1x432xf32, #tpu.memory_space<vmem>>, %arg3: memref<1x432xf32, #tpu.memory_space<vmem>>, %arg4: memref<9x384xf32, #tpu.memory_space<vmem>>, %arg5: memref<1x16x384xf32, #tpu.memory_space<vmem>>, %arg6: memref<1x384xf32, #tpu.memory_space<vmem>>, %arg7: memref<1x384xf32, #tpu.memory_space<vmem>>, %arg8: memref<18x432xf32, #tpu.memory_space<vmem>>) attributes {dimension_semantics = [#tpu.dimension_semantics<arbitrary>], iteration_bounds = array<i64: 2>, scalar_prefetch = 0 : i64, scratch_operands = 1 : i64, tpu.core_type = #tpu.core_type<tc>, window_params = [{transform_indices = @transform_0, window_bounds = array<i64: 1, 16, 432>}, {pipeline_mode = #tpu.pipeline_mode<synchronous>, transform_indices = @transform_1, window_bounds = array<i64: 1, 432>}, {pipeline_mode = #tpu.pipeline_mode<synchronous>, transform_indices = @transform_2, window_bounds = array<i64: 1, 432>}, {pipeline_mode = #tpu.pipeline_mode<synchronous>, transform_indices = @transform_3, window_bounds = array<i64: 9, 384>}, {transform_indices = @transform_4, window_bounds = array<i64: 1, 16, 384>}, {pipeline_mode = #tpu.pipeline_mode<synchronous>, transform_indices = @transform_5, window_bounds = array<i64: 1, 384>}, {pipeline_mode = #tpu.pipeline_mode<synchronous>, transform_indices = @transform_6, window_bounds = array<i64: 1, 384>}]} {
    %c0_i32 = arith.constant 0 : i32
    %0 = arith.cmpi eq, %arg0, %c0_i32 : i32
    %1 = arith.extui %0 : i1 to i32
    %c0_i32_0 = arith.constant 0 : i32
    %2 = arith.cmpi ne, %1, %c0_i32_0 : i32
    scf.if %2 {
      %cst_43 = arith.constant 0.000000e+00 : f32
      %79 = vector.broadcast %cst_43 : f32 to vector<1x384xf32>
      %c0_44 = arith.constant 0 : index
      %c0_45 = arith.constant 0 : index
      %80 = vector.load %arg6[%c0_44, %c0_45] : memref<1x384xf32, #tpu.memory_space<vmem>>, vector<1x384xf32>
      tpu.vector_store %arg6[%c0_44, %c0_45], %79 {strides = array<i32>} : memref<1x384xf32, #tpu.memory_space<vmem>>, vector<1x384xf32>,
      %cst_46 = arith.constant 0.000000e+00 : f32
      %81 = vector.broadcast %cst_46 : f32 to vector<1x384xf32>
      %c0_47 = arith.constant 0 : index
      %c0_48 = arith.constant 0 : index
      %82 = vector.load %arg7[%c0_47, %c0_48] : memref<1x384xf32, #tpu.memory_space<vmem>>, vector<1x384xf32>
      tpu.vector_store %arg7[%c0_47, %c0_48], %81 {strides = array<i32>} : memref<1x384xf32, #tpu.memory_space<vmem>>, vector<1x384xf32>,
    } else {
    }
    %c0 = arith.constant 0 : index
    %c0_1 = arith.constant 0 : index
    %c0_2 = arith.constant 0 : index
    %3 = vector.load %arg1[%c0, %c0_1, %c0_2] : memref<1x16x432xf32, #tpu.memory_space<vmem>>, vector<1x16x432xf32>
    %4 = vector.shape_cast %3 : vector<1x16x432xf32> to vector<16x432xf32>
    %c0_3 = arith.constant 0 : index
    %c0_4 = arith.constant 0 : index
    %5 = vector.load %arg2[%c0_3, %c0_4] : memref<1x432xf32, #tpu.memory_space<vmem>>, vector<1x432xf32>
    %6 = vector.broadcast %5 : vector<1x432xf32> to vector<16x432xf32>
    %7 = arith.mulf %4, %6 : vector<16x432xf32>
    %c0_5 = arith.constant 0 : index
    %c0_6 = arith.constant 0 : index
    %8 = vector.load %arg3[%c0_5, %c0_6] : memref<1x432xf32, #tpu.memory_space<vmem>>, vector<1x432xf32>
    %9 = vector.broadcast %8 : vector<1x432xf32> to vector<16x432xf32>
    %10 = arith.addf %7, %9 : vector<16x432xf32>
    %cst = arith.constant 0.000000e+00 : f32
    %11 = vector.broadcast %cst : f32 to vector<16x432xf32>
    %12 = arith.maximumf %10, %11 : vector<16x432xf32>
    %cst_7 = arith.constant 0.000000e+00 : f32
    %13 = vector.broadcast %cst_7 : f32 to vector<1x432xf32>
    %c0_8 = arith.constant 0 : index
    %c0_9 = arith.constant 0 : index
    %14 = vector.load %arg8[%c0_8, %c0_9] : memref<18x432xf32, #tpu.memory_space<vmem>>, vector<1x432xf32>
    tpu.vector_store %arg8[%c0_8, %c0_9], %13 {strides = array<i32>} : memref<18x432xf32, #tpu.memory_space<vmem>>, vector<1x432xf32>,
    %c17 = arith.constant 17 : index
    %c0_10 = arith.constant 0 : index
    %15 = vector.load %arg8[%c17, %c0_10] : memref<18x432xf32, #tpu.memory_space<vmem>>, vector<1x432xf32>
    tpu.vector_store %arg8[%c17, %c0_10], %13 {strides = array<i32>} : memref<18x432xf32, #tpu.memory_space<vmem>>, vector<1x432xf32>,
    %c1 = arith.constant 1 : index
    %c0_11 = arith.constant 0 : index
    %16 = vector.load %arg8[%c1, %c0_11] : memref<18x432xf32, #tpu.memory_space<vmem>>, vector<16x432xf32>
    tpu.vector_store %arg8[%c1, %c0_11], %12 {strides = array<i32>} : memref<18x432xf32, #tpu.memory_space<vmem>>, vector<16x432xf32>,
    %cst_12 = arith.constant 0.000000e+00 : f32
    %17 = vector.broadcast %cst_12 : f32 to vector<16x384xf32>
    %c0_13 = arith.constant 0 : index
    %c0_14 = arith.constant 0 : index
    %18 = vector.load %arg8[%c0_13, %c0_14] : memref<18x432xf32, #tpu.memory_space<vmem>>, vector<16x432xf32>
    %19 = vector.extract_strided_slice %18 {offsets = [0, 0], sizes = [16, 384], strides = [1, 1]} : vector<16x432xf32> to vector<16x384xf32>
    %c0_15 = arith.constant 0 : index
    %c0_16 = arith.constant 0 : index
    %20 = vector.load %arg4[%c0_15, %c0_16] : memref<9x384xf32, #tpu.memory_space<vmem>>, vector<1x384xf32>
    %21 = vector.broadcast %20 : vector<1x384xf32> to vector<16x384xf32>
    %22 = arith.mulf %19, %21 : vector<16x384xf32>
    %23 = arith.addf %17, %22 : vector<16x384xf32>
    %24 = vector.extract_strided_slice %18 {offsets = [0, 24], sizes = [16, 384], strides = [1, 1]} : vector<16x432xf32> to vector<16x384xf32>
    %c1_17 = arith.constant 1 : index
    %c0_18 = arith.constant 0 : index
    %25 = vector.load %arg4[%c1_17, %c0_18] : memref<9x384xf32, #tpu.memory_space<vmem>>, vector<1x384xf32>
    %26 = vector.broadcast %25 : vector<1x384xf32> to vector<16x384xf32>
    %27 = arith.mulf %24, %26 : vector<16x384xf32>
    %28 = arith.addf %23, %27 : vector<16x384xf32>
    %29 = vector.extract_strided_slice %18 {offsets = [0, 48], sizes = [16, 384], strides = [1, 1]} : vector<16x432xf32> to vector<16x384xf32>
    %c2 = arith.constant 2 : index
    %c0_19 = arith.constant 0 : index
    %30 = vector.load %arg4[%c2, %c0_19] : memref<9x384xf32, #tpu.memory_space<vmem>>, vector<1x384xf32>
    %31 = vector.broadcast %30 : vector<1x384xf32> to vector<16x384xf32>
    %32 = arith.mulf %29, %31 : vector<16x384xf32>
    %33 = arith.addf %28, %32 : vector<16x384xf32>
    %c1_20 = arith.constant 1 : index
    %c0_21 = arith.constant 0 : index
    %34 = vector.load %arg8[%c1_20, %c0_21] : memref<18x432xf32, #tpu.memory_space<vmem>>, vector<16x432xf32>
    %35 = vector.extract_strided_slice %34 {offsets = [0, 0], sizes = [16, 384], strides = [1, 1]} : vector<16x432xf32> to vector<16x384xf32>
    %c3 = arith.constant 3 : index
    %c0_22 = arith.constant 0 : index
    %36 = vector.load %arg4[%c3, %c0_22] : memref<9x384xf32, #tpu.memory_space<vmem>>, vector<1x384xf32>
    %37 = vector.broadcast %36 : vector<1x384xf32> to vector<16x384xf32>
    %38 = arith.mulf %35, %37 : vector<16x384xf32>
    %39 = arith.addf %33, %38 : vector<16x384xf32>
    %40 = vector.extract_strided_slice %34 {offsets = [0, 24], sizes = [16, 384], strides = [1, 1]} : vector<16x432xf32> to vector<16x384xf32>
    %c4 = arith.constant 4 : index
    %c0_23 = arith.constant 0 : index
    %41 = vector.load %arg4[%c4, %c0_23] : memref<9x384xf32, #tpu.memory_space<vmem>>, vector<1x384xf32>
    %42 = vector.broadcast %41 : vector<1x384xf32> to vector<16x384xf32>
    %43 = arith.mulf %40, %42 : vector<16x384xf32>
    %44 = arith.addf %39, %43 : vector<16x384xf32>
    %45 = vector.extract_strided_slice %34 {offsets = [0, 48], sizes = [16, 384], strides = [1, 1]} : vector<16x432xf32> to vector<16x384xf32>
    %c5 = arith.constant 5 : index
    %c0_24 = arith.constant 0 : index
    %46 = vector.load %arg4[%c5, %c0_24] : memref<9x384xf32, #tpu.memory_space<vmem>>, vector<1x384xf32>
    %47 = vector.broadcast %46 : vector<1x384xf32> to vector<16x384xf32>
    %48 = arith.mulf %45, %47 : vector<16x384xf32>
    %49 = arith.addf %44, %48 : vector<16x384xf32>
    %c2_25 = arith.constant 2 : index
    %c0_26 = arith.constant 0 : index
    %50 = vector.load %arg8[%c2_25, %c0_26] : memref<18x432xf32, #tpu.memory_space<vmem>>, vector<16x432xf32>
    %51 = vector.extract_strided_slice %50 {offsets = [0, 0], sizes = [16, 384], strides = [1, 1]} : vector<16x432xf32> to vector<16x384xf32>
    %c6 = arith.constant 6 : index
    %c0_27 = arith.constant 0 : index
    %52 = vector.load %arg4[%c6, %c0_27] : memref<9x384xf32, #tpu.memory_space<vmem>>, vector<1x384xf32>
    %53 = vector.broadcast %52 : vector<1x384xf32> to vector<16x384xf32>
    %54 = arith.mulf %51, %53 : vector<16x384xf32>
    %55 = arith.addf %49, %54 : vector<16x384xf32>
    %56 = vector.extract_strided_slice %50 {offsets = [0, 24], sizes = [16, 384], strides = [1, 1]} : vector<16x432xf32> to vector<16x384xf32>
    %c7 = arith.constant 7 : index
    %c0_28 = arith.constant 0 : index
    %57 = vector.load %arg4[%c7, %c0_28] : memref<9x384xf32, #tpu.memory_space<vmem>>, vector<1x384xf32>
    %58 = vector.broadcast %57 : vector<1x384xf32> to vector<16x384xf32>
    %59 = arith.mulf %56, %58 : vector<16x384xf32>
    %60 = arith.addf %55, %59 : vector<16x384xf32>
    %61 = vector.extract_strided_slice %50 {offsets = [0, 48], sizes = [16, 384], strides = [1, 1]} : vector<16x432xf32> to vector<16x384xf32>
    %c8 = arith.constant 8 : index
    %c0_29 = arith.constant 0 : index
    %62 = vector.load %arg4[%c8, %c0_29] : memref<9x384xf32, #tpu.memory_space<vmem>>, vector<1x384xf32>
    %63 = vector.broadcast %62 : vector<1x384xf32> to vector<16x384xf32>
    %64 = arith.mulf %61, %63 : vector<16x384xf32>
    %65 = arith.addf %60, %64 : vector<16x384xf32>
    %66 = vector.shape_cast %65 : vector<16x384xf32> to vector<1x16x384xf32>
    %c0_30 = arith.constant 0 : index
    %c0_31 = arith.constant 0 : index
    %c0_32 = arith.constant 0 : index
    %67 = vector.load %arg5[%c0_30, %c0_31, %c0_32] : memref<1x16x384xf32, #tpu.memory_space<vmem>>, vector<1x16x384xf32>
    tpu.vector_store %arg5[%c0_30, %c0_31, %c0_32], %66 {strides = array<i32>} : memref<1x16x384xf32, #tpu.memory_space<vmem>>, vector<1x16x384xf32>,
    %c0_33 = arith.constant 0 : index
    %c0_34 = arith.constant 0 : index
    %68 = vector.load %arg6[%c0_33, %c0_34] : memref<1x384xf32, #tpu.memory_space<vmem>>, vector<1x384xf32>
    %cst_35 = arith.constant dense<0.000000e+00> : vector<384xf32>
    %69 = vector.multi_reduction <add>, %65, %cst_35 [0] : vector<16x384xf32> to vector<384xf32>
    %70 = vector.shape_cast %69 : vector<384xf32> to vector<1x384xf32>
    %71 = arith.addf %68, %70 : vector<1x384xf32>
    %c0_36 = arith.constant 0 : index
    %c0_37 = arith.constant 0 : index
    %72 = vector.load %arg6[%c0_36, %c0_37] : memref<1x384xf32, #tpu.memory_space<vmem>>, vector<1x384xf32>
    tpu.vector_store %arg6[%c0_36, %c0_37], %71 {strides = array<i32>} : memref<1x384xf32, #tpu.memory_space<vmem>>, vector<1x384xf32>,
    %c0_38 = arith.constant 0 : index
    %c0_39 = arith.constant 0 : index
    %73 = vector.load %arg7[%c0_38, %c0_39] : memref<1x384xf32, #tpu.memory_space<vmem>>, vector<1x384xf32>
    %74 = arith.mulf %65, %65 : vector<16x384xf32>
    %cst_40 = arith.constant dense<0.000000e+00> : vector<384xf32>
    %75 = vector.multi_reduction <add>, %74, %cst_40 [0] : vector<16x384xf32> to vector<384xf32>
    %76 = vector.shape_cast %75 : vector<384xf32> to vector<1x384xf32>
    %77 = arith.addf %73, %76 : vector<1x384xf32>
    %c0_41 = arith.constant 0 : index
    %c0_42 = arith.constant 0 : index
    %78 = vector.load %arg7[%c0_41, %c0_42] : memref<1x384xf32, #tpu.memory_space<vmem>>, vector<1x384xf32>
    tpu.vector_store %arg7[%c0_41, %c0_42], %77 {strides = array<i32>} : memref<1x384xf32, #tpu.memory_space<vmem>>, vector<1x384xf32>,
    return
  }
  func.func @transform_0(%arg0: i32) -> (i32, i32, i32) {
    %c0_i32 = arith.constant 0 : i32
    %c0_i32_0 = arith.constant 0 : i32
    %c0_i32_1 = arith.constant 0 : i32
    return %arg0, %c0_i32, %c0_i32_0 : i32, i32, i32
  }
  func.func @transform_1(%arg0: i32) -> (i32, i32) {
    %c0_i32 = arith.constant 0 : i32
    %c0_i32_0 = arith.constant 0 : i32
    %c0_i32_1 = arith.constant 0 : i32
    return %c0_i32, %c0_i32_0 : i32, i32
  }
  func.func @transform_2(%arg0: i32) -> (i32, i32) {
    %c0_i32 = arith.constant 0 : i32
    %c0_i32_0 = arith.constant 0 : i32
    %c0_i32_1 = arith.constant 0 : i32
    return %c0_i32, %c0_i32_0 : i32, i32
  }
  func.func @transform_3(%arg0: i32) -> (i32, i32) {
    %c0_i32 = arith.constant 0 : i32
    %c0_i32_0 = arith.constant 0 : i32
    %c0_i32_1 = arith.constant 0 : i32
    return %c0_i32, %c0_i32_0 : i32, i32
  }
  func.func @transform_4(%arg0: i32) -> (i32, i32, i32) {
    %c0_i32 = arith.constant 0 : i32
    %c0_i32_0 = arith.constant 0 : i32
    %c0_i32_1 = arith.constant 0 : i32
    return %arg0, %c0_i32, %c0_i32_0 : i32, i32, i32
  }
  func.func @transform_5(%arg0: i32) -> (i32, i32) {
    %c0_i32 = arith.constant 0 : i32
    %c0_i32_0 = arith.constant 0 : i32
    %c0_i32_1 = arith.constant 0 : i32
    return %c0_i32, %c0_i32_0 : i32, i32
  }
  func.func @transform_6(%arg0: i32) -> (i32, i32) {
    %c0_i32 = arith.constant 0 : i32
    %c0_i32_0 = arith.constant 0 : i32
    %c0_i32_1 = arith.constant 0 : i32
    return %c0_i32, %c0_i32_0 : i32, i32
  }
}

module attributes {stable_mosaic.version = 11 : i64} {
  func.func @kernel(%arg0: i32, %arg1: memref<32x384xf32, #tpu.memory_space<vmem>>, %arg2: memref<1x384xf32, #tpu.memory_space<vmem>>, %arg3: memref<1x384xf32, #tpu.memory_space<vmem>>, %arg4: memref<384x128xf32, #tpu.memory_space<vmem>>, %arg5: memref<32x128xf32, #tpu.memory_space<vmem>>, %arg6: memref<1x128xf32, #tpu.memory_space<vmem>>, %arg7: memref<1x128xf32, #tpu.memory_space<vmem>>) attributes {dimension_semantics = [#tpu.dimension_semantics<arbitrary>], iteration_bounds = array<i64: 1>, scalar_prefetch = 0 : i64, scratch_operands = 0 : i64, tpu.core_type = #tpu.core_type<tc>, window_params = [{transform_indices = @transform_0, window_bounds = array<i64: 32, 384>}, {pipeline_mode = #tpu.pipeline_mode<synchronous>, transform_indices = @transform_1, window_bounds = array<i64: 1, 384>}, {pipeline_mode = #tpu.pipeline_mode<synchronous>, transform_indices = @transform_2, window_bounds = array<i64: 1, 384>}, {pipeline_mode = #tpu.pipeline_mode<synchronous>, transform_indices = @transform_3, window_bounds = array<i64: 384, 128>}, {transform_indices = @transform_4, window_bounds = array<i64: 32, 128>}, {pipeline_mode = #tpu.pipeline_mode<synchronous>, transform_indices = @transform_5, window_bounds = array<i64: 1, 128>}, {pipeline_mode = #tpu.pipeline_mode<synchronous>, transform_indices = @transform_6, window_bounds = array<i64: 1, 128>}]} {
    %c0_i32 = arith.constant 0 : i32
    %0 = arith.cmpi eq, %arg0, %c0_i32 : i32
    %1 = arith.extui %0 : i1 to i32
    %c0_i32_0 = arith.constant 0 : i32
    %2 = arith.cmpi ne, %1, %c0_i32_0 : i32
    scf.if %2 {
      %cst_21 = arith.constant 0.000000e+00 : f32
      %26 = vector.broadcast %cst_21 : f32 to vector<1x128xf32>
      %c0_22 = arith.constant 0 : index
      %c0_23 = arith.constant 0 : index
      %27 = vector.load %arg6[%c0_22, %c0_23] : memref<1x128xf32, #tpu.memory_space<vmem>>, vector<1x128xf32>
      tpu.vector_store %arg6[%c0_22, %c0_23], %26 {strides = array<i32>} : memref<1x128xf32, #tpu.memory_space<vmem>>, vector<1x128xf32>,
      %cst_24 = arith.constant 0.000000e+00 : f32
      %28 = vector.broadcast %cst_24 : f32 to vector<1x128xf32>
      %c0_25 = arith.constant 0 : index
      %c0_26 = arith.constant 0 : index
      %29 = vector.load %arg7[%c0_25, %c0_26] : memref<1x128xf32, #tpu.memory_space<vmem>>, vector<1x128xf32>
      tpu.vector_store %arg7[%c0_25, %c0_26], %28 {strides = array<i32>} : memref<1x128xf32, #tpu.memory_space<vmem>>, vector<1x128xf32>,
    } else {
    }
    %c0 = arith.constant 0 : index
    %c0_1 = arith.constant 0 : index
    %3 = vector.load %arg1[%c0, %c0_1] : memref<32x384xf32, #tpu.memory_space<vmem>>, vector<32x384xf32>
    %c0_2 = arith.constant 0 : index
    %c0_3 = arith.constant 0 : index
    %4 = vector.load %arg2[%c0_2, %c0_3] : memref<1x384xf32, #tpu.memory_space<vmem>>, vector<1x384xf32>
    %5 = vector.broadcast %4 : vector<1x384xf32> to vector<32x384xf32>
    %6 = arith.mulf %3, %5 : vector<32x384xf32>
    %c0_4 = arith.constant 0 : index
    %c0_5 = arith.constant 0 : index
    %7 = vector.load %arg3[%c0_4, %c0_5] : memref<1x384xf32, #tpu.memory_space<vmem>>, vector<1x384xf32>
    %8 = vector.broadcast %7 : vector<1x384xf32> to vector<32x384xf32>
    %9 = arith.addf %6, %8 : vector<32x384xf32>
    %cst = arith.constant 0.000000e+00 : f32
    %10 = vector.broadcast %cst : f32 to vector<32x384xf32>
    %11 = arith.maximumf %9, %10 : vector<32x384xf32>
    %c0_6 = arith.constant 0 : index
    %c0_7 = arith.constant 0 : index
    %12 = vector.load %arg4[%c0_6, %c0_7] : memref<384x128xf32, #tpu.memory_space<vmem>>, vector<384x128xf32>
    %cst_8 = arith.constant dense<0.000000e+00> : vector<32x128xf32>
    %13 = tpu.matmul %11, %12, %cst_8 {dimension_numbers = #tpu.dot_dimension_numbers<[1], [0], [0], [1], [0, 0, 1, 1], [], []>} : vector<32x384xf32>, vector<384x128xf32>, vector<32x128xf32> -> vector<32x128xf32>
    %c0_9 = arith.constant 0 : index
    %c0_10 = arith.constant 0 : index
    %14 = vector.load %arg5[%c0_9, %c0_10] : memref<32x128xf32, #tpu.memory_space<vmem>>, vector<32x128xf32>
    tpu.vector_store %arg5[%c0_9, %c0_10], %13 {strides = array<i32>} : memref<32x128xf32, #tpu.memory_space<vmem>>, vector<32x128xf32>,
    %c0_11 = arith.constant 0 : index
    %c0_12 = arith.constant 0 : index
    %15 = vector.load %arg6[%c0_11, %c0_12] : memref<1x128xf32, #tpu.memory_space<vmem>>, vector<1x128xf32>
    %cst_13 = arith.constant dense<0.000000e+00> : vector<128xf32>
    %16 = vector.multi_reduction <add>, %13, %cst_13 [0] : vector<32x128xf32> to vector<128xf32>
    %17 = vector.shape_cast %16 : vector<128xf32> to vector<1x128xf32>
    %18 = arith.addf %15, %17 : vector<1x128xf32>
    %c0_14 = arith.constant 0 : index
    %c0_15 = arith.constant 0 : index
    %19 = vector.load %arg6[%c0_14, %c0_15] : memref<1x128xf32, #tpu.memory_space<vmem>>, vector<1x128xf32>
    tpu.vector_store %arg6[%c0_14, %c0_15], %18 {strides = array<i32>} : memref<1x128xf32, #tpu.memory_space<vmem>>, vector<1x128xf32>,
    %c0_16 = arith.constant 0 : index
    %c0_17 = arith.constant 0 : index
    %20 = vector.load %arg7[%c0_16, %c0_17] : memref<1x128xf32, #tpu.memory_space<vmem>>, vector<1x128xf32>
    %21 = arith.mulf %13, %13 : vector<32x128xf32>
    %cst_18 = arith.constant dense<0.000000e+00> : vector<128xf32>
    %22 = vector.multi_reduction <add>, %21, %cst_18 [0] : vector<32x128xf32> to vector<128xf32>
    %23 = vector.shape_cast %22 : vector<128xf32> to vector<1x128xf32>
    %24 = arith.addf %20, %23 : vector<1x128xf32>
    %c0_19 = arith.constant 0 : index
    %c0_20 = arith.constant 0 : index
    %25 = vector.load %arg7[%c0_19, %c0_20] : memref<1x128xf32, #tpu.memory_space<vmem>>, vector<1x128xf32>
    tpu.vector_store %arg7[%c0_19, %c0_20], %24 {strides = array<i32>} : memref<1x128xf32, #tpu.memory_space<vmem>>, vector<1x128xf32>,
    return
  }
  func.func @transform_0(%arg0: i32) -> (i32, i32) {
    %c0_i32 = arith.constant 0 : i32
    %c0_i32_0 = arith.constant 0 : i32
    return %arg0, %c0_i32 : i32, i32
  }
  func.func @transform_1(%arg0: i32) -> (i32, i32) {
    %c0_i32 = arith.constant 0 : i32
    %c0_i32_0 = arith.constant 0 : i32
    %c0_i32_1 = arith.constant 0 : i32
    return %c0_i32, %c0_i32_0 : i32, i32
  }
  func.func @transform_2(%arg0: i32) -> (i32, i32) {
    %c0_i32 = arith.constant 0 : i32
    %c0_i32_0 = arith.constant 0 : i32
    %c0_i32_1 = arith.constant 0 : i32
    return %c0_i32, %c0_i32_0 : i32, i32
  }
  func.func @transform_3(%arg0: i32) -> (i32, i32) {
    %c0_i32 = arith.constant 0 : i32
    %c0_i32_0 = arith.constant 0 : i32
    %c0_i32_1 = arith.constant 0 : i32
    return %c0_i32, %c0_i32_0 : i32, i32
  }
  func.func @transform_4(%arg0: i32) -> (i32, i32) {
    %c0_i32 = arith.constant 0 : i32
    %c0_i32_0 = arith.constant 0 : i32
    return %arg0, %c0_i32 : i32, i32
  }
  func.func @transform_5(%arg0: i32) -> (i32, i32) {
    %c0_i32 = arith.constant 0 : i32
    %c0_i32_0 = arith.constant 0 : i32
    %c0_i32_1 = arith.constant 0 : i32
    return %c0_i32, %c0_i32_0 : i32, i32
  }
  func.func @transform_6(%arg0: i32) -> (i32, i32) {
    %c0_i32 = arith.constant 0 : i32
    %c0_i32_0 = arith.constant 0 : i32
    %c0_i32_1 = arith.constant 0 : i32
    return %c0_i32, %c0_i32_0 : i32, i32
  }
}

module attributes {stable_mosaic.version = 11 : i64} {
  func.func @kernel(%arg0: i32, %arg1: memref<32x128xf32, #tpu.memory_space<vmem>>, %arg2: memref<1x128xf32, #tpu.memory_space<vmem>>, %arg3: memref<1x128xf32, #tpu.memory_space<vmem>>, %arg4: memref<32x128xf32, #tpu.memory_space<vmem>>, %arg5: memref<1x128xf32, #tpu.memory_space<vmem>>, %arg6: memref<1x128xf32, #tpu.memory_space<vmem>>, %arg7: memref<32x128xf32, #tpu.memory_space<vmem>>) attributes {dimension_semantics = [#tpu.dimension_semantics<parallel>], iteration_bounds = array<i64: 1>, scalar_prefetch = 0 : i64, scratch_operands = 0 : i64, tpu.core_type = #tpu.core_type<tc>, window_params = [{transform_indices = @transform_0, window_bounds = array<i64: 32, 128>}, {pipeline_mode = #tpu.pipeline_mode<synchronous>, transform_indices = @transform_1, window_bounds = array<i64: 1, 128>}, {pipeline_mode = #tpu.pipeline_mode<synchronous>, transform_indices = @transform_2, window_bounds = array<i64: 1, 128>}, {transform_indices = @transform_3, window_bounds = array<i64: 32, 128>}, {pipeline_mode = #tpu.pipeline_mode<synchronous>, transform_indices = @transform_4, window_bounds = array<i64: 1, 128>}, {pipeline_mode = #tpu.pipeline_mode<synchronous>, transform_indices = @transform_5, window_bounds = array<i64: 1, 128>}, {transform_indices = @transform_6, window_bounds = array<i64: 32, 128>}]} {
    %c0 = arith.constant 0 : index
    %c0_0 = arith.constant 0 : index
    %0 = vector.load %arg1[%c0, %c0_0] : memref<32x128xf32, #tpu.memory_space<vmem>>, vector<32x128xf32>
    %c0_1 = arith.constant 0 : index
    %c0_2 = arith.constant 0 : index
    %1 = vector.load %arg2[%c0_1, %c0_2] : memref<1x128xf32, #tpu.memory_space<vmem>>, vector<1x128xf32>
    %2 = vector.broadcast %1 : vector<1x128xf32> to vector<32x128xf32>
    %3 = arith.mulf %0, %2 : vector<32x128xf32>
    %c0_3 = arith.constant 0 : index
    %c0_4 = arith.constant 0 : index
    %4 = vector.load %arg3[%c0_3, %c0_4] : memref<1x128xf32, #tpu.memory_space<vmem>>, vector<1x128xf32>
    %5 = vector.broadcast %4 : vector<1x128xf32> to vector<32x128xf32>
    %6 = arith.addf %3, %5 : vector<32x128xf32>
    %c0_5 = arith.constant 0 : index
    %c0_6 = arith.constant 0 : index
    %7 = vector.load %arg4[%c0_5, %c0_6] : memref<32x128xf32, #tpu.memory_space<vmem>>, vector<32x128xf32>
    %c0_7 = arith.constant 0 : index
    %c0_8 = arith.constant 0 : index
    %8 = vector.load %arg5[%c0_7, %c0_8] : memref<1x128xf32, #tpu.memory_space<vmem>>, vector<1x128xf32>
    %9 = vector.broadcast %8 : vector<1x128xf32> to vector<32x128xf32>
    %10 = arith.mulf %7, %9 : vector<32x128xf32>
    %11 = arith.addf %6, %10 : vector<32x128xf32>
    %c0_9 = arith.constant 0 : index
    %c0_10 = arith.constant 0 : index
    %12 = vector.load %arg6[%c0_9, %c0_10] : memref<1x128xf32, #tpu.memory_space<vmem>>, vector<1x128xf32>
    %13 = vector.broadcast %12 : vector<1x128xf32> to vector<32x128xf32>
    %14 = arith.addf %11, %13 : vector<32x128xf32>
    %c0_11 = arith.constant 0 : index
    %c0_12 = arith.constant 0 : index
    %15 = vector.load %arg7[%c0_11, %c0_12] : memref<32x128xf32, #tpu.memory_space<vmem>>, vector<32x128xf32>
    tpu.vector_store %arg7[%c0_11, %c0_12], %14 {strides = array<i32>} : memref<32x128xf32, #tpu.memory_space<vmem>>, vector<32x128xf32>,
    return
  }
  func.func @transform_0(%arg0: i32) -> (i32, i32) {
    %c0_i32 = arith.constant 0 : i32
    %c0_i32_0 = arith.constant 0 : i32
    return %arg0, %c0_i32 : i32, i32
  }
  func.func @transform_1(%arg0: i32) -> (i32, i32) {
    %c0_i32 = arith.constant 0 : i32
    %c0_i32_0 = arith.constant 0 : i32
    %c0_i32_1 = arith.constant 0 : i32
    return %c0_i32, %c0_i32_0 : i32, i32
  }
  func.func @transform_2(%arg0: i32) -> (i32, i32) {
    %c0_i32 = arith.constant 0 : i32
    %c0_i32_0 = arith.constant 0 : i32
    %c0_i32_1 = arith.constant 0 : i32
    return %c0_i32, %c0_i32_0 : i32, i32
  }
  func.func @transform_3(%arg0: i32) -> (i32, i32) {
    %c0_i32 = arith.constant 0 : i32
    %c0_i32_0 = arith.constant 0 : i32
    return %arg0, %c0_i32 : i32, i32
  }
  func.func @transform_4(%arg0: i32) -> (i32, i32) {
    %c0_i32 = arith.constant 0 : i32
    %c0_i32_0 = arith.constant 0 : i32
    %c0_i32_1 = arith.constant 0 : i32
    return %c0_i32, %c0_i32_0 : i32, i32
  }
  func.func @transform_5(%arg0: i32) -> (i32, i32) {
    %c0_i32 = arith.constant 0 : i32
    %c0_i32_0 = arith.constant 0 : i32
    %c0_i32_1 = arith.constant 0 : i32
    return %c0_i32, %c0_i32_0 : i32, i32
  }
  func.func @transform_6(%arg0: i32) -> (i32, i32) {
    %c0_i32 = arith.constant 0 : i32
    %c0_i32_0 = arith.constant 0 : i32
    return %arg0, %c0_i32 : i32, i32
  }
}

</mosaic_0001>

<llo_original>
// kernel: tile.49
$region0: #{tile.49}
  %s0 = inlined_call_operand.vmem [shape: f32[9,16,24], index: 0, kind: input, shape index: {}]
  %s1 = inlined_call_operand.vmem [shape: f32[9,384], index: 1, kind: output, shape index: {}]
  %s2 = smov 3
  %v3 = vld [vmem:[%s0] ss:$16 sm:%s2]
  %s4 = smov 12
  %v5 = vld [vmem:[%s0] ss:$16 sm:%s4]
  %vm6 = vcmask 1043458
  %v7 = vsel %vm6, %v5, %v3
  %s8 = smov 48
  %v9 = vld [vmem:[%s0] ss:$16 sm:%s8]
  %vm10 = vcmask 1045508
  %v11 = vsel %vm10, %v9, %v7
  %s12 = smov 192
  %v13 = vld [vmem:[%s0] ss:$16 sm:%s12]
  %vm14 = vcmask 1047558
  %v15 = vsel %vm14, %v13, %v11
  %vm16 = vcmask 195584
  %17 = vst.msk [vmem:[%s1] sm:$0xff] %vm16, %v15
  %s18 = scalar_lea.vmem %s0, 128
  %v19 = vld [vmem:[%s18] sm:$0x1]
  %vm20 = vcmask 195584
  %s21 = scalar_lea.vmem %s1, 24
  %22 = vst.msk [vmem:[%s21] sm:$0x1] %vm20, %v19
  %s23 = scalar_lea.vmem %s0, 133
  %v24 = vld [vmem:[%s23] sm:$0x1]
  %s25 = scalar_lea.vmem %s0, 4294967285
  %s26 = smov 6
  %v27 = vld [vmem:[%s25] ss:$16 sm:%s26]
  %vm28 = vcmask 1042433
  %v29 = vsel %vm28, %v27, %v24
  %s30 = scalar_lea.vmem %s0, 4294967285
  %s31 = smov 24
  %v32 = vld [vmem:[%s30] ss:$16 sm:%s31]
  %vm33 = vcmask 1044483
  %v34 = vsel %vm33, %v32, %v29
  %s35 = scalar_lea.vmem %s0, 4294967285
  %s36 = smov 96
  %v37 = vld [vmem:[%s35] ss:$16 sm:%s36]
  %vm38 = vcmask 1046533
  %v39 = vsel %vm38, %v37, %v34
  %s40 = scalar_lea.vmem %s0, 94
  %v41 = vld [vmem:[%s40] sm:$0x80]
  %vm42 = vcmask 1047559
  %v43 = vsel %vm42, %v41, %v39
  %s44 = scalar_lea.vmem %s0, 5
  %s45 = smov 3
  %v46 = vld [vmem:[%s44] ss:$16 sm:%s45]
  %s47 = scalar_lea.vmem %s0, 5
  %s48 = smov 12
  %v49 = vld [vmem:[%s47] ss:$16 sm:%s48]
  %vm50 = vcmask 1043458
  %v51 = vsel %vm50, %v49, %v46
  %s52 = scalar_lea.vmem %s0, 5
  %s53 = smov 48
  %v54 = vld [vmem:[%s52] ss:$16 sm:%s53]
  %vm55 = vcmask 1045508
  %v56 = vsel %vm55, %v54, %v51
  %s57 = scalar_lea.vmem %s0, 5
  %s58 = smov 192
  %v59 = vld [vmem:[%s57] ss:$16 sm:%s58]
  %vm60 = vcmask 1047558
  %v61 = vsel %vm60, %v59, %v56
  %vm62 = vcmask 64512
  %v63 = vsel %vm62, %v61, %v43
  %64 = vrot.lane.b32.xlu0 %v63, 120
  %v65 = vpop.permute.xlu0 %64
  %vm66 = vcmask 130048
  %s67 = scalar_lea.vmem %s1, 32
  %68 = vst.msk [vmem:[%s67] ss:$-24 sm:$0x3] %vm66, %v65
  %s69 = scalar_lea.vmem %s1, 7
  %70 = vst.msk [vmem:[%s69] sm:$0xfc] %vm66, %v65
  %vm71 = vcmask 1048512
  %72 = vst.msk [vmem:[%s1] sm:$0xff] %vm71, %v65
  %s73 = scalar_lea.vmem %s0, 117
  %v74 = vld [vmem:[%s73] sm:$0x1]
  %s75 = scalar_lea.vmem %s0, 133
  %v76 = vld [vmem:[%s75] sm:$0x1]
  %vm77 = vcmask 64512
  %v78 = vsel %vm77, %v76, %v74
  %79 = vrot.lane.b32.xlu0 %v78, 120
  %v80 = vpop.permute.xlu0 %79
  %vm81 = vcmask 130048
  %s82 = scalar_lea.vmem %s1, 15
  %83 = vst.msk [vmem:[%s82] sm:$0x1] %vm81, %v80
  %vm84 = vcmask 1048512
  %s85 = scalar_lea.vmem %s1, 24
  %86 = vst.msk [vmem:[%s85] sm:$0x1] %vm84, %v80
  %s87 = scalar_lea.vmem %s0, 138
  %v88 = vld [vmem:[%s87] sm:$0x1]
  %s89 = scalar_lea.vmem %s0, 4294967290
  %s90 = smov 6
  %v91 = vld [vmem:[%s89] ss:$16 sm:%s90]
  %vm92 = vcmask 1042433
  %v93 = vsel %vm92, %v91, %v88
  %s94 = scalar_lea.vmem %s0, 4294967290
  %s95 = smov 24
  %v96 = vld [vmem:[%s94] ss:$16 sm:%s95]
  %vm97 = vcmask 1044483
  %v98 = vsel %vm97, %v96, %v93
  %s99 = scalar_lea.vmem %s0, 4294967290
  %s100 = smov 96
  %v101 = vld [vmem:[%s99] ss:$16 sm:%s100]
  %vm102 = vcmask 1046533
  %v103 = vsel %vm102, %v101, %v98
  %s104 = scalar_lea.vmem %s0, 99
  %v105 = vld [vmem:[%s104] sm:$0x80]
  %vm106 = vcmask 1047559
  %v107 = vsel %vm106, %v105, %v103
  %s108 = scalar_lea.vmem %s0, 138
  %v109 = vld [vmem:[%s108] sm:$0x1]
  %s110 = scalar_lea.vmem %s0, 4294967290
  %s111 = smov 6
  %v112 = vld [vmem:[%s110] ss:$16 sm:%s111]
  %vm113 = vcmask 1042433
  %v114 = vsel %vm113, %v112, %v109
  %s115 = scalar_lea.vmem %s0, 4294967290
  %s116 = smov 24
  %v117 = vld [vmem:[%s115] ss:$16 sm:%s116]
  %vm118 = vcmask 1044483
  %v119 = vsel %vm118, %v117, %v114
  %s120 = scalar_lea.vmem %s0, 4294967290
  %s121 = smov 96
  %v122 = vld [vmem:[%s120] ss:$16 sm:%s121]
  %vm123 = vcmask 1046533
  %v124 = vsel %vm123, %v122, %v119
  %s125 = scalar_lea.vmem %s0, 99
  %v126 = vld [vmem:[%s125] sm:$0x80]
  %vm127 = vcmask 1047559
  %v128 = vsel %vm127, %v126, %v124
  %vm129 = vcmask 130048
  %v130 = vsel %vm129, %v128, %v107
  %131 = vrot.lane.b32.xlu0 %v130, 112
  %v132 = vpop.permute.xlu0 %131
  %vm133 = vcmask 64512
  %s134 = scalar_lea.vmem %s1, 40
  %135 = vst.msk [vmem:[%s134] ss:$-24 sm:$0x3] %vm133, %v132
  %s136 = scalar_lea.vmem %s1, 15
  %137 = vst.msk [vmem:[%s136] sm:$0xfc] %vm133, %v132
  %vm138 = vcmask 1048448
  %s139 = scalar_lea.vmem %s1, 32
  %140 = vst.msk [vmem:[%s139] ss:$-24 sm:$0x3] %vm138, %v132
  %s141 = scalar_lea.vmem %s1, 7
  %142 = vst.msk [vmem:[%s141] sm:$0xfc] %vm138, %v132
  %s143 = scalar_lea.vmem %s0, 122
  %v144 = vld [vmem:[%s143] sm:$0x1]
  %s145 = scalar_lea.vmem %s0, 122
  %v146 = vld [vmem:[%s145] sm:$0x1]
  %vm147 = vcmask 130048
  %v148 = vsel %vm147, %v146, %v144
  %149 = vrot.lane.b32.xlu0 %v148, 112
  %v150 = vpop.permute.xlu0 %149
  %vm151 = vcmask 64512
  %s152 = scalar_lea.vmem %s1, 23
  %153 = vst.msk [vmem:[%s152] sm:$0x1] %vm151, %v150
  %vm154 = vcmask 1048448
  %s155 = scalar_lea.vmem %s1, 15
  %156 = vst.msk [vmem:[%s155] sm:$0x1] %vm154, %v150
  %s157 = scalar_lea.vmem %s0, 143
  %v158 = vld [vmem:[%s157] sm:$0x1]
  %s159 = scalar_lea.vmem %s0, 4294967295
  %s160 = smov 6
  %v161 = vld [vmem:[%s159] ss:$16 sm:%s160]
  %vm162 = vcmask 1042433
  %v163 = vsel %vm162, %v161, %v158
  %s164 = scalar_lea.vmem %s0, 4294967295
  %s165 = smov 24
  %v166 = vld [vmem:[%s164] ss:$16 sm:%s165]
  %vm167 = vcmask 1044483
  %v168 = vsel %vm167, %v166, %v163
  %s169 = scalar_lea.vmem %s0, 4294967295
  %s170 = smov 96
  %v171 = vld [vmem:[%s169] ss:$16 sm:%s170]
  %vm172 = vcmask 1046533
  %v173 = vsel %vm172, %v171, %v168
  %s174 = scalar_lea.vmem %s0, 104
  %v175 = vld [vmem:[%s174] sm:$0x80]
  %vm176 = vcmask 1047559
  %v177 = vsel %vm176, %v175, %v173
  %178 = vrot.lane.b32.xlu0 %v177, 104
  %v179 = vpop.permute.xlu0 %178
  %vm180 = vcmask 1048384
  %s181 = scalar_lea.vmem %s1, 40
  %182 = vst.msk [vmem:[%s181] ss:$-24 sm:$0x3] %vm180, %v179
  %s183 = scalar_lea.vmem %s1, 15
  %184 = vst.msk [vmem:[%s183] sm:$0xfc] %vm180, %v179
  %s185 = scalar_lea.vmem %s0, 127
  %v186 = vld [vmem:[%s185] sm:$0x1]
  %187 = vrot.lane.b32.xlu0 %v186, 104
  %v188 = vpop.permute.xlu0 %187
  %vm189 = vcmask 1048384
  %s190 = scalar_lea.vmem %s1, 23
  %191 = vst.msk [vmem:[%s190] sm:$0x1] %vm189, %v188
  %s192 = scalar_lea.vmem %s0, 4
  %s193 = smov 3
  %v194 = vld [vmem:[%s192] ss:$16 sm:%s193]
  %s195 = scalar_lea.vmem %s0, 4
  %s196 = smov 12
  %v197 = vld [vmem:[%s195] ss:$16 sm:%s196]
  %vm198 = vcmask 1043458
  %v199 = vsel %vm198, %v197, %v194
  %s200 = scalar_lea.vmem %s0, 4
  %s201 = smov 48
  %v202 = vld [vmem:[%s200] ss:$16 sm:%s201]
  %vm203 = vcmask 1045508
  %v204 = vsel %vm203, %v202, %v199
  %s205 = scalar_lea.vmem %s0, 4
  %s206 = smov 192
  %v207 = vld [vmem:[%s205] ss:$16 sm:%s206]
  %vm208 = vcmask 1047558
  %v209 = vsel %vm208, %v207, %v204
  %210 = vrot.lane.b32.xlu0 %v209, 96
  %v211 = vpop.permute.xlu0 %210
  %vm212 = vcmask 982784
  %213 = vst.msk [vmem:[%s1] sm:$0xff] %vm212, %v211
  %s214 = scalar_lea.vmem %s0, 132
  %v215 = vld [vmem:[%s214] sm:$0x1]
  %216 = vrot.lane.b32.xlu0 %v215, 96
  %v217 = vpop.permute.xlu0 %216
  %vm218 = vcmask 982784
  %s219 = scalar_lea.vmem %s1, 24
  %220 = vst.msk [vmem:[%s219] sm:$0x1] %vm218, %v217
  %s221 = scalar_lea.vmem %s0, 137
  %v222 = vld [vmem:[%s221] sm:$0x1]
  %s223 = scalar_lea.vmem %s0, 4294967289
  %s224 = smov 6
  %v225 = vld [vmem:[%s223] ss:$16 sm:%s224]
  %vm226 = vcmask 1042433
  %v227 = vsel %vm226, %v225, %v222
  %s228 = scalar_lea.vmem %s0, 4294967289
  %s229 = smov 24
  %v230 = vld [vmem:[%s228] ss:$16 sm:%s229]
  %vm231 = vcmask 1044483
  %v232 = vsel %vm231, %v230, %v227
  %s233 = scalar_lea.vmem %s0, 4294967289
  %s234 = smov 96
  %v235 = vld [vmem:[%s233] ss:$16 sm:%s234]
  %vm236 = vcmask 1046533
  %v237 = vsel %vm236, %v235, %v232
  %s238 = scalar_lea.vmem %s0, 98
  %v239 = vld [vmem:[%s238] sm:$0x80]
  %vm240 = vcmask 1047559
  %v241 = vsel %vm240, %v239, %v237
  %242 = vrot.lane.b32.xlu0 %v241, 88
  %v243 = vpop.permute.xlu0 %242
  %vm244 = vcmask 917184
  %s245 = scalar_lea.vmem %s1, 32
  %246 = vst.msk [vmem:[%s245] ss:$-24 sm:$0x3] %vm244, %v243
  %s247 = scalar_lea.vmem %s1, 7
  %248 = vst.msk [vmem:[%s247] sm:$0xfc] %vm244, %v243
  %s249 = scalar_lea.vmem %s0, 121
  %v250 = vld [vmem:[%s249] sm:$0x1]
  %251 = vrot.lane.b32.xlu0 %v250, 88
  %v252 = vpop.permute.xlu0 %251
  %vm253 = vcmask 917184
  %s254 = scalar_lea.vmem %s1, 15
  %255 = vst.msk [vmem:[%s254] sm:$0x1] %vm253, %v252
  %s256 = scalar_lea.vmem %s0, 142
  %v257 = vld [vmem:[%s256] sm:$0x1]
  %s258 = scalar_lea.vmem %s0, 4294967294
  %s259 = smov 6
  %v260 = vld [vmem:[%s258] ss:$16 sm:%s259]
  %vm261 = vcmask 1042433
  %v262 = vsel %vm261, %v260, %v257
  %s263 = scalar_lea.vmem %s0, 4294967294
  %s264 = smov 24
  %v265 = vld [vmem:[%s263] ss:$16 sm:%s264]
  %vm266 = vcmask 1044483
  %v267 = vsel %vm266, %v265, %v262
  %s268 = scalar_lea.vmem %s0, 4294967294
  %s269 = smov 96
  %v270 = vld [vmem:[%s268] ss:$16 sm:%s269]
  %vm271 = vcmask 1046533
  %v272 = vsel %vm271, %v270, %v267
  %s273 = scalar_lea.vmem %s0, 103
  %v274 = vld [vmem:[%s273] sm:$0x80]
  %vm275 = vcmask 1047559
  %v276 = vsel %vm275, %v274, %v272
  %277 = vrot.lane.b32.xlu0 %v276, 80
  %v278 = vpop.permute.xlu0 %277
  %vm279 = vcmask 851584
  %s280 = scalar_lea.vmem %s1, 40
  %281 = vst.msk [vmem:[%s280] ss:$-24 sm:$0x3] %vm279, %v278
  %s282 = scalar_lea.vmem %s1, 15
  %283 = vst.msk [vmem:[%s282] sm:$0xfc] %vm279, %v278
  %s284 = scalar_lea.vmem %s0, 126
  %v285 = vld [vmem:[%s284] sm:$0x1]
  %286 = vrot.lane.b32.xlu0 %v285, 80
  %v287 = vpop.permute.xlu0 %286
  %vm288 = vcmask 851584
  %s289 = scalar_lea.vmem %s1, 23
  %290 = vst.msk [vmem:[%s289] sm:$0x1] %vm288, %v287
  %s291 = scalar_lea.vmem %s0, 3
  %s292 = smov 3
  %v293 = vld [vmem:[%s291] ss:$16 sm:%s292]
  %s294 = scalar_lea.vmem %s0, 3
  %s295 = smov 12
  %v296 = vld [vmem:[%s294] ss:$16 sm:%s295]
  %vm297 = vcmask 1043458
  %v298 = vsel %vm297, %v296, %v293
  %s299 = scalar_lea.vmem %s0, 3
  %s300 = smov 48
  %v301 = vld [vmem:[%s299] ss:$16 sm:%s300]
  %vm302 = vcmask 1045508
  %v303 = vsel %vm302, %v301, %v298
  %s304 = scalar_lea.vmem %s0, 3
  %s305 = smov 192
  %v306 = vld [vmem:[%s304] ss:$16 sm:%s305]
  %vm307 = vcmask 1047558
  %v308 = vsel %vm307, %v306, %v303
  %309 = vrot.lane.b32.xlu0 %v308, 72
  %v310 = vpop.permute.xlu0 %309
  %vm311 = vcmask 785984
  %312 = vst.msk [vmem:[%s1] sm:$0xff] %vm311, %v310
  %s313 = scalar_lea.vmem %s0, 131
  %v314 = vld [vmem:[%s313] sm:$0x1]
  %315 = vrot.lane.b32.xlu0 %v314, 72
  %v316 = vpop.permute.xlu0 %315
  %vm317 = vcmask 785984
  %s318 = scalar_lea.vmem %s1, 24
  %319 = vst.msk [vmem:[%s318] sm:$0x1] %vm317, %v316
  %s320 = scalar_lea.vmem %s0, 136
  %v321 = vld [vmem:[%s320] sm:$0x1]
  %s322 = scalar_lea.vmem %s0, 4294967288
  %s323 = smov 6
  %v324 = vld [vmem:[%s322] ss:$16 sm:%s323]
  %vm325 = vcmask 1042433
  %v326 = vsel %vm325, %v324, %v321
  %s327 = scalar_lea.vmem %s0, 4294967288
  %s328 = smov 24
  %v329 = vld [vmem:[%s327] ss:$16 sm:%s328]
  %vm330 = vcmask 1044483
  %v331 = vsel %vm330, %v329, %v326
  %s332 = scalar_lea.vmem %s0, 4294967288
  %s333 = smov 96
  %v334 = vld [vmem:[%s332] ss:$16 sm:%s333]
  %vm335 = vcmask 1046533
  %v336 = vsel %vm335, %v334, %v331
  %s337 = scalar_lea.vmem %s0, 97
  %v338 = vld [vmem:[%s337] sm:$0x80]
  %vm339 = vcmask 1047559
  %v340 = vsel %vm339, %v338, %v336
  %341 = vrot.lane.b32.xlu0 %v340, 64
  %v342 = vpop.permute.xlu0 %341
  %vm343 = vcmask 720384
  %s344 = scalar_lea.vmem %s1, 32
  %345 = vst.msk [vmem:[%s344] ss:$-24 sm:$0x3] %vm343, %v342
  %s346 = scalar_lea.vmem %s1, 7
  %347 = vst.msk [vmem:[%s346] sm:$0xfc] %vm343, %v342
  %s348 = scalar_lea.vmem %s0, 120
  %v349 = vld [vmem:[%s348] sm:$0x1]
  %350 = vrot.lane.b32.xlu0 %v349, 64
  %v351 = vpop.permute.xlu0 %350
  %vm352 = vcmask 720384
  %s353 = scalar_lea.vmem %s1, 15
  %354 = vst.msk [vmem:[%s353] sm:$0x1] %vm352, %v351
  %s355 = scalar_lea.vmem %s0, 141
  %v356 = vld [vmem:[%s355] sm:$0x1]
  %s357 = scalar_lea.vmem %s0, 4294967293
  %s358 = smov 6
  %v359 = vld [vmem:[%s357] ss:$16 sm:%s358]
  %vm360 = vcmask 1042433
  %v361 = vsel %vm360, %v359, %v356
  %s362 = scalar_lea.vmem %s0, 4294967293
  %s363 = smov 24
  %v364 = vld [vmem:[%s362] ss:$16 sm:%s363]
  %vm365 = vcmask 1044483
  %v366 = vsel %vm365, %v364, %v361
  %s367 = scalar_lea.vmem %s0, 4294967293
  %s368 = smov 96
  %v369 = vld [vmem:[%s367] ss:$16 sm:%s368]
  %vm370 = vcmask 1046533
  %v371 = vsel %vm370, %v369, %v366
  %s372 = scalar_lea.vmem %s0, 102
  %v373 = vld [vmem:[%s372] sm:$0x80]
  %vm374 = vcmask 1047559
  %v375 = vsel %vm374, %v373, %v371
  %376 = vrot.lane.b32.xlu0 %v375, 56
  %v377 = vpop.permute.xlu0 %376
  %vm378 = vcmask 654784
  %s379 = scalar_lea.vmem %s1, 40
  %380 = vst.msk [vmem:[%s379] ss:$-24 sm:$0x3] %vm378, %v377
  %s381 = scalar_lea.vmem %s1, 15
  %382 = vst.msk [vmem:[%s381] sm:$0xfc] %vm378, %v377
  %s383 = scalar_lea.vmem %s0, 125
  %v384 = vld [vmem:[%s383] sm:$0x1]
  %385 = vrot.lane.b32.xlu0 %v384, 56
  %v386 = vpop.permute.xlu0 %385
  %vm387 = vcmask 654784
  %s388 = scalar_lea.vmem %s1, 23
  %389 = vst.msk [vmem:[%s388] sm:$0x1] %vm387, %v386
  %s390 = scalar_lea.vmem %s0, 2
  %s391 = smov 3
  %v392 = vld [vmem:[%s390] ss:$16 sm:%s391]
  %s393 = scalar_lea.vmem %s0, 2
  %s394 = smov 12
  %v395 = vld [vmem:[%s393] ss:$16 sm:%s394]
  %vm396 = vcmask 1043458
  %v397 = vsel %vm396, %v395, %v392
  %s398 = scalar_lea.vmem %s0, 2
  %s399 = smov 48
  %v400 = vld [vmem:[%s398] ss:$16 sm:%s399]
  %vm401 = vcmask 1045508
  %v402 = vsel %vm401, %v400, %v397
  %s403 = scalar_lea.vmem %s0, 2
  %s404 = smov 192
  %v405 = vld [vmem:[%s403] ss:$16 sm:%s404]
  %vm406 = vcmask 1047558
  %v407 = vsel %vm406, %v405, %v402
  %408 = vrot.lane.b32.xlu0 %v407, 48
  %v409 = vpop.permute.xlu0 %408
  %vm410 = vcmask 589184
  %411 = vst.msk [vmem:[%s1] sm:$0xff] %vm410, %v409
  %s412 = scalar_lea.vmem %s0, 130
  %v413 = vld [vmem:[%s412] sm:$0x1]
  %414 = vrot.lane.b32.xlu0 %v413, 48
  %v415 = vpop.permute.xlu0 %414
  %vm416 = vcmask 589184
  %s417 = scalar_lea.vmem %s1, 24
  %418 = vst.msk [vmem:[%s417] sm:$0x1] %vm416, %v415
  %s419 = scalar_lea.vmem %s0, 135
  %v420 = vld [vmem:[%s419] sm:$0x1]
  %s421 = scalar_lea.vmem %s0, 4294967287
  %s422 = smov 6
  %v423 = vld [vmem:[%s421] ss:$16 sm:%s422]
  %vm424 = vcmask 1042433
  %v425 = vsel %vm424, %v423, %v420
  %s426 = scalar_lea.vmem %s0, 4294967287
  %s427 = smov 24
  %v428 = vld [vmem:[%s426] ss:$16 sm:%s427]
  %vm429 = vcmask 1044483
  %v430 = vsel %vm429, %v428, %v425
  %s431 = scalar_lea.vmem %s0, 4294967287
  %s432 = smov 96
  %v433 = vld [vmem:[%s431] ss:$16 sm:%s432]
  %vm434 = vcmask 1046533
  %v435 = vsel %vm434, %v433, %v430
  %s436 = scalar_lea.vmem %s0, 96
  %v437 = vld [vmem:[%s436] sm:$0x80]
  %vm438 = vcmask 1047559
  %v439 = vsel %vm438, %v437, %v435
  %440 = vrot.lane.b32.xlu0 %v439, 40
  %v441 = vpop.permute.xlu0 %440
  %vm442 = vcmask 523584
  %s443 = scalar_lea.vmem %s1, 32
  %444 = vst.msk [vmem:[%s443] ss:$-24 sm:$0x3] %vm442, %v441
  %s445 = scalar_lea.vmem %s1, 7
  %446 = vst.msk [vmem:[%s445] sm:$0xfc] %vm442, %v441
  %s447 = scalar_lea.vmem %s0, 119
  %v448 = vld [vmem:[%s447] sm:$0x1]
  %449 = vrot.lane.b32.xlu0 %v448, 40
  %v450 = vpop.permute.xlu0 %449
  %vm451 = vcmask 523584
  %s452 = scalar_lea.vmem %s1, 15
  %453 = vst.msk [vmem:[%s452] sm:$0x1] %vm451, %v450
  %s454 = scalar_lea.vmem %s0, 140
  %v455 = vld [vmem:[%s454] sm:$0x1]
  %s456 = scalar_lea.vmem %s0, 4294967292
  %s457 = smov 6
  %v458 = vld [vmem:[%s456] ss:$16 sm:%s457]
  %vm459 = vcmask 1042433
  %v460 = vsel %vm459, %v458, %v455
  %s461 = scalar_lea.vmem %s0, 4294967292
  %s462 = smov 24
  %v463 = vld [vmem:[%s461] ss:$16 sm:%s462]
  %vm464 = vcmask 1044483
  %v465 = vsel %vm464, %v463, %v460
  %s466 = scalar_lea.vmem %s0, 4294967292
  %s467 = smov 96
  %v468 = vld [vmem:[%s466] ss:$16 sm:%s467]
  %vm469 = vcmask 1046533
  %v470 = vsel %vm469, %v468, %v465
  %s471 = scalar_lea.vmem %s0, 101
  %v472 = vld [vmem:[%s471] sm:$0x80]
  %vm473 = vcmask 1047559
  %v474 = vsel %vm473, %v472, %v470
  %475 = vrot.lane.b32.xlu0 %v474, 32
  %v476 = vpop.permute.xlu0 %475
  %vm477 = vcmask 457984
  %s478 = scalar_lea.vmem %s1, 40
  %479 = vst.msk [vmem:[%s478] ss:$-24 sm:$0x3] %vm477, %v476
  %s480 = scalar_lea.vmem %s1, 15
  %481 = vst.msk [vmem:[%s480] sm:$0xfc] %vm477, %v476
  %s482 = scalar_lea.vmem %s0, 124
  %v483 = vld [vmem:[%s482] sm:$0x1]
  %484 = vrot.lane.b32.xlu0 %v483, 32
  %v485 = vpop.permute.xlu0 %484
  %vm486 = vcmask 457984
  %s487 = scalar_lea.vmem %s1, 23
  %488 = vst.msk [vmem:[%s487] sm:$0x1] %vm486, %v485
  %s489 = scalar_lea.vmem %s0, 1
  %s490 = smov 3
  %v491 = vld [vmem:[%s489] ss:$16 sm:%s490]
  %s492 = scalar_lea.vmem %s0, 1
  %s493 = smov 12
  %v494 = vld [vmem:[%s492] ss:$16 sm:%s493]
  %vm495 = vcmask 1043458
  %v496 = vsel %vm495, %v494, %v491
  %s497 = scalar_lea.vmem %s0, 1
  %s498 = smov 48
  %v499 = vld [vmem:[%s497] ss:$16 sm:%s498]
  %vm500 = vcmask 1045508
  %v501 = vsel %vm500, %v499, %v496
  %s502 = scalar_lea.vmem %s0, 1
  %s503 = smov 192
  %v504 = vld [vmem:[%s502] ss:$16 sm:%s503]
  %vm505 = vcmask 1047558
  %v506 = vsel %vm505, %v504, %v501
  %507 = vrot.lane.b32.xlu0 %v506, 24
  %v508 = vpop.permute.xlu0 %507
  %vm509 = vcmask 392384
  %510 = vst.msk [vmem:[%s1] sm:$0xff] %vm509, %v508
  %s511 = scalar_lea.vmem %s0, 129
  %v512 = vld [vmem:[%s511] sm:$0x1]
  %513 = vrot.lane.b32.xlu0 %v512, 24
  %v514 = vpop.permute.xlu0 %513
  %vm515 = vcmask 392384
  %s516 = scalar_lea.vmem %s1, 24
  %517 = vst.msk [vmem:[%s516] sm:$0x1] %vm515, %v514
  %s518 = scalar_lea.vmem %s0, 134
  %v519 = vld [vmem:[%s518] sm:$0x1]
  %s520 = scalar_lea.vmem %s0, 4294967286
  %s521 = smov 6
  %v522 = vld [vmem:[%s520] ss:$16 sm:%s521]
  %vm523 = vcmask 1042433
  %v524 = vsel %vm523, %v522, %v519
  %s525 = scalar_lea.vmem %s0, 4294967286
  %s526 = smov 24
  %v527 = vld [vmem:[%s525] ss:$16 sm:%s526]
  %vm528 = vcmask 1044483
  %v529 = vsel %vm528, %v527, %v524
  %s530 = scalar_lea.vmem %s0, 4294967286
  %s531 = smov 96
  %v532 = vld [vmem:[%s530] ss:$16 sm:%s531]
  %vm533 = vcmask 1046533
  %v534 = vsel %vm533, %v532, %v529
  %s535 = scalar_lea.vmem %s0, 95
  %v536 = vld [vmem:[%s535] sm:$0x80]
  %vm537 = vcmask 1047559
  %v538 = vsel %vm537, %v536, %v534
  %539 = vrot.lane.b32.xlu0 %v538, 16
  %v540 = vpop.permute.xlu0 %539
  %vm541 = vcmask 326784
  %s542 = scalar_lea.vmem %s1, 32
  %543 = vst.msk [vmem:[%s542] ss:$-24 sm:$0x3] %vm541, %v540
  %s544 = scalar_lea.vmem %s1, 7
  %545 = vst.msk [vmem:[%s544] sm:$0xfc] %vm541, %v540
  %s546 = scalar_lea.vmem %s0, 118
  %v547 = vld [vmem:[%s546] sm:$0x1]
  %548 = vrot.lane.b32.xlu0 %v547, 16
  %v549 = vpop.permute.xlu0 %548
  %vm550 = vcmask 326784
  %s551 = scalar_lea.vmem %s1, 15
  %552 = vst.msk [vmem:[%s551] sm:$0x1] %vm550, %v549
  %s553 = scalar_lea.vmem %s0, 139
  %v554 = vld [vmem:[%s553] sm:$0x1]
  %s555 = scalar_lea.vmem %s0, 4294967291
  %s556 = smov 6
  %v557 = vld [vmem:[%s555] ss:$16 sm:%s556]
  %vm558 = vcmask 1042433
  %v559 = vsel %vm558, %v557, %v554
  %s560 = scalar_lea.vmem %s0, 4294967291
  %s561 = smov 24
  %v562 = vld [vmem:[%s560] ss:$16 sm:%s561]
  %vm563 = vcmask 1044483
  %v564 = vsel %vm563, %v562, %v559
  %s565 = scalar_lea.vmem %s0, 4294967291
  %s566 = smov 96
  %v567 = vld [vmem:[%s565] ss:$16 sm:%s566]
  %vm568 = vcmask 1046533
  %v569 = vsel %vm568, %v567, %v564
  %s570 = scalar_lea.vmem %s0, 100
  %v571 = vld [vmem:[%s570] sm:$0x80]
  %vm572 = vcmask 1047559
  %v573 = vsel %vm572, %v571, %v569
  %574 = vrot.lane.b32.xlu0 %v573, 8
  %v575 = vpop.permute.xlu0 %574
  %vm576 = vcmask 261184
  %s577 = scalar_lea.vmem %s1, 40
  %578 = vst.msk [vmem:[%s577] ss:$-24 sm:$0x3] %vm576, %v575
  %s579 = scalar_lea.vmem %s1, 15
  %580 = vst.msk [vmem:[%s579] sm:$0xfc] %vm576, %v575
  %s581 = scalar_lea.vmem %s0, 123
  %v582 = vld [vmem:[%s581] sm:$0x1]
  %583 = vrot.lane.b32.xlu0 %v582, 8
  %v584 = vpop.permute.xlu0 %583
  %vm585 = vcmask 261184
  %s586 = scalar_lea.vmem %s1, 23
  %587 = vst.msk [vmem:[%s586] sm:$0x1] %vm585, %v584

// kernel: block_forward.4
$region0: #{block_forward.4}
  #allocation0 [shape = 'u32[]', space=smem, size = 0x4, offset = 0x4, fixed_abs, tag = 'smem constant byte address 0x4 - core index']
  #allocation1 [shape = 'u32[72,128]{1,0:T(1,128)}', space=vmem, size = 0x9000, scoped, tag = 'internal scratch']
  %s0 = inlined_call_operand.vmem [shape: f32[32,64], index: 0, kind: input, shape index: {}]
  %s1 = inlined_call_operand.vmem [shape: f32[64,560], index: 1, kind: input, shape index: {}]
  %s2 = inlined_call_operand.vmem [shape: f32[32,432], index: 2, kind: output, shape index: {0}]
  %s3 = inlined_call_operand.vmem [shape: f32[1,432], index: 3, kind: output, shape index: {1}]
  %s4 = inlined_call_operand.vmem [shape: f32[1,432], index: 4, kind: output, shape index: {2}]
  %s5 = inlined_call_operand.vmem [shape: f32[32,128], index: 5, kind: output, shape index: {3}]
  %s6 = inlined_call_operand.vmem [shape: f32[1,128], index: 6, kind: output, shape index: {4}]
  %s7 = inlined_call_operand.vmem [shape: f32[1,128], index: 7, kind: output, shape index: {5}]
  %8 = xla_tuple %s2, %s3, %s4, %s5, %s6, %s7
  %s9 = sld [smem:[#allocation0]]
  $region62: #{block_forward.4} parent=0
    _
  %s11 = ssub.s32 1, %s9
  %s12 = scalar_select 0, %s11, %s9
  // Predicated region
  $region2: #{block_forward.4} parent=0 // pred_check
    _
  $region3: #{block_forward.4} parent=0 // pred_check_branch
    %14 = sbr.rel (0) target = $region5
  $region4: #{block_forward.4} parent=0 // pred_region
    _
  $region5: #{block_forward.4} parent=0 // pred_fallthru
    _
  // Predicated region
  $region6: #{block_forward.4} parent=0 // pred_check
    _
  $region7: #{block_forward.4} parent=0 // pred_check_branch
    %16 = sbr.rel (0) target = $region9
  $region8: #{block_forward.4} parent=0 // pred_region
    _
  $region9: #{block_forward.4} parent=0 // pred_fallthru
    _
  %p17 = scmp.eq.s32.totalorder 0, 0
  // Predicated region
  $region10: #{block_forward.4} parent=0 // pred_check
    %p18 = pneg %p17
  $region11: #{block_forward.4} parent=0 // pred_check_branch
    %20 = sbr.rel (%p18) target = $region13
  $region12: #{block_forward.4} parent=0 // pred_region
    %v21 = vlaneseq
    %vm22 = vcmp.ge.s32.totalorder %v21, 0
    %vm23 = vcmp.lt.s32.totalorder %v21, 432
    %vm24 = vmand %vm22, %vm23
    %25 = vst.msk [vmem:[%s3] sm:$0xf] %vm24, 0.0
    %26 = vst.msk [vmem:[%s4] sm:$0xf] %vm24, 0.0
    %27 = vst [vmem:[%s6] sm:$0x1] 0.0
    %28 = vst [vmem:[%s7] sm:$0x1] 0.0
  $region13: #{block_forward.4} parent=0 // pred_fallthru
    _
  %v29 = vld [vmem:[%s0] sm:$0xff]
  %v30 = vld [vmem:[%s0 + $0x8] sm:$0xff]
  %v31 = vld [vmem:[%s0 + $0x10] sm:$0xff]
  %v32 = vld [vmem:[%s0 + $0x18] sm:$0xff]
  %v33 = vld [vmem:[%s1] sm:$0xff]
  %v34 = vld [vmem:[%s1 + $0x8] sm:$0xff]
  %v35 = vld [vmem:[%s1 + $0x10] sm:$0xff]
  %v36 = vld [vmem:[%s1 + $0x18] sm:$0xff]
  %v37 = vld [vmem:[%s1 + $0x20] sm:$0xff]
  %v38 = vld [vmem:[%s1 + $0x28] sm:$0xff]
  %v39 = vld [vmem:[%s1 + $0x30] sm:$0xff]
  %v40 = vld [vmem:[%s1 + $0x38] sm:$0xff]
  %v41 = vld [vmem:[%s1 + $0x40] sm:$0xff]
  %v42 = vld [vmem:[%s1 + $0x48] sm:$0xff]
  %v43 = vld [vmem:[%s1 + $0x50] sm:$0xff]
  %v44 = vld [vmem:[%s1 + $0x58] sm:$0xff]
  %v45 = vld [vmem:[%s1 + $0x60] sm:$0xff]
  %v46 = vld [vmem:[%s1 + $0x68] sm:$0xff]
  %v47 = vld [vmem:[%s1 + $0x70] sm:$0xff]
  %v48 = vld [vmem:[%s1 + $0x78] sm:$0xff]
  %v49 = vld [vmem:[%s1 + $0x80] sm:$0xff]
  %v50 = vld [vmem:[%s1 + $0x88] sm:$0xff]
  %v51 = vld [vmem:[%s1 + $0x90] sm:$0xff]
  %v52 = vld [vmem:[%s1 + $0x98] sm:$0xff]
  %v53 = vld [vmem:[%s1 + $0xa0] sm:$0xff]
  %v54 = vld [vmem:[%s1 + $0xa8] sm:$0xff]
  %v55 = vld [vmem:[%s1 + $0xb0] sm:$0xff]
  %v56 = vld [vmem:[%s1 + $0xb8] sm:$0xff]
  %v57 = vld [vmem:[%s1 + $0xc0] sm:$0xff]
  %v58 = vld [vmem:[%s1 + $0xc8] sm:$0xff]
  %v59 = vld [vmem:[%s1 + $0xd0] sm:$0xff]
  %v60 = vld [vmem:[%s1 + $0xd8] sm:$0xff]
  %v61 = vld [vmem:[%s1 + $0xe0] sm:$0xff]
  %v62 = vld [vmem:[%s1 + $0xe8] sm:$0xff]
  %v63 = vld [vmem:[%s1 + $0xf0] sm:$0xff]
  %v64 = vld [vmem:[%s1 + $0xf8] sm:$0xff]
  %v65 = vld [vmem:[%s1 + $0x100] sm:$0xff]
  %v66 = vld [vmem:[%s1 + $0x108] sm:$0xff]
  %v67 = vld [vmem:[%s1 + $0x110] sm:$0xff]
  %v68 = vld [vmem:[%s1 + $0x118] sm:$0xff]
  %v69 = vld [vmem:[%s1 + $0x120] sm:$0xff]
  %v70 = vld [vmem:[%s1 + $0x128] sm:$0xff]
  %v71 = vld [vmem:[%s1 + $0x130] sm:$0xff]
  %v72 = vld [vmem:[%s1 + $0x138] sm:$0xff]
  %vm73 = vcmask 523264
  %v75 = vsel %vm73, %v29, 0
  %v78 = vsel %vm73, %v30, 0
  %v81 = vsel %vm73, %v31, 0
  %v84 = vsel %vm73, %v32, 0
  %86 = vmatpush.msra.mxu0 0.0
  %87 = vmatpush.msra.mxu0 0.0
  %88 = vmatpush.msra.mxu0 0.0
  %89 = vmatpush.msra.mxu0 0.0
  %90 = vmatpush.msra.mxu0 0.0
  %91 = vmatpush.msra.mxu0 0.0
  %92 = vmatpush.msra.mxu0 0.0
  %93 = vmatpush.msra.mxu0 0.0
  %94 = vmatpush.msra.mxu0 %v68
  %95 = vmatpush.msra.mxu0 %v63
  %96 = vmatpush.msra.mxu0 %v58
  %97 = vmatpush.msra.mxu0 %v53
  %98 = vmatpush.msra.mxu0 %v48
  %99 = vmatpush.msra.mxu0 %v43
  %100 = vmatpush.msra.mxu0 %v38
  %101 = vmatpush.msra.mxu0 %v33
  %102 = vmatmul.f32.gmra.mxu0 %v75
  %v103 = vpop.f32.mrf.mxu0
  %v104 = vadd.f32 0.0, %v103
  %105 = vmatmul.f32.gmra.mxu0 %v78
  %v106 = vpop.f32.mrf.mxu0
  %v107 = vadd.f32 0.0, %v106
  %108 = vmatmul.f32.gmra.mxu0 %v81
  %v109 = vpop.f32.mrf.mxu0
  %v110 = vadd.f32 0.0, %v109
  %111 = vmatmul.f32.gmra.mxu0 %v84
  %v112 = vpop.f32.mrf.mxu0
  %v113 = vadd.f32 0.0, %v112
  %114 = vdwg.mxu0
  %115 = vmatpush.msra.mxu0 0.0
  %116 = vmatpush.msra.mxu0 0.0
  %117 = vmatpush.msra.mxu0 0.0
  %118 = vmatpush.msra.mxu0 0.0
  %119 = vmatpush.msra.mxu0 0.0
  %120 = vmatpush.msra.mxu0 0.0
  %121 = vmatpush.msra.mxu0 0.0
  %122 = vmatpush.msra.mxu0 0.0
  %123 = vmatpush.msra.mxu0 %v69
  %124 = vmatpush.msra.mxu0 %v64
  %125 = vmatpush.msra.mxu0 %v59
  %126 = vmatpush.msra.mxu0 %v54
  %127 = vmatpush.msra.mxu0 %v49
  %128 = vmatpush.msra.mxu0 %v44
  %129 = vmatpush.msra.mxu0 %v39
  %130 = vmatpush.msra.mxu0 %v34
  %131 = vmatmul.f32.gmra.mxu0 %v75
  %v132 = vpop.f32.mrf.mxu0
  %v133 = vadd.f32 0.0, %v132
  %134 = vmatmul.f32.gmra.mxu0 %v78
  %v135 = vpop.f32.mrf.mxu0
  %v136 = vadd.f32 0.0, %v135
  %137 = vmatmul.f32.gmra.mxu0 %v81
  %v138 = vpop.f32.mrf.mxu0
  %v139 = vadd.f32 0.0, %v138
  %140 = vmatmul.f32.gmra.mxu0 %v84
  %v141 = vpop.f32.mrf.mxu0
  %v142 = vadd.f32 0.0, %v141
  %143 = vdwg.mxu0
  %144 = vmatpush.msra.mxu0 0.0
  %145 = vmatpush.msra.mxu0 0.0
  %146 = vmatpush.msra.mxu0 0.0
  %147 = vmatpush.msra.mxu0 0.0
  %148 = vmatpush.msra.mxu0 0.0
  %149 = vmatpush.msra.mxu0 0.0
  %150 = vmatpush.msra.mxu0 0.0
  %151 = vmatpush.msra.mxu0 0.0
  %152 = vmatpush.msra.mxu0 %v70
  %153 = vmatpush.msra.mxu0 %v65
  %154 = vmatpush.msra.mxu0 %v60
  %155 = vmatpush.msra.mxu0 %v55
  %156 = vmatpush.msra.mxu0 %v50
  %157 = vmatpush.msra.mxu0 %v45
  %158 = vmatpush.msra.mxu0 %v40
  %159 = vmatpush.msra.mxu0 %v35
  %160 = vmatmul.f32.gmra.mxu0 %v75
  %v161 = vpop.f32.mrf.mxu0
  %v162 = vadd.f32 0.0, %v161
  %163 = vmatmul.f32.gmra.mxu0 %v78
  %v164 = vpop.f32.mrf.mxu0
  %v165 = vadd.f32 0.0, %v164
  %166 = vmatmul.f32.gmra.mxu0 %v81
  %v167 = vpop.f32.mrf.mxu0
  %v168 = vadd.f32 0.0, %v167
  %169 = vmatmul.f32.gmra.mxu0 %v84
  %v170 = vpop.f32.mrf.mxu0
  %v171 = vadd.f32 0.0, %v170
  %172 = vdwg.mxu0
  %173 = vmatpush.msra.mxu0 0.0
  %174 = vmatpush.msra.mxu0 0.0
  %175 = vmatpush.msra.mxu0 0.0
  %176 = vmatpush.msra.mxu0 0.0
  %177 = vmatpush.msra.mxu0 0.0
  %178 = vmatpush.msra.mxu0 0.0
  %179 = vmatpush.msra.mxu0 0.0
  %180 = vmatpush.msra.mxu0 0.0
  %181 = vmatpush.msra.mxu0 %v71
  %182 = vmatpush.msra.mxu0 %v66
  %183 = vmatpush.msra.mxu0 %v61
  %184 = vmatpush.msra.mxu0 %v56
  %185 = vmatpush.msra.mxu0 %v51
  %186 = vmatpush.msra.mxu0 %v46
  %187 = vmatpush.msra.mxu0 %v41
  %188 = vmatpush.msra.mxu0 %v36
  %189 = vmatmul.f32.gmra.mxu0 %v75
  %v190 = vpop.f32.mrf.mxu0
  %v191 = vadd.f32 0.0, %v190
  %192 = vmatmul.f32.gmra.mxu0 %v78
  %v193 = vpop.f32.mrf.mxu0
  %v194 = vadd.f32 0.0, %v193
  %195 = vmatmul.f32.gmra.mxu0 %v81
  %v196 = vpop.f32.mrf.mxu0
  %v197 = vadd.f32 0.0, %v196
  %198 = vmatmul.f32.gmra.mxu0 %v84
  %v199 = vpop.f32.mrf.mxu0
  %v200 = vadd.f32 0.0, %v199
  %201 = vdwg.mxu0
  %202 = vmatpush.msra.mxu0 0.0
  %203 = vmatpush.msra.mxu0 0.0
  %204 = vmatpush.msra.mxu0 0.0
  %205 = vmatpush.msra.mxu0 0.0
  %206 = vmatpush.msra.mxu0 0.0
  %207 = vmatpush.msra.mxu0 0.0
  %208 = vmatpush.msra.mxu0 0.0
  %209 = vmatpush.msra.mxu0 0.0
  %210 = vmatpush.msra.mxu0 %v72
  %211 = vmatpush.msra.mxu0 %v67
  %212 = vmatpush.msra.mxu0 %v62
  %213 = vmatpush.msra.mxu0 %v57
  %214 = vmatpush.msra.mxu0 %v52
  %215 = vmatpush.msra.mxu0 %v47
  %216 = vmatpush.msra.mxu0 %v42
  %217 = vmatpush.msra.mxu0 %v37
  %218 = vmatmul.f32.gmra.mxu0 %v75
  %v219 = vpop.f32.mrf.mxu0
  %v220 = vadd.f32 0.0, %v219
  %221 = vmatmul.f32.gmra.mxu0 %v78
  %v222 = vpop.f32.mrf.mxu0
  %v223 = vadd.f32 0.0, %v222
  %224 = vmatmul.f32.gmra.mxu0 %v81
  %v225 = vpop.f32.mrf.mxu0
  %v226 = vadd.f32 0.0, %v225
  %227 = vmatmul.f32.gmra.mxu0 %v84
  %v228 = vpop.f32.mrf.mxu0
  %v229 = vadd.f32 0.0, %v228
  %230 = vdwg.mxu0
  %231 = vst [vmem:[%s5] sm:$0xff] %v104
  %232 = vst [vmem:[%s5 + $0x8] sm:$0xff] %v107
  %233 = vst [vmem:[%s5 + $0x10] sm:$0xff] %v110
  %234 = vst [vmem:[%s5 + $0x18] sm:$0xff] %v113
  %v235 = vld [vmem:[%s6] sm:$0x1]
  %v236 = vadd.f32 %v104, %v107
  %v237 = vadd.f32 %v236, %v110
  %v238 = vadd.f32 %v237, %v113
  %v239 = vrot.slane %v238, 4
  %v240 = vadd.f32 %v238, %v239
  %v241 = vrot.slane %v240, 2
  %v242 = vadd.f32 %v240, %v241
  %v243 = vrot.slane %v242, 1
  %v244 = vadd.f32 %v242, %v243
  %v245 = vadd.f32 %v235, %v244
  %246 = vst [vmem:[%s6] sm:$0x1] %v245
  %v247 = vld [vmem:[%s7] sm:$0x1]
  %v248 = vmul.f32 %v104, %v104
  %v249 = vmul.f32 %v107, %v107
  %v250 = vmul.f32 %v110, %v110
  %v251 = vmul.f32 %v113, %v113
  %v252 = vadd.f32 %v248, %v249
  %v253 = vadd.f32 %v252, %v250
  %v254 = vadd.f32 %v253, %v251
  %v255 = vrot.slane %v254, 4
  %v256 = vadd.f32 %v254, %v255
  %v257 = vrot.slane %v256, 2
  %v258 = vadd.f32 %v256, %v257
  %v259 = vrot.slane %v258, 1
  %v260 = vadd.f32 %v258, %v259
  %v261 = vadd.f32 %v247, %v260
  %262 = vst [vmem:[%s7] sm:$0x1] %v261
  %263 = vst [vmem:[%s2] sm:$0xff] %v133
  %264 = vst [vmem:[%s2 + $0x8] sm:$0xff] %v162
  %265 = vst [vmem:[%s2 + $0x10] sm:$0xff] %v191
  %vm266 = vcmask 392192
  %267 = vst.msk [vmem:[%s2 + $0x18] sm:$0xff] %vm266, %v220
  %268 = vst [vmem:[%s2 + $0x20] sm:$0xff] %v136
  %269 = vst [vmem:[%s2 + $0x28] sm:$0xff] %v165
  %270 = vst [vmem:[%s2 + $0x30] sm:$0xff] %v194
  %271 = vst.msk [vmem:[%s2 + $0x38] sm:$0xff] %vm266, %v223
  %272 = vst [vmem:[%s2 + $0x40] sm:$0xff] %v139
  %273 = vst [vmem:[%s2 + $0x48] sm:$0xff] %v168
  %274 = vst [vmem:[%s2 + $0x50] sm:$0xff] %v197
  %275 = vst.msk [vmem:[%s2 + $0x58] sm:$0xff] %vm266, %v226
  %276 = vst [vmem:[%s2 + $0x60] sm:$0xff] %v142
  %277 = vst [vmem:[%s2 + $0x68] sm:$0xff] %v171
  %278 = vst [vmem:[%s2 + $0x70] sm:$0xff] %v200
  %279 = vst.msk [vmem:[%s2 + $0x78] sm:$0xff] %vm266, %v229
  %v280 = vld [vmem:[%s3] sm:$0xf]
  %v281 = vadd.f32 %v133, %v136
  %v282 = vadd.f32 %v281, %v139
  %v283 = vadd.f32 %v282, %v142
  %v284 = vrot.slane %v283, 4
  %v285 = vadd.f32 %v283, %v284
  %v286 = vrot.slane %v285, 2
  %v287 = vadd.f32 %v285, %v286
  %v288 = vrot.slane %v287, 1
  %v289 = vadd.f32 %v287, %v288
  %v290 = vadd.f32 %v162, %v165
  %v291 = vadd.f32 %v290, %v168
  %v292 = vadd.f32 %v291, %v171
  %v293 = vrot.slane %v292, 4
  %v294 = vadd.f32 %v292, %v293
  %v295 = vrot.slane %v294, 2
  %v296 = vadd.f32 %v294, %v295
  %v297 = vrot.slane %v296, 1
  %v298 = vadd.f32 %v296, %v297
  %v299 = vadd.f32 %v191, %v194
  %v300 = vadd.f32 %v299, %v197
  %v301 = vadd.f32 %v300, %v200
  %v302 = vrot.slane %v301, 4
  %v303 = vadd.f32 %v301, %v302
  %v304 = vrot.slane %v303, 2
  %v305 = vadd.f32 %v303, %v304
  %v306 = vrot.slane %v305, 1
  %v307 = vadd.f32 %v305, %v306
  %v308 = vsel %vm266, %v220, 0.0
  %v309 = vsel %vm266, %v223, 0.0
  %v310 = vadd.f32 %v308, %v309
  %v311 = vsel %vm266, %v226, 0.0
  %v312 = vadd.f32 %v310, %v311
  %v313 = vsel %vm266, %v229, 0.0
  %v314 = vadd.f32 %v312, %v313
  %v315 = vrot.slane %v314, 4
  %v316 = vadd.f32 %v314, %v315
  %v317 = vrot.slane %v316, 2
  %v318 = vadd.f32 %v316, %v317
  %v319 = vrot.slane %v318, 1
  %v320 = vadd.f32 %v318, %v319
  %v325 = vrot.slane %v298, 7
  %v326 = vrot.slane %v307, 6
  %v327 = vrot.slane %v320, 5
  %vm328 = vcmask 1040384
  %v329 = vsel %vm328, %v289, %v325
  %vm330 = vcmask 1042434
  %v331 = vsel %vm330, %v326, %v327
  %vm332 = vcmask 1041408
  %v333 = vsel %vm332, %v329, %v331
  %v335 = vadd.f32 %v280, %v333
  %v336 = vlaneseq
  %vm337 = vcmp.ge.s32.totalorder %v336, 0
  %vm338 = vcmp.lt.s32.totalorder %v336, 432
  %vm339 = vmand %vm337, %vm338
  %340 = vst.msk [vmem:[%s3] sm:$0xf] %vm339, %v335
  %v341 = vld [vmem:[%s4] sm:$0xf]
  %v342 = vmul.f32 %v133, %v133
  %v343 = vmul.f32 %v162, %v162
  %v344 = vmul.f32 %v191, %v191
  %v345 = vmul.f32 %v220, %v220
  %v346 = vmul.f32 %v136, %v136
  %v347 = vmul.f32 %v165, %v165
  %v348 = vmul.f32 %v194, %v194
  %v349 = vmul.f32 %v223, %v223
  %v350 = vmul.f32 %v139, %v139
  %v351 = vmul.f32 %v168, %v168
  %v352 = vmul.f32 %v197, %v197
  %v353 = vmul.f32 %v226, %v226
  %v354 = vmul.f32 %v142, %v142
  %v355 = vmul.f32 %v171, %v171
  %v356 = vmul.f32 %v200, %v200
  %v357 = vmul.f32 %v229, %v229
  %v358 = vadd.f32 %v342, %v346
  %v359 = vadd.f32 %v358, %v350
  %v360 = vadd.f32 %v359, %v354
  %v361 = vrot.slane %v360, 4
  %v362 = vadd.f32 %v360, %v361
  %v363 = vrot.slane %v362, 2
  %v364 = vadd.f32 %v362, %v363
  %v365 = vrot.slane %v364, 1
  %v366 = vadd.f32 %v364, %v365
  %v367 = vadd.f32 %v343, %v347
  %v368 = vadd.f32 %v367, %v351
  %v369 = vadd.f32 %v368, %v355
  %v370 = vrot.slane %v369, 4
  %v371 = vadd.f32 %v369, %v370
  %v372 = vrot.slane %v371, 2
  %v373 = vadd.f32 %v371, %v372
  %v374 = vrot.slane %v373, 1
  %v375 = vadd.f32 %v373, %v374
  %v376 = vadd.f32 %v344, %v348
  %v377 = vadd.f32 %v376, %v352
  %v378 = vadd.f32 %v377, %v356
  %v379 = vrot.slane %v378, 4
  %v380 = vadd.f32 %v378, %v379
  %v381 = vrot.slane %v380, 2
  %v382 = vadd.f32 %v380, %v381
  %v383 = vrot.slane %v382, 1
  %v384 = vadd.f32 %v382, %v383
  %v385 = vsel %vm266, %v345, 0.0
  %v386 = vsel %vm266, %v349, 0.0
  %v387 = vadd.f32 %v385, %v386
  %v388 = vsel %vm266, %v353, 0.0
  %v389 = vadd.f32 %v387, %v388
  %v390 = vsel %vm266, %v357, 0.0
  %v391 = vadd.f32 %v389, %v390
  %v392 = vrot.slane %v391, 4
  %v393 = vadd.f32 %v391, %v392
  %v394 = vrot.slane %v393, 2
  %v395 = vadd.f32 %v393, %v394
  %v396 = vrot.slane %v395, 1
  %v397 = vadd.f32 %v395, %v396
  %v402 = vrot.slane %v375, 7
  %v403 = vrot.slane %v384, 6
  %v404 = vrot.slane %v397, 5
  %v405 = vsel %vm328, %v366, %v402
  %v406 = vsel %vm330, %v403, %v404
  %v407 = vsel %vm332, %v405, %v406
  %v409 = vadd.f32 %v341, %v407
  %410 = vst.msk [vmem:[%s4] sm:$0xf] %vm339, %v409
  // Predicated region
  $region14: #{block_forward.4} parent=0 // pred_check
    _
  $region15: #{block_forward.4} parent=0 // pred_check_branch
    %412 = sbr.rel (0) target = $region17
  $region16: #{block_forward.4} parent=0 // pred_region
    _
  $region17: #{block_forward.4} parent=0 // pred_fallthru
    _
  // Predicated region
  $region18: #{block_forward.4} parent=0 // pred_check
    _
  $region19: #{block_forward.4} parent=0 // pred_check_branch
    %414 = sbr.rel (0) target = $region21
  $region20: #{block_forward.4} parent=0 // pred_region
    _
  $region21: #{block_forward.4} parent=0 // pred_fallthru
    _
  // Predicated region
  $region22: #{block_forward.4} parent=0 // pred_check
    _
  $region23: #{block_forward.4} parent=0 // pred_check_branch
    %416 = sbr.rel (0) target = $region25
  $region24: #{block_forward.4} parent=0 // pred_region
    _
  $region25: #{block_forward.4} parent=0 // pred_fallthru
    _
  // Predicated region
  $region26: #{block_forward.4} parent=0 // pred_check
    _
  $region27: #{block_forward.4} parent=0 // pred_check_branch
    %418 = sbr.rel (0) target = $region29
  $region28: #{block_forward.4} parent=0 // pred_region
    _
  $region29: #{block_forward.4} parent=0 // pred_fallthru
    _
  // Predicated region
  $region30: #{block_forward.4} parent=0 // pred_check
    _
  $region31: #{block_forward.4} parent=0 // pred_check_branch
    %420 = sbr.rel (0) target = $region33
  $region32: #{block_forward.4} parent=0 // pred_region
    _
  $region33: #{block_forward.4} parent=0 // pred_fallthru
    _
  // Predicated region
  $region34: #{block_forward.4} parent=0 // pred_check
    _
  $region35: #{block_forward.4} parent=0 // pred_check_branch
    %422 = sbr.rel (0) target = $region37
  $region36: #{block_forward.4} parent=0 // pred_region
    _
  $region37: #{block_forward.4} parent=0 // pred_fallthru
    _
  // Predicated region
  $region38: #{block_forward.4} parent=0 // pred_check
    _
  $region39: #{block_forward.4} parent=0 // pred_check_branch
    %424 = sbr.rel (0) target = $region41
  $region40: #{block_forward.4} parent=0 // pred_region
    _
  $region41: #{block_forward.4} parent=0 // pred_fallthru
    _
  // Predicated region
  $region42: #{block_forward.4} parent=0 // pred_check
    _
  $region43: #{block_forward.4} parent=0 // pred_check_branch
    %426 = sbr.rel (0) target = $region45
  $region44: #{block_forward.4} parent=0 // pred_region
    _
  $region45: #{block_forward.4} parent=0 // pred_fallthru
    _
  // Predicated region
  $region46: #{block_forward.4} parent=0 // pred_check
    _
  $region47: #{block_forward.4} parent=0 // pred_check_branch
    %428 = sbr.rel (0) target = $region49
  $region48: #{block_forward.4} parent=0 // pred_region
    _
  $region49: #{block_forward.4} parent=0 // pred_fallthru
    _
  // Predicated region
  $region50: #{block_forward.4} parent=0 // pred_check
    _
  $region51: #{block_forward.4} parent=0 // pred_check_branch
    %430 = sbr.rel (0) target = $region53
  $region52: #{block_forward.4} parent=0 // pred_region
    _
  $region53: #{block_forward.4} parent=0 // pred_fallthru
    _
  // Predicated region
  $region54: #{block_forward.4} parent=0 // pred_check
    _
  $region55: #{block_forward.4} parent=0 // pred_check_branch
    %432 = sbr.rel (0) target = $region57
  $region56: #{block_forward.4} parent=0 // pred_region
    _
  $region57: #{block_forward.4} parent=0 // pred_fallthru
    _
  // Predicated region
  $region58: #{block_forward.4} parent=0 // pred_check
    _
  $region59: #{block_forward.4} parent=0 // pred_check_branch
    %434 = sbr.rel (0) target = $region61
  $region60: #{block_forward.4} parent=0 // pred_region
    _
  $region61: #{block_forward.4} parent=0 // pred_fallthru
    _

// kernel: block_forward.7
$region0: #{block_forward.7}
  #allocation0 [shape = 'u32[]', space=smem, size = 0x4, offset = 0x4, fixed_abs, tag = 'smem constant byte address 0x4 - core index']
  #allocation1 [shape = 'u32[72,128]{1,0:T(1,128)}', space=vmem, size = 0x9000, scoped, tag = 'internal scratch']
  %s0 = inlined_call_operand.vmem [shape: f32[32,128], index: 0, kind: input, shape index: {}]
  %s1 = inlined_call_operand.vmem [shape: f32[1,128], index: 1, kind: input, shape index: {}]
  %s2 = inlined_call_operand.vmem [shape: f32[1,128], index: 2, kind: input, shape index: {}]
  %s3 = inlined_call_operand.vmem [shape: f32[32,128], index: 3, kind: input, shape index: {}]
  %s4 = inlined_call_operand.vmem [shape: f32[1,128], index: 4, kind: input, shape index: {}]
  %s5 = inlined_call_operand.vmem [shape: f32[1,128], index: 5, kind: input, shape index: {}]
  %s6 = inlined_call_operand.vmem [shape: f32[32,128], index: 6, kind: output, shape index: {}]
  %s7 = sld [smem:[#allocation0]]
  $region34: #{block_forward.7} parent=0
    _
  %s9 = ssub.s32 1, %s7
  %s10 = scalar_select 0, %s9, %s7
  // Predicated region
  $region2: #{block_forward.7} parent=0 // pred_check
    _
  $region3: #{block_forward.7} parent=0 // pred_check_branch
    %12 = sbr.rel (0) target = $region5
  $region4: #{block_forward.7} parent=0 // pred_region
    _
  $region5: #{block_forward.7} parent=0 // pred_fallthru
    _
  // Predicated region
  $region6: #{block_forward.7} parent=0 // pred_check
    _
  $region7: #{block_forward.7} parent=0 // pred_check_branch
    %14 = sbr.rel (0) target = $region9
  $region8: #{block_forward.7} parent=0 // pred_region
    _
  $region9: #{block_forward.7} parent=0 // pred_fallthru
    _
  // Predicated region
  $region10: #{block_forward.7} parent=0 // pred_check
    _
  $region11: #{block_forward.7} parent=0 // pred_check_branch
    %16 = sbr.rel (0) target = $region13
  $region12: #{block_forward.7} parent=0 // pred_region
    _
  $region13: #{block_forward.7} parent=0 // pred_fallthru
    _
  // Predicated region
  $region14: #{block_forward.7} parent=0 // pred_check
    _
  $region15: #{block_forward.7} parent=0 // pred_check_branch
    %18 = sbr.rel (0) target = $region17
  $region16: #{block_forward.7} parent=0 // pred_region
    _
  $region17: #{block_forward.7} parent=0 // pred_fallthru
    _
  // Predicated region
  $region18: #{block_forward.7} parent=0 // pred_check
    _
  $region19: #{block_forward.7} parent=0 // pred_check_branch
    %20 = sbr.rel (0) target = $region21
  $region20: #{block_forward.7} parent=0 // pred_region
    _
  $region21: #{block_forward.7} parent=0 // pred_fallthru
    _
  // Predicated region
  $region22: #{block_forward.7} parent=0 // pred_check
    _
  $region23: #{block_forward.7} parent=0 // pred_check_branch
    %22 = sbr.rel (0) target = $region25
  $region24: #{block_forward.7} parent=0 // pred_region
    _
  $region25: #{block_forward.7} parent=0 // pred_fallthru
    _
  %v23 = vld [vmem:[%s0] sm:$0xff]
  %v24 = vld [vmem:[%s0 + $0x8] sm:$0xff]
  %v25 = vld [vmem:[%s0 + $0x10] sm:$0xff]
  %v26 = vld [vmem:[%s0 + $0x18] sm:$0xff]
  %v27 = vld [vmem:[%s1] sm:$0x1]
  %v29 = vperm.slane %v27, 0
  %v31 = vmul.f32 %v23, %v29
  %v32 = vmul.f32 %v24, %v29
  %v33 = vmul.f32 %v25, %v29
  %v34 = vmul.f32 %v26, %v29
  %v35 = vld [vmem:[%s2] sm:$0x1]
  %v37 = vperm.slane %v35, 0
  %v39 = vadd.f32 %v31, %v37
  %v40 = vadd.f32 %v32, %v37
  %v41 = vadd.f32 %v33, %v37
  %v42 = vadd.f32 %v34, %v37
  %v43 = vld [vmem:[%s3] sm:$0xff]
  %v44 = vld [vmem:[%s3 + $0x8] sm:$0xff]
  %v45 = vld [vmem:[%s3 + $0x10] sm:$0xff]
  %v46 = vld [vmem:[%s3 + $0x18] sm:$0xff]
  %v47 = vld [vmem:[%s4] sm:$0x1]
  %v49 = vperm.slane %v47, 0
  %v51 = vmul.f32 %v43, %v49
  %v52 = vmul.f32 %v44, %v49
  %v53 = vmul.f32 %v45, %v49
  %v54 = vmul.f32 %v46, %v49
  %v55 = vadd.f32 %v39, %v51
  %v56 = vadd.f32 %v40, %v52
  %v57 = vadd.f32 %v41, %v53
  %v58 = vadd.f32 %v42, %v54
  %v59 = vld [vmem:[%s5] sm:$0x1]
  %v61 = vperm.slane %v59, 0
  %v63 = vadd.f32 %v55, %v61
  %v64 = vadd.f32 %v56, %v61
  %v65 = vadd.f32 %v57, %v61
  %v66 = vadd.f32 %v58, %v61
  %67 = vst [vmem:[%s6] sm:$0xff] %v63
  %68 = vst [vmem:[%s6 + $0x8] sm:$0xff] %v64
  %69 = vst [vmem:[%s6 + $0x10] sm:$0xff] %v65
  %70 = vst [vmem:[%s6 + $0x18] sm:$0xff] %v66
  // Predicated region
  $region26: #{block_forward.7} parent=0 // pred_check
    _
  $region27: #{block_forward.7} parent=0 // pred_check_branch
    %72 = sbr.rel (0) target = $region29
  $region28: #{block_forward.7} parent=0 // pred_region
    _
  $region29: #{block_forward.7} parent=0 // pred_fallthru
    _
  // Predicated region
  $region30: #{block_forward.7} parent=0 // pred_check
    _
  $region31: #{block_forward.7} parent=0 // pred_check_branch
    %74 = sbr.rel (0) target = $region33
  $region32: #{block_forward.7} parent=0 // pred_region
    _
  $region33: #{block_forward.7} parent=0 // pred_fallthru
    _

// kernel: block_forward.6
$region0: #{block_forward.6}
  #allocation0 [shape = 'u32[]', space=smem, size = 0x4, offset = 0x4, fixed_abs, tag = 'smem constant byte address 0x4 - core index']
  #allocation1 [shape = 'u32[72,128]{1,0:T(1,128)}', space=vmem, size = 0x9000, scoped, tag = 'internal scratch']
  %s0 = inlined_call_operand.vmem [shape: f32[32,384], index: 0, kind: input, shape index: {}]
  %s1 = inlined_call_operand.vmem [shape: f32[1,384], index: 1, kind: input, shape index: {}]
  %s2 = inlined_call_operand.vmem [shape: f32[1,384], index: 2, kind: input, shape index: {}]
  %s3 = inlined_call_operand.vmem [shape: f32[384,128], index: 3, kind: input, shape index: {}]
  %s4 = inlined_call_operand.vmem [shape: f32[32,128], index: 4, kind: output, shape index: {0}]
  %s5 = inlined_call_operand.vmem [shape: f32[1,128], index: 5, kind: output, shape index: {1}]
  %s6 = inlined_call_operand.vmem [shape: f32[1,128], index: 6, kind: output, shape index: {2}]
  %7 = xla_tuple %s4, %s5, %s6
  %s8 = sld [smem:[#allocation0]]
  $region46: #{block_forward.6} parent=0
    _
  %s10 = ssub.s32 1, %s8
  %s11 = scalar_select 0, %s10, %s8
  // Predicated region
  $region2: #{block_forward.6} parent=0 // pred_check
    _
  $region3: #{block_forward.6} parent=0 // pred_check_branch
    %13 = sbr.rel (0) target = $region5
  $region4: #{block_forward.6} parent=0 // pred_region
    _
  $region5: #{block_forward.6} parent=0 // pred_fallthru
    _
  // Predicated region
  $region6: #{block_forward.6} parent=0 // pred_check
    _
  $region7: #{block_forward.6} parent=0 // pred_check_branch
    %15 = sbr.rel (0) target = $region9
  $region8: #{block_forward.6} parent=0 // pred_region
    _
  $region9: #{block_forward.6} parent=0 // pred_fallthru
    _
  // Predicated region
  $region10: #{block_forward.6} parent=0 // pred_check
    _
  $region11: #{block_forward.6} parent=0 // pred_check_branch
    %17 = sbr.rel (0) target = $region13
  $region12: #{block_forward.6} parent=0 // pred_region
    _
  $region13: #{block_forward.6} parent=0 // pred_fallthru
    _
  // Predicated region
  $region14: #{block_forward.6} parent=0 // pred_check
    _
  $region15: #{block_forward.6} parent=0 // pred_check_branch
    %19 = sbr.rel (0) target = $region17
  $region16: #{block_forward.6} parent=0 // pred_region
    _
  $region17: #{block_forward.6} parent=0 // pred_fallthru
    _
  %p20 = scmp.eq.s32.totalorder 0, 0
  // Predicated region
  $region18: #{block_forward.6} parent=0 // pred_check
    %p21 = pneg %p20
  $region19: #{block_forward.6} parent=0 // pred_check_branch
    %23 = sbr.rel (%p21) target = $region21
  $region20: #{block_forward.6} parent=0 // pred_region
    %24 = vst [vmem:[%s5] sm:$0x1] 0.0
    %25 = vst [vmem:[%s6] sm:$0x1] 0.0
  $region21: #{block_forward.6} parent=0 // pred_fallthru
    _
  %v26 = vld [vmem:[%s0] sm:$0xff]
  %v27 = vld [vmem:[%s0 + $0x8] sm:$0xff]
  %v28 = vld [vmem:[%s0 + $0x10] sm:$0xff]
  %v29 = vld [vmem:[%s0 + $0x18] sm:$0xff]
  %v30 = vld [vmem:[%s0 + $0x20] sm:$0xff]
  %v31 = vld [vmem:[%s0 + $0x28] sm:$0xff]
  %v32 = vld [vmem:[%s0 + $0x30] sm:$0xff]
  %v33 = vld [vmem:[%s0 + $0x38] sm:$0xff]
  %v34 = vld [vmem:[%s0 + $0x40] sm:$0xff]
  %v35 = vld [vmem:[%s0 + $0x48] sm:$0xff]
  %v36 = vld [vmem:[%s0 + $0x50] sm:$0xff]
  %v37 = vld [vmem:[%s0 + $0x58] sm:$0xff]
  %v38 = vld [vmem:[%s1] sm:$0x7]
  %v40 = vperm.slane %v38, 0
  %v41 = vperm.slane %v38, 1
  %v42 = vperm.slane %v38, 2
  %v46 = vmul.f32 %v26, %v40
  %v47 = vmul.f32 %v27, %v41
  %v48 = vmul.f32 %v28, %v42
  %v49 = vmul.f32 %v29, %v40
  %v50 = vmul.f32 %v30, %v41
  %v51 = vmul.f32 %v31, %v42
  %v52 = vmul.f32 %v32, %v40
  %v53 = vmul.f32 %v33, %v41
  %v54 = vmul.f32 %v34, %v42
  %v55 = vmul.f32 %v35, %v40
  %v56 = vmul.f32 %v36, %v41
  %v57 = vmul.f32 %v37, %v42
  %v58 = vld [vmem:[%s2] sm:$0x7]
  %v60 = vperm.slane %v58, 0
  %v61 = vperm.slane %v58, 1
  %v62 = vperm.slane %v58, 2
  %v66 = vadd.f32 %v46, %v60
  %v67 = vadd.f32 %v47, %v61
  %v68 = vadd.f32 %v48, %v62
  %v69 = vadd.f32 %v49, %v60
  %v70 = vadd.f32 %v50, %v61
  %v71 = vadd.f32 %v51, %v62
  %v72 = vadd.f32 %v52, %v60
  %v73 = vadd.f32 %v53, %v61
  %v74 = vadd.f32 %v54, %v62
  %v75 = vadd.f32 %v55, %v60
  %v76 = vadd.f32 %v56, %v61
  %v77 = vadd.f32 %v57, %v62
  %v78 = vmax.f32 %v66, 0.0
  %v79 = vmax.f32 %v67, 0.0
  %v80 = vmax.f32 %v68, 0.0
  %v81 = vmax.f32 %v69, 0.0
  %v82 = vmax.f32 %v70, 0.0
  %v83 = vmax.f32 %v71, 0.0
  %v84 = vmax.f32 %v72, 0.0
  %v85 = vmax.f32 %v73, 0.0
  %v86 = vmax.f32 %v74, 0.0
  %v87 = vmax.f32 %v75, 0.0
  %v88 = vmax.f32 %v76, 0.0
  %v89 = vmax.f32 %v77, 0.0
  %v90 = vld [vmem:[%s3] sm:$0xff]
  %v91 = vld [vmem:[%s3 + $0x8] sm:$0xff]
  %v92 = vld [vmem:[%s3 + $0x10] sm:$0xff]
  %v93 = vld [vmem:[%s3 + $0x18] sm:$0xff]
  %v94 = vld [vmem:[%s3 + $0x20] sm:$0xff]
  %v95 = vld [vmem:[%s3 + $0x28] sm:$0xff]
  %v96 = vld [vmem:[%s3 + $0x30] sm:$0xff]
  %v97 = vld [vmem:[%s3 + $0x38] sm:$0xff]
  %v98 = vld [vmem:[%s3 + $0x40] sm:$0xff]
  %v99 = vld [vmem:[%s3 + $0x48] sm:$0xff]
  %v100 = vld [vmem:[%s3 + $0x50] sm:$0xff]
  %v101 = vld [vmem:[%s3 + $0x58] sm:$0xff]
  %v102 = vld [vmem:[%s3 + $0x60] sm:$0xff]
  %v103 = vld [vmem:[%s3 + $0x68] sm:$0xff]
  %v104 = vld [vmem:[%s3 + $0x70] sm:$0xff]
  %v105 = vld [vmem:[%s3 + $0x78] sm:$0xff]
  %v106 = vld [vmem:[%s3 + $0x80] sm:$0xff]
  %v107 = vld [vmem:[%s3 + $0x88] sm:$0xff]
  %v108 = vld [vmem:[%s3 + $0x90] sm:$0xff]
  %v109 = vld [vmem:[%s3 + $0x98] sm:$0xff]
  %v110 = vld [vmem:[%s3 + $0xa0] sm:$0xff]
  %v111 = vld [vmem:[%s3 + $0xa8] sm:$0xff]
  %v112 = vld [vmem:[%s3 + $0xb0] sm:$0xff]
  %v113 = vld [vmem:[%s3 + $0xb8] sm:$0xff]
  %v114 = vld [vmem:[%s3 + $0xc0] sm:$0xff]
  %v115 = vld [vmem:[%s3 + $0xc8] sm:$0xff]
  %v116 = vld [vmem:[%s3 + $0xd0] sm:$0xff]
  %v117 = vld [vmem:[%s3 + $0xd8] sm:$0xff]
  %v118 = vld [vmem:[%s3 + $0xe0] sm:$0xff]
  %v119 = vld [vmem:[%s3 + $0xe8] sm:$0xff]
  %v120 = vld [vmem:[%s3 + $0xf0] sm:$0xff]
  %v121 = vld [vmem:[%s3 + $0xf8] sm:$0xff]
  %v122 = vld [vmem:[%s3 + $0x100] sm:$0xff]
  %v123 = vld [vmem:[%s3 + $0x108] sm:$0xff]
  %v124 = vld [vmem:[%s3 + $0x110] sm:$0xff]
  %v125 = vld [vmem:[%s3 + $0x118] sm:$0xff]
  %v126 = vld [vmem:[%s3 + $0x120] sm:$0xff]
  %v127 = vld [vmem:[%s3 + $0x128] sm:$0xff]
  %v128 = vld [vmem:[%s3 + $0x130] sm:$0xff]
  %v129 = vld [vmem:[%s3 + $0x138] sm:$0xff]
  %v130 = vld [vmem:[%s3 + $0x140] sm:$0xff]
  %v131 = vld [vmem:[%s3 + $0x148] sm:$0xff]
  %v132 = vld [vmem:[%s3 + $0x150] sm:$0xff]
  %v133 = vld [vmem:[%s3 + $0x158] sm:$0xff]
  %v134 = vld [vmem:[%s3 + $0x160] sm:$0xff]
  %v135 = vld [vmem:[%s3 + $0x168] sm:$0xff]
  %v136 = vld [vmem:[%s3 + $0x170] sm:$0xff]
  %v137 = vld [vmem:[%s3 + $0x178] sm:$0xff]
  %138 = vmatpush.msra.mxu0 %v105
  %139 = vmatpush.msra.mxu0 %v104
  %140 = vmatpush.msra.mxu0 %v103
  %141 = vmatpush.msra.mxu0 %v102
  %142 = vmatpush.msra.mxu0 %v101
  %143 = vmatpush.msra.mxu0 %v100
  %144 = vmatpush.msra.mxu0 %v99
  %145 = vmatpush.msra.mxu0 %v98
  %146 = vmatpush.msra.mxu0 %v97
  %147 = vmatpush.msra.mxu0 %v96
  %148 = vmatpush.msra.mxu0 %v95
  %149 = vmatpush.msra.mxu0 %v94
  %150 = vmatpush.msra.mxu0 %v93
  %151 = vmatpush.msra.mxu0 %v92
  %152 = vmatpush.msra.mxu0 %v91
  %153 = vmatpush.msra.mxu0 %v90
  %154 = vmatmul.f32.gmra.mxu0 %v78
  %v155 = vpop.f32.mrf.mxu0
  %v156 = vadd.f32 0.0, %v155
  %157 = vmatmul.f32.gmra.mxu0 %v81
  %v158 = vpop.f32.mrf.mxu0
  %v159 = vadd.f32 0.0, %v158
  %160 = vmatmul.f32.gmra.mxu0 %v84
  %v161 = vpop.f32.mrf.mxu0
  %v162 = vadd.f32 0.0, %v161
  %163 = vmatmul.f32.gmra.mxu0 %v87
  %v164 = vpop.f32.mrf.mxu0
  %v165 = vadd.f32 0.0, %v164
  %166 = vdwg.mxu0
  %167 = vmatpush.msra.mxu0 %v121
  %168 = vmatpush.msra.mxu0 %v120
  %169 = vmatpush.msra.mxu0 %v119
  %170 = vmatpush.msra.mxu0 %v118
  %171 = vmatpush.msra.mxu0 %v117
  %172 = vmatpush.msra.mxu0 %v116
  %173 = vmatpush.msra.mxu0 %v115
  %174 = vmatpush.msra.mxu0 %v114
  %175 = vmatpush.msra.mxu0 %v113
  %176 = vmatpush.msra.mxu0 %v112
  %177 = vmatpush.msra.mxu0 %v111
  %178 = vmatpush.msra.mxu0 %v110
  %179 = vmatpush.msra.mxu0 %v109
  %180 = vmatpush.msra.mxu0 %v108
  %181 = vmatpush.msra.mxu0 %v107
  %182 = vmatpush.msra.mxu0 %v106
  %183 = vmatmul.f32.gmra.mxu0 %v79
  %v184 = vpop.f32.mrf.mxu0
  %v185 = vadd.f32 %v156, %v184
  %186 = vmatmul.f32.gmra.mxu0 %v82
  %v187 = vpop.f32.mrf.mxu0
  %v188 = vadd.f32 %v159, %v187
  %189 = vmatmul.f32.gmra.mxu0 %v85
  %v190 = vpop.f32.mrf.mxu0
  %v191 = vadd.f32 %v162, %v190
  %192 = vmatmul.f32.gmra.mxu0 %v88
  %v193 = vpop.f32.mrf.mxu0
  %v194 = vadd.f32 %v165, %v193
  %195 = vdwg.mxu0
  %196 = vmatpush.msra.mxu0 %v137
  %197 = vmatpush.msra.mxu0 %v136
  %198 = vmatpush.msra.mxu0 %v135
  %199 = vmatpush.msra.mxu0 %v134
  %200 = vmatpush.msra.mxu0 %v133
  %201 = vmatpush.msra.mxu0 %v132
  %202 = vmatpush.msra.mxu0 %v131
  %203 = vmatpush.msra.mxu0 %v130
  %204 = vmatpush.msra.mxu0 %v129
  %205 = vmatpush.msra.mxu0 %v128
  %206 = vmatpush.msra.mxu0 %v127
  %207 = vmatpush.msra.mxu0 %v126
  %208 = vmatpush.msra.mxu0 %v125
  %209 = vmatpush.msra.mxu0 %v124
  %210 = vmatpush.msra.mxu0 %v123
  %211 = vmatpush.msra.mxu0 %v122
  %212 = vmatmul.f32.gmra.mxu0 %v80
  %v213 = vpop.f32.mrf.mxu0
  %v214 = vadd.f32 %v185, %v213
  %215 = vmatmul.f32.gmra.mxu0 %v83
  %v216 = vpop.f32.mrf.mxu0
  %v217 = vadd.f32 %v188, %v216
  %218 = vmatmul.f32.gmra.mxu0 %v86
  %v219 = vpop.f32.mrf.mxu0
  %v220 = vadd.f32 %v191, %v219
  %221 = vmatmul.f32.gmra.mxu0 %v89
  %v222 = vpop.f32.mrf.mxu0
  %v223 = vadd.f32 %v194, %v222
  %224 = vdwg.mxu0
  %225 = vst [vmem:[%s4] sm:$0xff] %v214
  %226 = vst [vmem:[%s4 + $0x8] sm:$0xff] %v217
  %227 = vst [vmem:[%s4 + $0x10] sm:$0xff] %v220
  %228 = vst [vmem:[%s4 + $0x18] sm:$0xff] %v223
  %v229 = vld [vmem:[%s5] sm:$0x1]
  %v230 = vadd.f32 %v214, %v217
  %v231 = vadd.f32 %v230, %v220
  %v232 = vadd.f32 %v231, %v223
  %v233 = vrot.slane %v232, 4
  %v234 = vadd.f32 %v232, %v233
  %v235 = vrot.slane %v234, 2
  %v236 = vadd.f32 %v234, %v235
  %v237 = vrot.slane %v236, 1
  %v238 = vadd.f32 %v236, %v237
  %v239 = vadd.f32 %v229, %v238
  %240 = vst [vmem:[%s5] sm:$0x1] %v239
  %v241 = vld [vmem:[%s6] sm:$0x1]
  %v242 = vmul.f32 %v214, %v214
  %v243 = vmul.f32 %v217, %v217
  %v244 = vmul.f32 %v220, %v220
  %v245 = vmul.f32 %v223, %v223
  %v246 = vadd.f32 %v242, %v243
  %v247 = vadd.f32 %v246, %v244
  %v248 = vadd.f32 %v247, %v245
  %v249 = vrot.slane %v248, 4
  %v250 = vadd.f32 %v248, %v249
  %v251 = vrot.slane %v250, 2
  %v252 = vadd.f32 %v250, %v251
  %v253 = vrot.slane %v252, 1
  %v254 = vadd.f32 %v252, %v253
  %v255 = vadd.f32 %v241, %v254
  %256 = vst [vmem:[%s6] sm:$0x1] %v255
  // Predicated region
  $region22: #{block_forward.6} parent=0 // pred_check
    _
  $region23: #{block_forward.6} parent=0 // pred_check_branch
    %258 = sbr.rel (0) target = $region25
  $region24: #{block_forward.6} parent=0 // pred_region
    _
  $region25: #{block_forward.6} parent=0 // pred_fallthru
    _
  // Predicated region
  $region26: #{block_forward.6} parent=0 // pred_check
    _
  $region27: #{block_forward.6} parent=0 // pred_check_branch
    %260 = sbr.rel (0) target = $region29
  $region28: #{block_forward.6} parent=0 // pred_region
    _
  $region29: #{block_forward.6} parent=0 // pred_fallthru
    _
  // Predicated region
  $region30: #{block_forward.6} parent=0 // pred_check
    _
  $region31: #{block_forward.6} parent=0 // pred_check_branch
    %262 = sbr.rel (0) target = $region33
  $region32: #{block_forward.6} parent=0 // pred_region
    _
  $region33: #{block_forward.6} parent=0 // pred_fallthru
    _
  // Predicated region
  $region34: #{block_forward.6} parent=0 // pred_check
    _
  $region35: #{block_forward.6} parent=0 // pred_check_branch
    %264 = sbr.rel (0) target = $region37
  $region36: #{block_forward.6} parent=0 // pred_region
    _
  $region37: #{block_forward.6} parent=0 // pred_fallthru
    _
  // Predicated region
  $region38: #{block_forward.6} parent=0 // pred_check
    _
  $region39: #{block_forward.6} parent=0 // pred_check_branch
    %266 = sbr.rel (0) target = $region41
  $region40: #{block_forward.6} parent=0 // pred_region
    _
  $region41: #{block_forward.6} parent=0 // pred_fallthru
    _
  // Predicated region
  $region42: #{block_forward.6} parent=0 // pred_check
    _
  $region43: #{block_forward.6} parent=0 // pred_check_branch
    %268 = sbr.rel (0) target = $region45
  $region44: #{block_forward.6} parent=0 // pred_region
    _
  $region45: #{block_forward.6} parent=0 // pred_fallthru
    _

// kernel: block_forward.5
$region0: #{block_forward.5}
  #allocation0 [shape = 'u32[]', space=smem, size = 0x4, offset = 0x4, fixed_abs, tag = 'smem constant byte address 0x4 - core index']
  #allocation1 [shape = 'u32[72,128]{1,0:T(1,128)}', space=vmem, size = 0x9000, scoped, tag = 'internal scratch']
  #allocation2 [shape = 'f32[18,432]{1,0:T(8,128)}', space=vmem, size = 0xc000, scoped, tag = 'scratch operand']
  %s0 = inlined_call_operand.vmem [shape: f32[2,16,432], index: 0, kind: input, shape index: {}]
  %s1 = inlined_call_operand.vmem [shape: f32[1,432], index: 1, kind: input, shape index: {}]
  %s2 = inlined_call_operand.vmem [shape: f32[1,432], index: 2, kind: input, shape index: {}]
  %s3 = inlined_call_operand.vmem [shape: f32[9,384], index: 3, kind: input, shape index: {}]
  %s4 = inlined_call_operand.vmem [shape: f32[2,16,384], index: 4, kind: output, shape index: {0}]
  %s5 = inlined_call_operand.vmem [shape: f32[1,384], index: 5, kind: output, shape index: {1}]
  %s6 = inlined_call_operand.vmem [shape: f32[1,384], index: 6, kind: output, shape index: {2}]
  %7 = xla_tuple %s4, %s5, %s6
  %s8 = sld [smem:[#allocation0]]
  $region69: #{block_forward.5} parent=0
    _
  %s10 = ssub.s32 1, %s8
  %s11 = scalar_select 0, %s10, %s8
  loop: start=0, step=1, limit=4
  $region2: #{block_forward.5} parent=0 // loop_pre_header
    _
  $region3: #{block_forward.5} parent=0 // loop_header
    %s13 = sphi 0, %s17
    %p14 = scmp.ge.s32.totalorder %s13, 4
    %s23 = sphi 0, %s25
    %s26 = sphi 0, %s23
    %s27 = sphi 0, %s26
    %s43 = sphi 0, %s27
    %s47 = sphi 0, %s47
    %s49 = sphi 0, %s47
    %s50 = sphi 0, %s49
    %s64 = sphi 0, %s50
    %s68 = sphi 0, %s68
    %s70 = sphi 0, %s68
    %s71 = sphi 0, %s70
    %s85 = sphi 0, %s71
    %s89 = sphi 0, %s89
    %s91 = sphi 0, %s89
    %s92 = sphi 0, %s91
    %s106 = sphi 0, %s92
    %s112 = sphi 0, %s114
    %s115 = sphi 0, %s112
    %s116 = sphi 0, %s115
    %s132 = sphi 0, %s116
    %s136 = sphi 0, %s136
    %s138 = sphi 0, %s136
    %s139 = sphi 0, %s138
    %s153 = sphi 0, %s139
    %s157 = sphi 0, %s157
    %s159 = sphi 0, %s157
    %s160 = sphi 0, %s159
    %s174 = sphi 0, %s160
  $region4: #{block_forward.5} parent=0 // loop_header_branch
    %16 = sbr.rel (%p14) target = $region8
  $region5: #{block_forward.5} parent=0 // loop_body
    %s18 = ssub.s32 %s13, 1
    %s19 = ssub.s32 %s13, 2
    %s20 = sadd.s32 %s13, 1
    %s21 = ssub.s32 %s13, %s20
    %p22 = scmp.eq.s32.totalorder %s21, 0
    %s24 = sadd.s32 %s23, 1
    %s25 = scalar_select %p22, %s23, %s24
    %p28 = pneg %p22
    %p29 = scmp.eq.s32.totalorder %s13, 1
    %p30 = por %p28, %p29
    %p31 = scmp.ne.s32.totalorder %s23, %s26
    %p32 = scmp.eq.s32.totalorder %s13, 0
    %p33 = por %p31, %p32
    %p34 = scmp.ne.s32.totalorder %s23, %s26
    %p35 = scmp.eq.s32.totalorder %s18, 1
    %p36 = por %p34, %p35
    %p37 = scmp.ne.s32.totalorder %s26, %s27
    %p38 = scmp.eq.s32.totalorder %s18, 0
    %p39 = por %p37, %p38
    %p40 = scmp.ne.s32.totalorder %s26, %s27
    %p41 = scmp.eq.s32.totalorder %s19, 1
    %p42 = por %p40, %p41
    %p44 = scmp.ne.s32.totalorder %s27, %s43
    %p45 = scmp.eq.s32.totalorder %s19, 0
    %p46 = por %p44, %p45
    %s48 = sadd.s32 %s47, 1
    %p51 = scmp.eq.s32.totalorder %s13, 1
    %p52 = scmp.ne.s32.totalorder %s47, %s49
    %p53 = scmp.eq.s32.totalorder %s13, 0
    %p54 = por %p52, %p53
    %p55 = scmp.ne.s32.totalorder %s47, %s49
    %p56 = scmp.eq.s32.totalorder %s18, 1
    %p57 = por %p55, %p56
    %p58 = scmp.ne.s32.totalorder %s49, %s50
    %p59 = scmp.eq.s32.totalorder %s18, 0
    %p60 = por %p58, %p59
    %p61 = scmp.ne.s32.totalorder %s49, %s50
    %p62 = scmp.eq.s32.totalorder %s19, 1
    %p63 = por %p61, %p62
    %p65 = scmp.ne.s32.totalorder %s50, %s64
    %p66 = scmp.eq.s32.totalorder %s19, 0
    %p67 = por %p65, %p66
    %s69 = sadd.s32 %s68, 1
    %p72 = scmp.eq.s32.totalorder %s13, 1
    %p73 = scmp.ne.s32.totalorder %s68, %s70
    %p74 = scmp.eq.s32.totalorder %s13, 0
    %p75 = por %p73, %p74
    %p76 = scmp.ne.s32.totalorder %s68, %s70
    %p77 = scmp.eq.s32.totalorder %s18, 1
    %p78 = por %p76, %p77
    %p79 = scmp.ne.s32.totalorder %s70, %s71
    %p80 = scmp.eq.s32.totalorder %s18, 0
    %p81 = por %p79, %p80
    %p82 = scmp.ne.s32.totalorder %s70, %s71
    %p83 = scmp.eq.s32.totalorder %s19, 1
    %p84 = por %p82, %p83
    %p86 = scmp.ne.s32.totalorder %s71, %s85
    %p87 = scmp.eq.s32.totalorder %s19, 0
    %p88 = por %p86, %p87
    %s90 = sadd.s32 %s89, 1
    %p93 = scmp.eq.s32.totalorder %s13, 1
    %p94 = scmp.ne.s32.totalorder %s89, %s91
    %p95 = scmp.eq.s32.totalorder %s13, 0
    %p96 = por %p94, %p95
    %p97 = scmp.ne.s32.totalorder %s89, %s91
    %p98 = scmp.eq.s32.totalorder %s18, 1
    %p99 = por %p97, %p98
    %p100 = scmp.ne.s32.totalorder %s91, %s92
    %p101 = scmp.eq.s32.totalorder %s18, 0
    %p102 = por %p100, %p101
    %p103 = scmp.ne.s32.totalorder %s91, %s92
    %p104 = scmp.eq.s32.totalorder %s19, 1
    %p105 = por %p103, %p104
    %p107 = scmp.ne.s32.totalorder %s92, %s106
    %p108 = scmp.eq.s32.totalorder %s19, 0
    %p109 = por %p107, %p108
    %s110 = ssub.s32 %s13, %s20
    %p111 = scmp.eq.s32.totalorder %s110, 0
    %s113 = sadd.s32 %s112, 1
    %s114 = scalar_select %p111, %s112, %s113
    %p117 = pneg %p111
    %p118 = scmp.eq.s32.totalorder %s13, 1
    %p119 = por %p117, %p118
    %p120 = scmp.ne.s32.totalorder %s112, %s115
    %p121 = scmp.eq.s32.totalorder %s13, 0
    %p122 = por %p120, %p121
    %p123 = scmp.ne.s32.totalorder %s112, %s115
    %p124 = scmp.eq.s32.totalorder %s18, 1
    %p125 = por %p123, %p124
    %p126 = scmp.ne.s32.totalorder %s115, %s116
    %p127 = scmp.eq.s32.totalorder %s18, 0
    %p128 = por %p126, %p127
    %p129 = scmp.ne.s32.totalorder %s115, %s116
    %p130 = scmp.eq.s32.totalorder %s19, 1
    %p131 = por %p129, %p130
    %p133 = scmp.ne.s32.totalorder %s116, %s132
    %p134 = scmp.eq.s32.totalorder %s19, 0
    %p135 = por %p133, %p134
    %s137 = sadd.s32 %s136, 1
    %p140 = scmp.eq.s32.totalorder %s13, 1
    %p141 = scmp.ne.s32.totalorder %s136, %s138
    %p142 = scmp.eq.s32.totalorder %s13, 0
    %p143 = por %p141, %p142
    %p144 = scmp.ne.s32.totalorder %s136, %s138
    %p145 = scmp.eq.s32.totalorder %s18, 1
    %p146 = por %p144, %p145
    %p147 = scmp.ne.s32.totalorder %s138, %s139
    %p148 = scmp.eq.s32.totalorder %s18, 0
    %p149 = por %p147, %p148
    %p150 = scmp.ne.s32.totalorder %s138, %s139
    %p151 = scmp.eq.s32.totalorder %s19, 1
    %p152 = por %p150, %p151
    %p154 = scmp.ne.s32.totalorder %s139, %s153
    %p155 = scmp.eq.s32.totalorder %s19, 0
    %p156 = por %p154, %p155
    %s158 = sadd.s32 %s157, 1
    %p161 = scmp.eq.s32.totalorder %s13, 1
    %p162 = scmp.ne.s32.totalorder %s157, %s159
    %p163 = scmp.eq.s32.totalorder %s13, 0
    %p164 = por %p162, %p163
    %p165 = scmp.ne.s32.totalorder %s157, %s159
    %p166 = scmp.eq.s32.totalorder %s18, 1
    %p167 = por %p165, %p166
    %p168 = scmp.ne.s32.totalorder %s159, %s160
    %p169 = scmp.eq.s32.totalorder %s18, 0
    %p170 = por %p168, %p169
    %p171 = scmp.ne.s32.totalorder %s159, %s160
    %p172 = scmp.eq.s32.totalorder %s19, 1
    %p173 = por %p171, %p172
    %p175 = scmp.ne.s32.totalorder %s160, %s174
    %p176 = scmp.eq.s32.totalorder %s19, 0
    %p177 = por %p175, %p176
    %p178 = scmp.le.s32.totalorder 1, %s13
    %p179 = scmp.lt.s32.totalorder %s13, 3
    %p180 = pnand %p178, %p179
    %p181 = pneg %p180
    // Predicated region
    $region9: #{block_forward.5} parent=5 // pred_check
      _
    $region10: #{block_forward.5} parent=5 // pred_check_branch
      %183 = sbr.rel (%p180) target = $region12
    $region11: #{block_forward.5} parent=5 // pred_region
      %s184 = ssub.s32 %s13, 1
      // Predicated region
      $region13: #{block_forward.5} parent=11 // pred_check
        %p185 = pneg %p60
      $region14: #{block_forward.5} parent=11 // pred_check_branch
        %187 = sbr.rel (%p185) target = $region16
      $region15: #{block_forward.5} parent=11 // pred_region
        _
      $region16: #{block_forward.5} parent=11 // pred_fallthru
        _
      // Predicated region
      $region17: #{block_forward.5} parent=11 // pred_check
        %p188 = pneg %p81
      $region18: #{block_forward.5} parent=11 // pred_check_branch
        %190 = sbr.rel (%p188) target = $region20
      $region19: #{block_forward.5} parent=11 // pred_region
        _
      $region20: #{block_forward.5} parent=11 // pred_fallthru
        _
      // Predicated region
      $region21: #{block_forward.5} parent=11 // pred_check
        %p191 = pneg %p102
      $region22: #{block_forward.5} parent=11 // pred_check_branch
        %193 = sbr.rel (%p191) target = $region24
      $region23: #{block_forward.5} parent=11 // pred_region
        _
      $region24: #{block_forward.5} parent=11 // pred_fallthru
        _
    $region12: #{block_forward.5} parent=5 // pred_fallthru
      _
    %p194 = scmp.lt.s32.totalorder %s13, 2
    // Predicated region
    $region25: #{block_forward.5} parent=5 // pred_check
      %p195 = pneg %p194
    $region26: #{block_forward.5} parent=5 // pred_check_branch
      %197 = sbr.rel (%p195) target = $region28
    $region27: #{block_forward.5} parent=5 // pred_region
      // Predicated region
      $region29: #{block_forward.5} parent=27 // pred_check
        %p198 = pneg %p33
      $region30: #{block_forward.5} parent=27 // pred_check_branch
        %200 = sbr.rel (%p198) target = $region32
      $region31: #{block_forward.5} parent=27 // pred_region
        %p201 = scmp.lt.s32.totalorder %s13, 1
        %s202 = scalar_select %p201, %s13, 1
        %s203 = smul.addr %s202, 8
        %s204 = smul.addr %s203, 8
        %s205 = scalar_lea.vmem %s0, %s204
      $region32: #{block_forward.5} parent=27 // pred_fallthru
        _
    $region28: #{block_forward.5} parent=5 // pred_fallthru
      _
    %p206 = scmp.le.s32.totalorder 1, %s13
    %p207 = scmp.lt.s32.totalorder %s13, 3
    %p208 = pnand %p206, %p207
    %p209 = pneg %p208
    // Predicated region
    $region33: #{block_forward.5} parent=5 // pred_check
      _
    $region34: #{block_forward.5} parent=5 // pred_check_branch
      %211 = sbr.rel (%p208) target = $region36
    $region35: #{block_forward.5} parent=5 // pred_region
      %s212 = ssub.s32 %s13, 1
      %p213 = scmp.lt.s32.totalorder %s18, 1
      %s214 = scalar_select %p213, %s18, 1
      %s215 = smul.addr %s214, 8
      %s216 = smul.addr %s215, 8
      %s217 = scalar_lea.vmem %s0, %s216
      %p218 = pneg %p39
      %p219 = pneg %p36
      %p220 = pneg %p60
      %p221 = pneg %p57
      %p222 = pneg %p81
      %p223 = pneg %p78
      %p224 = pneg %p102
      %p225 = pneg %p99
      %p226 = pneg %p128
      %p227 = pneg %p125
      %p228 = scmp.lt.s32.totalorder %s18, 1
      %s229 = scalar_select %p228, %s18, 1
      %s230 = smul.addr %s229, 6
      %s231 = smul.addr %s230, 8
      %s232 = scalar_lea.vmem %s4, %s231
      %p233 = pneg %p149
      %p234 = pneg %p146
      %p235 = pneg %p170
      %p236 = pneg %p167
      %p237 = scmp.lt.s32.totalorder %s18, 1
      %s238 = scalar_select %p237, %s18, 1
      %s239 = smul.addr %s238, 8
      %s240 = smul.addr %s239, 8
      %s241 = scalar_lea.vmem %s0, %s240
      %p242 = scmp.lt.s32.totalorder %s18, 1
      %s243 = scalar_select %p242, %s18, 1
      %s244 = smul.addr %s243, 6
      %s245 = smul.addr %s244, 8
      %s246 = scalar_lea.vmem %s4, %s245
      %p247 = scmp.eq.s32.totalorder %s18, 0
      // Predicated region
      $region37: #{block_forward.5} parent=35 // pred_check
        %p248 = pneg %p247
      $region38: #{block_forward.5} parent=35 // pred_check_branch
        %250 = sbr.rel (%p248) target = $region40
      $region39: #{block_forward.5} parent=35 // pred_region
        %v251 = vlaneseq
        %vm252 = vcmp.ge.s32.totalorder %v251, 0
        %vm253 = vcmp.lt.s32.totalorder %v251, 384
        %vm254 = vmand %vm252, %vm253
        %255 = vst.msk [vmem:[%s5] sm:$0x7] %vm254, 0.0
        %256 = vst.msk [vmem:[%s6] sm:$0x7] %vm254, 0.0
      $region40: #{block_forward.5} parent=35 // pred_fallthru
        _
      %v257 = vld [vmem:[%s241] sm:$0xff]
      %v258 = vld [vmem:[%s241 + $0x8] sm:$0xff]
      %v259 = vld [vmem:[%s241 + $0x10] sm:$0xff]
      %v260 = vld [vmem:[%s241 + $0x18] sm:$0xff]
      %v261 = vld [vmem:[%s241 + $0x20] sm:$0xff]
      %v262 = vld [vmem:[%s241 + $0x28] sm:$0xff]
      %v263 = vld [vmem:[%s241 + $0x30] sm:$0xff]
      %v264 = vld [vmem:[%s241 + $0x38] sm:$0xff]
      %v265 = vld [vmem:[%s1] sm:$0xf]
      %v267 = vperm.slane %v265, 0
      %v268 = vperm.slane %v265, 1
      %v269 = vperm.slane %v265, 2
      %v270 = vperm.slane %v265, 3
      %v275 = vmul.f32 %v257, %v267
      %v276 = vmul.f32 %v258, %v268
      %v277 = vmul.f32 %v259, %v269
      %v278 = vmul.f32 %v260, %v270
      %v279 = vmul.f32 %v261, %v267
      %v280 = vmul.f32 %v262, %v268
      %v281 = vmul.f32 %v263, %v269
      %v282 = vmul.f32 %v264, %v270
      %v283 = vld [vmem:[%s2] sm:$0xf]
      %v285 = vperm.slane %v283, 0
      %v286 = vperm.slane %v283, 1
      %v287 = vperm.slane %v283, 2
      %v288 = vperm.slane %v283, 3
      %v293 = vadd.f32 %v275, %v285
      %v294 = vadd.f32 %v276, %v286
      %v295 = vadd.f32 %v277, %v287
      %v296 = vadd.f32 %v278, %v288
      %v297 = vadd.f32 %v279, %v285
      %v298 = vadd.f32 %v280, %v286
      %v299 = vadd.f32 %v281, %v287
      %v300 = vadd.f32 %v282, %v288
      %v301 = vmax.f32 %v293, 0.0
      %v302 = vmax.f32 %v294, 0.0
      %v303 = vmax.f32 %v295, 0.0
      %v304 = vmax.f32 %v296, 0.0
      %v305 = vmax.f32 %v297, 0.0
      %v306 = vmax.f32 %v298, 0.0
      %v307 = vmax.f32 %v299, 0.0
      %v308 = vmax.f32 %v300, 0.0
      %v309 = vlaneseq
      %vm310 = vcmp.ge.s32.totalorder %v309, 0
      %vm311 = vcmp.lt.s32.totalorder %v309, 432
      %vm312 = vmand %vm310, %vm311
      %313 = vst.msk [vmem:[#allocation2] ss:$8 sm:$0xf] %vm312, 0.0
      %314 = vst.msk [vmem:[#allocation2] ss:$8 sm:$0x0] %vm312, 0.0
      %s315 = scalar_lea.vmem [#allocation2], 65
      %316 = vst.msk [vmem:[%s315] ss:$8 sm:$0xf] %vm312, 0.0
      %317 = vst.msk [vmem:[%s315] ss:$8 sm:$0x0] %vm312, 0.0
      %vm326 = vcmask 1040384
      %v327 = vrot.slane %v301, 7
      %v328 = vrot.slane %v302, 7
      %v329 = vrot.slane %v303, 7
      %v330 = vrot.slane %v304, 7
      %v331 = vrot.slane %v305, 7
      %v332 = vsel %vm326, %v327, %v331
      %v333 = vrot.slane %v306, 7
      %v334 = vsel %vm326, %v328, %v333
      %v335 = vrot.slane %v307, 7
      %v336 = vsel %vm326, %v329, %v335
      %v337 = vrot.slane %v308, 7
      %v338 = vsel %vm326, %v330, %v337
      %351 = vst [vmem:[#allocation2] sm:$0xfe] %v327
      %352 = vst [vmem:[#allocation2 + $0x8] sm:$0xfe] %v328
      %353 = vst [vmem:[#allocation2 + $0x10] sm:$0xfe] %v329
      %vm354 = vcmask 392193
      %355 = vst.msk [vmem:[#allocation2 + $0x18] sm:$0xfe] %vm354, %v330
      %356 = vst [vmem:[#allocation2 + $0x20] sm:$0xff] %v332
      %357 = vst [vmem:[#allocation2 + $0x28] sm:$0xff] %v334
      %358 = vst [vmem:[#allocation2 + $0x30] sm:$0xff] %v336
      %vm359 = vcmask 392192
      %360 = vst.msk [vmem:[#allocation2 + $0x38] sm:$0xff] %vm359, %v338
      %361 = vst [vmem:[#allocation2 + $0x40] sm:$0x1] %v331
      %362 = vst [vmem:[#allocation2 + $0x48] sm:$0x1] %v333
      %363 = vst [vmem:[#allocation2 + $0x50] sm:$0x1] %v335
      %vm364 = vcmask 385024
      %365 = vst.msk [vmem:[#allocation2 + $0x58] sm:$0x1] %vm364, %v337
      %v366 = vld [vmem:[#allocation2] sm:$0xff]
      %v367 = vld [vmem:[#allocation2 + $0x8] sm:$0xff]
      %v368 = vld [vmem:[#allocation2 + $0x10] sm:$0xff]
      %v369 = vld [vmem:[#allocation2 + $0x18] sm:$0xff]
      %v370 = vld [vmem:[#allocation2 + $0x20] sm:$0xff]
      %v371 = vld [vmem:[#allocation2 + $0x28] sm:$0xff]
      %v372 = vld [vmem:[#allocation2 + $0x30] sm:$0xff]
      %v373 = vld [vmem:[#allocation2 + $0x38] sm:$0xff]
      %v374 = vld [vmem:[%s3] ss:$8 sm:$0x7]
      %v376 = vperm.slane %v374, 0
      %v377 = vperm.slane %v374, 1
      %v378 = vperm.slane %v374, 2
      %v382 = vmul.f32 %v366, %v376
      %v383 = vmul.f32 %v367, %v377
      %v384 = vmul.f32 %v368, %v378
      %v385 = vmul.f32 %v370, %v376
      %v386 = vmul.f32 %v371, %v377
      %v387 = vmul.f32 %v372, %v378
      %v388 = vadd.f32 %v382, 0.0
      %v389 = vadd.f32 %v383, 0.0
      %v390 = vadd.f32 %v384, 0.0
      %v391 = vadd.f32 %v385, 0.0
      %v392 = vadd.f32 %v386, 0.0
      %v393 = vadd.f32 %v387, 0.0
      %s394 = scalar_lea.vmem %s3, 1
      %v395 = vld [vmem:[%s394] ss:$8 sm:$0x7]
      %v397 = vperm.slane %v395, 0
      %v398 = vperm.slane %v395, 1
      %v399 = vperm.slane %v395, 2
      %400 = vrot.lane.b32.xlu0 %v397, 24
      %v401 = vpop.permute.xlu0 %400
      %402 = vrot.lane.b32.xlu0 %v398, 24
      %v403 = vpop.permute.xlu0 %402
      %404 = vrot.lane.b32.xlu0 %v399, 24
      %v405 = vpop.permute.xlu0 %404
      %vm406 = vcmask 195584
      %v407 = vsel %vm406, %v401, %v403
      %v408 = vsel %vm406, %v403, %v405
      %v413 = vmul.f32 %v366, %v401
      %v414 = vmul.f32 %v367, %v407
      %v415 = vmul.f32 %v368, %v408
      %v416 = vmul.f32 %v369, %v405
      %v417 = vmul.f32 %v370, %v401
      %v418 = vmul.f32 %v371, %v407
      %v419 = vmul.f32 %v372, %v408
      %v420 = vmul.f32 %v373, %v405
      %429 = vrot.lane.b32.xlu0 %v413, 104
      %v430 = vpop.permute.xlu0 %429
      %431 = vrot.lane.b32.xlu0 %v414, 104
      %v432 = vpop.permute.xlu0 %431
      %433 = vrot.lane.b32.xlu0 %v415, 104
      %v434 = vpop.permute.xlu0 %433
      %435 = vrot.lane.b32.xlu0 %v416, 104
      %v436 = vpop.permute.xlu0 %435
      %437 = vrot.lane.b32.xlu0 %v417, 104
      %v438 = vpop.permute.xlu0 %437
      %439 = vrot.lane.b32.xlu0 %v418, 104
      %v440 = vpop.permute.xlu0 %439
      %441 = vrot.lane.b32.xlu0 %v419, 104
      %v442 = vpop.permute.xlu0 %441
      %443 = vrot.lane.b32.xlu0 %v420, 104
      %v444 = vpop.permute.xlu0 %443
      %vm445 = vcmask 850944
      %v446 = vsel %vm445, %v430, %v432
      %v447 = vsel %vm445, %v432, %v434
      %v448 = vsel %vm445, %v434, %v436
      %v449 = vsel %vm445, %v438, %v440
      %v450 = vsel %vm445, %v440, %v442
      %v451 = vsel %vm445, %v442, %v444
      %v458 = vadd.f32 %v388, %v446
      %v459 = vadd.f32 %v389, %v447
      %v460 = vadd.f32 %v390, %v448
      %v461 = vadd.f32 %v391, %v449
      %v462 = vadd.f32 %v392, %v450
      %v463 = vadd.f32 %v393, %v451
      %s464 = scalar_lea.vmem %s3, 2
      %v465 = vld [vmem:[%s464] ss:$8 sm:$0x7]
      %v467 = vperm.slane %v465, 0
      %v468 = vperm.slane %v465, 1
      %v469 = vperm.slane %v465, 2
      %470 = vrot.lane.b32.xlu0 %v467, 48
      %v471 = vpop.permute.xlu0 %470
      %472 = vrot.lane.b32.xlu0 %v468, 48
      %v473 = vpop.permute.xlu0 %472
      %474 = vrot.lane.b32.xlu0 %v469, 48
      %v475 = vpop.permute.xlu0 %474
      %v476 = vsel %vm359, %v471, %v473
      %v477 = vsel %vm359, %v473, %v475
      %v482 = vmul.f32 %v366, %v471
      %v483 = vmul.f32 %v367, %v476
      %v484 = vmul.f32 %v368, %v477
      %v485 = vmul.f32 %v369, %v475
      %v486 = vmul.f32 %v370, %v471
      %v487 = vmul.f32 %v371, %v476
      %v488 = vmul.f32 %v372, %v477
      %v489 = vmul.f32 %v373, %v475
      %498 = vrot.lane.b32.xlu0 %v482, 80
      %v499 = vpop.permute.xlu0 %498
      %500 = vrot.lane.b32.xlu0 %v483, 80
      %v501 = vpop.permute.xlu0 %500
      %502 = vrot.lane.b32.xlu0 %v484, 80
      %v503 = vpop.permute.xlu0 %502
      %504 = vrot.lane.b32.xlu0 %v485, 80
      %v505 = vpop.permute.xlu0 %504
      %506 = vrot.lane.b32.xlu0 %v486, 80
      %v507 = vpop.permute.xlu0 %506
      %508 = vrot.lane.b32.xlu0 %v487, 80
      %v509 = vpop.permute.xlu0 %508
      %510 = vrot.lane.b32.xlu0 %v488, 80
      %v511 = vpop.permute.xlu0 %510
      %512 = vrot.lane.b32.xlu0 %v489, 80
      %v513 = vpop.permute.xlu0 %512
      %vm514 = vcmask 654336
      %v515 = vsel %vm514, %v499, %v501
      %v516 = vsel %vm514, %v501, %v503
      %v517 = vsel %vm514, %v503, %v505
      %v518 = vsel %vm514, %v507, %v509
      %v519 = vsel %vm514, %v509, %v511
      %v520 = vsel %vm514, %v511, %v513
      %v527 = vadd.f32 %v458, %v515
      %v528 = vadd.f32 %v459, %v516
      %v529 = vadd.f32 %v460, %v517
      %v530 = vadd.f32 %v461, %v518
      %v531 = vadd.f32 %v462, %v519
      %v532 = vadd.f32 %v463, %v520
      %v533 = vld [vmem:[#allocation2] sm:$0xfe]
      %v534 = vld [vmem:[#allocation2 + $0x8] sm:$0xfe]
      %v535 = vld [vmem:[#allocation2 + $0x10] sm:$0xfe]
      %v536 = vld [vmem:[#allocation2 + $0x18] sm:$0xfe]
      %v537 = vld [vmem:[#allocation2 + $0x40] sm:$0x1]
      %v538 = vld [vmem:[#allocation2 + $0x48] sm:$0x1]
      %v539 = vld [vmem:[#allocation2 + $0x50] sm:$0x1]
      %v540 = vld [vmem:[#allocation2 + $0x58] sm:$0x1]
      %s541 = scalar_lea.vmem %s3, 3
      %v542 = vld [vmem:[%s541] ss:$8 sm:$0x7]
      %v544 = vperm.slane %v542, 0
      %v545 = vperm.slane %v542, 1
      %v546 = vperm.slane %v542, 2
      %v550 = vmul.f32 %v533, %v544
      %v551 = vmul.f32 %v534, %v545
      %v552 = vmul.f32 %v535, %v546
      %v553 = vmul.f32 %v370, %v544
      %v554 = vmul.f32 %v371, %v545
      %v555 = vmul.f32 %v372, %v546
      %v556 = vmul.f32 %v537, %v544
      %v557 = vmul.f32 %v538, %v545
      %v558 = vmul.f32 %v539, %v546
      %vm568 = vcmask 1046528
      %v569 = vrot.slane %v550, 1
      %v570 = vrot.slane %v553, 1
      %v571 = vsel %vm568, %v569, %v570
      %v572 = vrot.slane %v551, 1
      %v573 = vrot.slane %v554, 1
      %v574 = vsel %vm568, %v572, %v573
      %v575 = vrot.slane %v552, 1
      %v576 = vrot.slane %v555, 1
      %v577 = vsel %vm568, %v575, %v576
      %v578 = vrot.slane %v556, 1
      %v579 = vsel %vm568, %v570, %v578
      %v580 = vrot.slane %v557, 1
      %v581 = vsel %vm568, %v573, %v580
      %v582 = vrot.slane %v558, 1
      %v583 = vsel %vm568, %v576, %v582
      %v590 = vadd.f32 %v527, %v571
      %v591 = vadd.f32 %v528, %v574
      %v592 = vadd.f32 %v529, %v577
      %v593 = vadd.f32 %v530, %v579
      %v594 = vadd.f32 %v531, %v581
      %v595 = vadd.f32 %v532, %v583
      %s596 = scalar_lea.vmem %s3, 4
      %v597 = vld [vmem:[%s596] ss:$8 sm:$0x7]
      %v599 = vperm.slane %v597, 0
      %v600 = vperm.slane %v597, 1
      %v601 = vperm.slane %v597, 2
      %602 = vrot.lane.b32.xlu0 %v599, 24
      %v603 = vpop.permute.xlu0 %602
      %604 = vrot.lane.b32.xlu0 %v600, 24
      %v605 = vpop.permute.xlu0 %604
      %606 = vrot.lane.b32.xlu0 %v601, 24
      %v607 = vpop.permute.xlu0 %606
      %v608 = vsel %vm406, %v603, %v605
      %v609 = vsel %vm406, %v605, %v607
      %v614 = vmul.f32 %v533, %v603
      %v615 = vmul.f32 %v534, %v608
      %v616 = vmul.f32 %v535, %v609
      %v617 = vmul.f32 %v536, %v607
      %v618 = vmul.f32 %v370, %v603
      %v619 = vmul.f32 %v371, %v608
      %v620 = vmul.f32 %v372, %v609
      %v621 = vmul.f32 %v373, %v607
      %v622 = vmul.f32 %v537, %v603
      %v623 = vmul.f32 %v538, %v608
      %v624 = vmul.f32 %v539, %v609
      %v625 = vmul.f32 %v540, %v607
      %v638 = vrot.slane %v614, 1
      %v639 = vrot.slane %v618, 1
      %v640 = vsel %vm568, %v638, %v639
      %v641 = vrot.slane %v615, 1
      %v642 = vrot.slane %v619, 1
      %v643 = vsel %vm568, %v641, %v642
      %v644 = vrot.slane %v616, 1
      %v645 = vrot.slane %v620, 1
      %v646 = vsel %vm568, %v644, %v645
      %v647 = vrot.slane %v617, 1
      %v648 = vrot.slane %v621, 1
      %v649 = vsel %vm568, %v647, %v648
      %v650 = vrot.slane %v622, 1
      %v651 = vsel %vm568, %v639, %v650
      %v652 = vrot.slane %v623, 1
      %v653 = vsel %vm568, %v642, %v652
      %v654 = vrot.slane %v624, 1
      %v655 = vsel %vm568, %v645, %v654
      %v656 = vrot.slane %v625, 1
      %v657 = vsel %vm568, %v648, %v656
      %658 = vrot.lane.b32.xlu0 %v640, 104
      %v659 = vpop.permute.xlu0 %658
      %660 = vrot.lane.b32.xlu0 %v643, 104
      %v661 = vpop.permute.xlu0 %660
      %662 = vrot.lane.b32.xlu0 %v646, 104
      %v663 = vpop.permute.xlu0 %662
      %664 = vrot.lane.b32.xlu0 %v649, 104
      %v665 = vpop.permute.xlu0 %664
      %666 = vrot.lane.b32.xlu0 %v651, 104
      %v667 = vpop.permute.xlu0 %666
      %668 = vrot.lane.b32.xlu0 %v653, 104
      %v669 = vpop.permute.xlu0 %668
      %670 = vrot.lane.b32.xlu0 %v655, 104
      %v671 = vpop.permute.xlu0 %670
      %672 = vrot.lane.b32.xlu0 %v657, 104
      %v673 = vpop.permute.xlu0 %672
      %v674 = vsel %vm445, %v659, %v661
      %v675 = vsel %vm445, %v661, %v663
      %v676 = vsel %vm445, %v663, %v665
      %v677 = vsel %vm445, %v667, %v669
      %v678 = vsel %vm445, %v669, %v671
      %v679 = vsel %vm445, %v671, %v673
      %v686 = vadd.f32 %v590, %v674
      %v687 = vadd.f32 %v591, %v675
      %v688 = vadd.f32 %v592, %v676
      %v689 = vadd.f32 %v593, %v677
      %v690 = vadd.f32 %v594, %v678
      %v691 = vadd.f32 %v595, %v679
      %s692 = scalar_lea.vmem %s3, 5
      %v693 = vld [vmem:[%s692] ss:$8 sm:$0x7]
      %v695 = vperm.slane %v693, 0
      %v696 = vperm.slane %v693, 1
      %v697 = vperm.slane %v693, 2
      %698 = vrot.lane.b32.xlu0 %v695, 48
      %v699 = vpop.permute.xlu0 %698
      %700 = vrot.lane.b32.xlu0 %v696, 48
      %v701 = vpop.permute.xlu0 %700
      %702 = vrot.lane.b32.xlu0 %v697, 48
      %v703 = vpop.permute.xlu0 %702
      %v704 = vsel %vm359, %v699, %v701
      %v705 = vsel %vm359, %v701, %v703
      %v710 = vmul.f32 %v533, %v699
      %v711 = vmul.f32 %v534, %v704
      %v712 = vmul.f32 %v535, %v705
      %v713 = vmul.f32 %v536, %v703
      %v714 = vmul.f32 %v370, %v699
      %v715 = vmul.f32 %v371, %v704
      %v716 = vmul.f32 %v372, %v705
      %v717 = vmul.f32 %v373, %v703
      %v718 = vmul.f32 %v537, %v699
      %v719 = vmul.f32 %v538, %v704
      %v720 = vmul.f32 %v539, %v705
      %v721 = vmul.f32 %v540, %v703
      %v734 = vrot.slane %v710, 1
      %v735 = vrot.slane %v714, 1
      %v736 = vsel %vm568, %v734, %v735
      %v737 = vrot.slane %v711, 1
      %v738 = vrot.slane %v715, 1
      %v739 = vsel %vm568, %v737, %v738
      %v740 = vrot.slane %v712, 1
      %v741 = vrot.slane %v716, 1
      %v742 = vsel %vm568, %v740, %v741
      %v743 = vrot.slane %v713, 1
      %v744 = vrot.slane %v717, 1
      %v745 = vsel %vm568, %v743, %v744
      %v746 = vrot.slane %v718, 1
      %v747 = vsel %vm568, %v735, %v746
      %v748 = vrot.slane %v719, 1
      %v749 = vsel %vm568, %v738, %v748
      %v750 = vrot.slane %v720, 1
      %v751 = vsel %vm568, %v741, %v750
      %v752 = vrot.slane %v721, 1
      %v753 = vsel %vm568, %v744, %v752
      %754 = vrot.lane.b32.xlu0 %v736, 80
      %v755 = vpop.permute.xlu0 %754
      %756 = vrot.lane.b32.xlu0 %v739, 80
      %v757 = vpop.permute.xlu0 %756
      %758 = vrot.lane.b32.xlu0 %v742, 80
      %v759 = vpop.permute.xlu0 %758
      %760 = vrot.lane.b32.xlu0 %v745, 80
      %v761 = vpop.permute.xlu0 %760
      %762 = vrot.lane.b32.xlu0 %v747, 80
      %v763 = vpop.permute.xlu0 %762
      %764 = vrot.lane.b32.xlu0 %v749, 80
      %v765 = vpop.permute.xlu0 %764
      %766 = vrot.lane.b32.xlu0 %v751, 80
      %v767 = vpop.permute.xlu0 %766
      %768 = vrot.lane.b32.xlu0 %v753, 80
      %v769 = vpop.permute.xlu0 %768
      %v770 = vsel %vm514, %v755, %v757
      %v771 = vsel %vm514, %v757, %v759
      %v772 = vsel %vm514, %v759, %v761
      %v773 = vsel %vm514, %v763, %v765
      %v774 = vsel %vm514, %v765, %v767
      %v775 = vsel %vm514, %v767, %v769
      %v782 = vadd.f32 %v686, %v770
      %v783 = vadd.f32 %v687, %v771
      %v784 = vadd.f32 %v688, %v772
      %v785 = vadd.f32 %v689, %v773
      %v786 = vadd.f32 %v690, %v774
      %v787 = vadd.f32 %v691, %v775
      %v788 = vld [vmem:[#allocation2] sm:$0xfc]
      %v789 = vld [vmem:[#allocation2 + $0x8] sm:$0xfc]
      %v790 = vld [vmem:[#allocation2 + $0x10] sm:$0xfc]
      %v791 = vld [vmem:[#allocation2 + $0x18] sm:$0xfc]
      %v792 = vld [vmem:[#allocation2 + $0x40] sm:$0x3]
      %v793 = vld [vmem:[#allocation2 + $0x48] sm:$0x3]
      %v794 = vld [vmem:[#allocation2 + $0x50] sm:$0x3]
      %v795 = vld [vmem:[#allocation2 + $0x58] sm:$0x3]
      %s796 = scalar_lea.vmem %s3, 6
      %v797 = vld [vmem:[%s796] ss:$8 sm:$0x7]
      %v799 = vperm.slane %v797, 0
      %v800 = vperm.slane %v797, 1
      %v801 = vperm.slane %v797, 2
      %v805 = vmul.f32 %v788, %v799
      %v806 = vmul.f32 %v789, %v800
      %v807 = vmul.f32 %v790, %v801
      %v808 = vmul.f32 %v370, %v799
      %v809 = vmul.f32 %v371, %v800
      %v810 = vmul.f32 %v372, %v801
      %v811 = vmul.f32 %v792, %v799
      %v812 = vmul.f32 %v793, %v800
      %v813 = vmul.f32 %v794, %v801
      %vm823 = vcmask 1045504
      %v824 = vrot.slane %v805, 2
      %v825 = vrot.slane %v808, 2
      %v826 = vsel %vm823, %v824, %v825
      %v827 = vrot.slane %v806, 2
      %v828 = vrot.slane %v809, 2
      %v829 = vsel %vm823, %v827, %v828
      %v830 = vrot.slane %v807, 2
      %v831 = vrot.slane %v810, 2
      %v832 = vsel %vm823, %v830, %v831
      %v833 = vrot.slane %v811, 2
      %v834 = vsel %vm823, %v825, %v833
      %v835 = vrot.slane %v812, 2
      %v836 = vsel %vm823, %v828, %v835
      %v837 = vrot.slane %v813, 2
      %v838 = vsel %vm823, %v831, %v837
      %v845 = vadd.f32 %v782, %v826
      %v846 = vadd.f32 %v783, %v829
      %v847 = vadd.f32 %v784, %v832
      %v848 = vadd.f32 %v785, %v834
      %v849 = vadd.f32 %v786, %v836
      %v850 = vadd.f32 %v787, %v838
      %s851 = scalar_lea.vmem %s3, 7
      %v852 = vld [vmem:[%s851] ss:$8 sm:$0x7]
      %v854 = vperm.slane %v852, 0
      %v855 = vperm.slane %v852, 1
      %v856 = vperm.slane %v852, 2
      %857 = vrot.lane.b32.xlu0 %v854, 24
      %v858 = vpop.permute.xlu0 %857
      %859 = vrot.lane.b32.xlu0 %v855, 24
      %v860 = vpop.permute.xlu0 %859
      %861 = vrot.lane.b32.xlu0 %v856, 24
      %v862 = vpop.permute.xlu0 %861
      %v863 = vsel %vm406, %v858, %v860
      %v864 = vsel %vm406, %v860, %v862
      %v869 = vmul.f32 %v788, %v858
      %v870 = vmul.f32 %v789, %v863
      %v871 = vmul.f32 %v790, %v864
      %v872 = vmul.f32 %v791, %v862
      %v873 = vmul.f32 %v370, %v858
      %v874 = vmul.f32 %v371, %v863
      %v875 = vmul.f32 %v372, %v864
      %v876 = vmul.f32 %v373, %v862
      %v877 = vmul.f32 %v792, %v858
      %v878 = vmul.f32 %v793, %v863
      %v879 = vmul.f32 %v794, %v864
      %v880 = vmul.f32 %v795, %v862
      %v893 = vrot.slane %v869, 2
      %v894 = vrot.slane %v873, 2
      %v895 = vsel %vm823, %v893, %v894
      %v896 = vrot.slane %v870, 2
      %v897 = vrot.slane %v874, 2
      %v898 = vsel %vm823, %v896, %v897
      %v899 = vrot.slane %v871, 2
      %v900 = vrot.slane %v875, 2
      %v901 = vsel %vm823, %v899, %v900
      %v902 = vrot.slane %v872, 2
      %v903 = vrot.slane %v876, 2
      %v904 = vsel %vm823, %v902, %v903
      %v905 = vrot.slane %v877, 2
      %v906 = vsel %vm823, %v894, %v905
      %v907 = vrot.slane %v878, 2
      %v908 = vsel %vm823, %v897, %v907
      %v909 = vrot.slane %v879, 2
      %v910 = vsel %vm823, %v900, %v909
      %v911 = vrot.slane %v880, 2
      %v912 = vsel %vm823, %v903, %v911
      %913 = vrot.lane.b32.xlu0 %v895, 104
      %v914 = vpop.permute.xlu0 %913
      %915 = vrot.lane.b32.xlu0 %v898, 104
      %v916 = vpop.permute.xlu0 %915
      %917 = vrot.lane.b32.xlu0 %v901, 104
      %v918 = vpop.permute.xlu0 %917
      %919 = vrot.lane.b32.xlu0 %v904, 104
      %v920 = vpop.permute.xlu0 %919
      %921 = vrot.lane.b32.xlu0 %v906, 104
      %v922 = vpop.permute.xlu0 %921
      %923 = vrot.lane.b32.xlu0 %v908, 104
      %v924 = vpop.permute.xlu0 %923
      %925 = vrot.lane.b32.xlu0 %v910, 104
      %v926 = vpop.permute.xlu0 %925
      %927 = vrot.lane.b32.xlu0 %v912, 104
      %v928 = vpop.permute.xlu0 %927
      %v929 = vsel %vm445, %v914, %v916
      %v930 = vsel %vm445, %v916, %v918
      %v931 = vsel %vm445, %v918, %v920
      %v932 = vsel %vm445, %v922, %v924
      %v933 = vsel %vm445, %v924, %v926
      %v934 = vsel %vm445, %v926, %v928
      %v941 = vadd.f32 %v845, %v929
      %v942 = vadd.f32 %v846, %v930
      %v943 = vadd.f32 %v847, %v931
      %v944 = vadd.f32 %v848, %v932
      %v945 = vadd.f32 %v849, %v933
      %v946 = vadd.f32 %v850, %v934
      %s947 = scalar_lea.vmem %s3, 24
      %v948 = vld [vmem:[%s947] ss:$8 sm:$0x7]
      %v950 = vperm.slane %v948, 0
      %v951 = vperm.slane %v948, 1
      %v952 = vperm.slane %v948, 2
      %953 = vrot.lane.b32.xlu0 %v950, 48
      %v954 = vpop.permute.xlu0 %953
      %955 = vrot.lane.b32.xlu0 %v951, 48
      %v956 = vpop.permute.xlu0 %955
      %957 = vrot.lane.b32.xlu0 %v952, 48
      %v958 = vpop.permute.xlu0 %957
      %v959 = vsel %vm359, %v954, %v956
      %v960 = vsel %vm359, %v956, %v958
      %v965 = vmul.f32 %v788, %v954
      %v966 = vmul.f32 %v789, %v959
      %v967 = vmul.f32 %v790, %v960
      %v968 = vmul.f32 %v791, %v958
      %v969 = vmul.f32 %v370, %v954
      %v970 = vmul.f32 %v371, %v959
      %v971 = vmul.f32 %v372, %v960
      %v972 = vmul.f32 %v373, %v958
      %v973 = vmul.f32 %v792, %v954
      %v974 = vmul.f32 %v793, %v959
      %v975 = vmul.f32 %v794, %v960
      %v976 = vmul.f32 %v795, %v958
      %v989 = vrot.slane %v965, 2
      %v990 = vrot.slane %v969, 2
      %v991 = vsel %vm823, %v989, %v990
      %v992 = vrot.slane %v966, 2
      %v993 = vrot.slane %v970, 2
      %v994 = vsel %vm823, %v992, %v993
      %v995 = vrot.slane %v967, 2
      %v996 = vrot.slane %v971, 2
      %v997 = vsel %vm823, %v995, %v996
      %v998 = vrot.slane %v968, 2
      %v999 = vrot.slane %v972, 2
      %v1000 = vsel %vm823, %v998, %v999
      %v1001 = vrot.slane %v973, 2
      %v1002 = vsel %vm823, %v990, %v1001
      %v1003 = vrot.slane %v974, 2
      %v1004 = vsel %vm823, %v993, %v1003
      %v1005 = vrot.slane %v975, 2
      %v1006 = vsel %vm823, %v996, %v1005
      %v1007 = vrot.slane %v976, 2
      %v1008 = vsel %vm823, %v999, %v1007
      %1009 = vrot.lane.b32.xlu0 %v991, 80
      %v1010 = vpop.permute.xlu0 %1009
      %1011 = vrot.lane.b32.xlu0 %v994, 80
      %v1012 = vpop.permute.xlu0 %1011
      %1013 = vrot.lane.b32.xlu0 %v997, 80
      %v1014 = vpop.permute.xlu0 %1013
      %1015 = vrot.lane.b32.xlu0 %v1000, 80
      %v1016 = vpop.permute.xlu0 %1015
      %1017 = vrot.lane.b32.xlu0 %v1002, 80
      %v1018 = vpop.permute.xlu0 %1017
      %1019 = vrot.lane.b32.xlu0 %v1004, 80
      %v1020 = vpop.permute.xlu0 %1019
      %1021 = vrot.lane.b32.xlu0 %v1006, 80
      %v1022 = vpop.permute.xlu0 %1021
      %1023 = vrot.lane.b32.xlu0 %v1008, 80
      %v1024 = vpop.permute.xlu0 %1023
      %v1025 = vsel %vm514, %v1010, %v1012
      %v1026 = vsel %vm514, %v1012, %v1014
      %v1027 = vsel %vm514, %v1014, %v1016
      %v1028 = vsel %vm514, %v1018, %v1020
      %v1029 = vsel %vm514, %v1020, %v1022
      %v1030 = vsel %vm514, %v1022, %v1024
      %v1037 = vadd.f32 %v941, %v1025
      %v1038 = vadd.f32 %v942, %v1026
      %v1039 = vadd.f32 %v943, %v1027
      %v1040 = vadd.f32 %v944, %v1028
      %v1041 = vadd.f32 %v945, %v1029
      %v1042 = vadd.f32 %v946, %v1030
      %1043 = vst [vmem:[%s246] sm:$0xff] %v1037
      %1044 = vst [vmem:[%s246 + $0x8] sm:$0xff] %v1038
      %1045 = vst [vmem:[%s246 + $0x10] sm:$0xff] %v1039
      %1046 = vst [vmem:[%s246 + $0x18] sm:$0xff] %v1040
      %1047 = vst [vmem:[%s246 + $0x20] sm:$0xff] %v1041
      %1048 = vst [vmem:[%s246 + $0x28] sm:$0xff] %v1042
      %v1049 = vld [vmem:[%s5] sm:$0x7]
      %v1050 = vadd.f32 %v1037, %v1040
      %v1051 = vrot.slane %v1050, 4
      %v1052 = vadd.f32 %v1050, %v1051
      %v1053 = vrot.slane %v1052, 2
      %v1054 = vadd.f32 %v1052, %v1053
      %v1055 = vrot.slane %v1054, 1
      %v1056 = vadd.f32 %v1054, %v1055
      %v1057 = vadd.f32 %v1038, %v1041
      %v1058 = vrot.slane %v1057, 4
      %v1059 = vadd.f32 %v1057, %v1058
      %v1060 = vrot.slane %v1059, 2
      %v1061 = vadd.f32 %v1059, %v1060
      %v1062 = vrot.slane %v1061, 1
      %v1063 = vadd.f32 %v1061, %v1062
      %v1064 = vadd.f32 %v1039, %v1042
      %v1065 = vrot.slane %v1064, 4
      %v1066 = vadd.f32 %v1064, %v1065
      %v1067 = vrot.slane %v1066, 2
      %v1068 = vadd.f32 %v1066, %v1067
      %v1069 = vrot.slane %v1068, 1
      %v1070 = vadd.f32 %v1068, %v1069
      %v1074 = vrot.slane %v1063, 7
      %v1075 = vrot.slane %v1070, 6
      %v1076 = vsel %vm326, %v1056, %v1074
      %vm1077 = vcmask 1041408
      %v1078 = vsel %vm1077, %v1076, %v1075
      %v1080 = vadd.f32 %v1049, %v1078
      %vm1081 = vcmp.lt.s32.totalorder %v309, 384
      %vm1082 = vmand %vm310, %vm1081
      %1083 = vst.msk [vmem:[%s5] sm:$0x7] %vm1082, %v1080
      %v1084 = vld [vmem:[%s6] sm:$0x7]
      %v1085 = vmul.f32 %v1037, %v1037
      %v1086 = vmul.f32 %v1038, %v1038
      %v1087 = vmul.f32 %v1039, %v1039
      %v1088 = vmul.f32 %v1040, %v1040
      %v1089 = vmul.f32 %v1041, %v1041
      %v1090 = vmul.f32 %v1042, %v1042
      %v1091 = vadd.f32 %v1085, %v1088
      %v1092 = vrot.slane %v1091, 4
      %v1093 = vadd.f32 %v1091, %v1092
      %v1094 = vrot.slane %v1093, 2
      %v1095 = vadd.f32 %v1093, %v1094
      %v1096 = vrot.slane %v1095, 1
      %v1097 = vadd.f32 %v1095, %v1096
      %v1098 = vadd.f32 %v1086, %v1089
      %v1099 = vrot.slane %v1098, 4
      %v1100 = vadd.f32 %v1098, %v1099
      %v1101 = vrot.slane %v1100, 2
      %v1102 = vadd.f32 %v1100, %v1101
      %v1103 = vrot.slane %v1102, 1
      %v1104 = vadd.f32 %v1102, %v1103
      %v1105 = vadd.f32 %v1087, %v1090
      %v1106 = vrot.slane %v1105, 4
      %v1107 = vadd.f32 %v1105, %v1106
      %v1108 = vrot.slane %v1107, 2
      %v1109 = vadd.f32 %v1107, %v1108
      %v1110 = vrot.slane %v1109, 1
      %v1111 = vadd.f32 %v1109, %v1110
      %v1115 = vrot.slane %v1104, 7
      %v1116 = vrot.slane %v1111, 6
      %v1117 = vsel %vm326, %v1097, %v1115
      %v1118 = vsel %vm1077, %v1117, %v1116
      %v1120 = vadd.f32 %v1084, %v1118
      %1121 = vst.msk [vmem:[%s6] sm:$0x7] %vm1082, %v1120
      %p1122 = scmp.lt.s32.totalorder %s18, 1
      %s1123 = scalar_select %p1122, %s18, 1
      %s1124 = smul.addr %s1123, 6
      %s1125 = smul.addr %s1124, 8
      %s1126 = scalar_lea.vmem %s4, %s1125
      // Predicated region
      $region41: #{block_forward.5} parent=35 // pred_check
        %p1127 = pneg %p125
      $region42: #{block_forward.5} parent=35 // pred_check_branch
        %1129 = sbr.rel (%p1127) target = $region44
      $region43: #{block_forward.5} parent=35 // pred_region
        _
      $region44: #{block_forward.5} parent=35 // pred_fallthru
        _
      // Predicated region
      $region45: #{block_forward.5} parent=35 // pred_check
        %p1130 = pneg %p146
      $region46: #{block_forward.5} parent=35 // pred_check_branch
        %1132 = sbr.rel (%p1130) target = $region48
      $region47: #{block_forward.5} parent=35 // pred_region
        _
      $region48: #{block_forward.5} parent=35 // pred_fallthru
        _
      // Predicated region
      $region49: #{block_forward.5} parent=35 // pred_check
        %p1133 = pneg %p167
      $region50: #{block_forward.5} parent=35 // pred_check_branch
        %1135 = sbr.rel (%p1133) target = $region52
      $region51: #{block_forward.5} parent=35 // pred_region
        _
      $region52: #{block_forward.5} parent=35 // pred_fallthru
        _
      // Predicated region
      $region53: #{block_forward.5} parent=35 // pred_check
        %p1136 = pneg %p146
      $region54: #{block_forward.5} parent=35 // pred_check_branch
        %1138 = sbr.rel (%p1136) target = $region56
      $region55: #{block_forward.5} parent=35 // pred_region
        _
      $region56: #{block_forward.5} parent=35 // pred_fallthru
        _
      // Predicated region
      $region57: #{block_forward.5} parent=35 // pred_check
        %p1139 = pneg %p167
      $region58: #{block_forward.5} parent=35 // pred_check_branch
        %1141 = sbr.rel (%p1139) target = $region60
      $region59: #{block_forward.5} parent=35 // pred_region
        _
      $region60: #{block_forward.5} parent=35 // pred_fallthru
        _
    $region36: #{block_forward.5} parent=5 // pred_fallthru
      _
    %p1142 = scmp.le.s32.totalorder 2, %s13
    // Predicated region
    $region61: #{block_forward.5} parent=5 // pred_check
      %p1143 = pneg %p1142
    $region62: #{block_forward.5} parent=5 // pred_check_branch
      %1145 = sbr.rel (%p1143) target = $region64
    $region63: #{block_forward.5} parent=5 // pred_region
      %s1146 = ssub.s32 %s13, 2
      // Predicated region
      $region65: #{block_forward.5} parent=63 // pred_check
        %p1147 = pneg %p131
      $region66: #{block_forward.5} parent=63 // pred_check_branch
        %1149 = sbr.rel (%p1147) target = $region68
      $region67: #{block_forward.5} parent=63 // pred_region
        %p1150 = scmp.lt.s32.totalorder %s19, 1
        %s1151 = scalar_select %p1150, %s19, 1
        %s1152 = smul.addr %s1151, 6
        %s1153 = smul.addr %s1152, 8
        %s1154 = scalar_lea.vmem %s4, %s1153
      $region68: #{block_forward.5} parent=63 // pred_fallthru
        _
    $region64: #{block_forward.5} parent=5 // pred_fallthru
      _
  $region6: #{block_forward.5} parent=0 // loop_footer
    %s17 = sadd.s32 1, %s13
  $region7: #{block_forward.5} parent=0 // loop_footer_branch
    %12 = sbr.rel target = $region3
  $region8: #{block_forward.5} parent=0 // loop_exit
    _

</llo_original>
